<compile_context>
chip_gen: v6e
topology: v6e:2x2x1
jax: 0.10.0
libtpu: 0.0.40
codegen_flags: <defaults>
</compile_context>

<pallas_src>
import jax
import jax.numpy as jnp
from jax.experimental import pallas as pl
from jax.experimental.pallas import tpu as pltpu

# ----------------------------- configuration --------------------------------
DEPTH = 2          # number of encoder / decoder stages
BASE_CH = 4        # initial hidden channels ("channel" arg)
SOURCES = 4        # len(['drums','bass','other','vocals'])
STEREO = 2         # is_mono=False
EPS_IN = 1e-5      # __normal epsilon (added to std)
EPS_NORM = 1e-5    # nn.InstanceNorm2d default eps
INV_SQRT2 = 0.7071067811865476

_N_W = 3 * DEPTH + 3   # weights per path: head, DEPTH enc, bott, 2*DEPTH dec, tail


def _gelu(x):
    # exact (erf-based) GELU, matching torch.nn.GELU(approximate='none')
    return 0.5 * x * (1.0 + jax.lax.erf(x * INV_SQRT2))


def _inorm_gelu(y):
    """Per-channel (row) InstanceNorm (biased var, single-pass f32 stats) + GELU."""
    n = float(y.shape[-1])
    s = jnp.sum(y, axis=-1, keepdims=True)
    q = jnp.sum(y * y, axis=-1, keepdims=True)
    mu = s / n
    var = jnp.maximum(q / n - mu * mu, 0.0)
    return _gelu((y - mu) * jax.lax.rsqrt(var + EPS_NORM))


# ------------------------------ fused kernel ---------------------------------
def _run_path(x, w_refs):
    """One full U-Net path on a (C_in, N) f32 slab (digit-reversed freq layout).

    Returns the de-normalized final 1x1-conv output, shape (SOURCES*STEREO, N).
    """
    it = iter(w_refs)

    # ---- __normal: per-batch mean / unbiased std over all channels & pixels
    n_all = float(x.shape[0] * x.shape[1])
    rs = jnp.sum(x, axis=-1, keepdims=True)          # (C, 1) lane sums
    rq = jnp.sum(x * x, axis=-1, keepdims=True)
    tot = jnp.sum(rs, axis=0, keepdims=True)         # (1, 1)
    tot2 = jnp.sum(rq, axis=0, keepdims=True)        # (1, 1)
    mean = tot / n_all
    var = jnp.maximum((tot2 - n_all * mean * mean) / (n_all - 1.0), 0.0)
    std = jnp.sqrt(var)                              # torch.std: unbiased
    xn = (x - mean) / (EPS_IN + std)

    # ---- head 1x1 conv (bias=False in the reference) ----
    w_head = next(it)[...]                           # (CH, C_in)
    h = jnp.dot(w_head, xn, preferred_element_type=jnp.float32)

    # ---- encoders: (4,1)-stride conv = 4 contiguous block-column matmuls ----
    skips = []
    for _ in range(DEPTH):
        w_ref = next(it)                             # (4, Cout, Cin) tap-major
        m = h.shape[-1] // 4
        y = None
        for k in range(4):
            t = jnp.dot(w_ref[k], h[:, k * m:(k + 1) * m],
                        preferred_element_type=jnp.float32)
            y = t if y is None else y + t
        # conv bias skipped: exactly cancelled by InstanceNorm mean subtraction
        h = _inorm_gelu(y)
        skips.append(h)

    # ---- bottleneck: 1x1 conv + InstanceNorm + GELU ----
    w_bott = next(it)[...]                           # (C, C)
    h = _inorm_gelu(jnp.dot(w_bott, h, preferred_element_type=jnp.float32))

    # ---- decoders: concat-skip ConvTranspose (stacked taps) + IN + GELU ----
    for d in range(DEPTH):
        wx = next(it)[...]                           # (4*Cout, Cin)  x-path
        ws = next(it)[...]                           # (4*Cout, Cin)  skip-path
        skip = skips[-d - 1]
        # torch.concat((x, skip)) realised as two matmuls summed in VMEM
        z = (jnp.dot(wx, h, preferred_element_type=jnp.float32)
             + jnp.dot(ws, skip, preferred_element_type=jnp.float32))
        cout = wx.shape[0] // 4
        n_in = z.shape[-1]
        n_tot = 4.0 * n_in
        # grouped InstanceNorm over the 4 taps of each output channel
        rs = jnp.sum(z, axis=-1, keepdims=True)      # (4*Cout, 1)
        rq = jnp.sum(z * z, axis=-1, keepdims=True)
        cs = rs[0:cout]
        cq = rq[0:cout]
        for k in range(1, 4):
            cs = cs + rs[k * cout:(k + 1) * cout]
            cq = cq + rq[k * cout:(k + 1) * cout]
        mu = cs / n_tot
        var = jnp.maximum(cq / n_tot - mu * mu, 0.0)
        inv = jax.lax.rsqrt(var + EPS_NORM)
        # tap k goes to contiguous lane block k (keeps digit-reversed layout)
        h = jnp.concatenate(
            [_gelu((z[k * cout:(k + 1) * cout, :] - mu) * inv) for k in range(4)],
            axis=-1)                                 # (Cout, 4*n_in)

    # ---- final 1x1 conv + de-normalize ----
    # NOTE: matches the PyTorch reference exactly: normalize with /(eps+std),
    # de-normalize with *std (intentional asymmetry in the original code).
    w_tail = next(it)[...]                           # (SOURCES*STEREO, CH)
    o = jnp.dot(w_tail, h, preferred_element_type=jnp.float32)
    return o * std + mean


def _unet_kernel(*refs):
    mag_ref, ph_ref = refs[0], refs[1]
    w_m = refs[2:2 + _N_W]
    w_p = refs[2 + _N_W:2 + 2 * _N_W]
    re_ref = refs[2 + 2 * _N_W]
    im_ref = refs[3 + 2 * _N_W]

    o_m = _run_path(mag_ref[0], w_m)
    o_p = _run_path(ph_ref[0], w_p)
    re_ref[0] = o_m * jnp.cos(o_p)
    im_ref[0] = o_m * jnp.sin(o_p)


def _const_index_map(ndim):
    return lambda b: (0,) * ndim


def unet_call(mag, ph, w_m, w_p):
    """mag/ph: (B, STEREO, N) f32 (digit-reversed freq, flattened with T)."""
    B, C, N = mag.shape
    R = SOURCES * STEREO
    x_spec = pl.BlockSpec((1, C, N), lambda b: (b, 0, 0))
    out_spec = pl.BlockSpec((1, R, N), lambda b: (b, 0, 0))
    # Tiny weights: constant block index -> DMA'd once, not re-fetched per step.
    w_specs = [pl.BlockSpec(w.shape, _const_index_map(w.ndim)) for w in (w_m + w_p)]
    return pl.pallas_call(
        _unet_kernel,
        out_shape=(jax.ShapeDtypeStruct((B, R, N), jnp.float32),
                   jax.ShapeDtypeStruct((B, R, N), jnp.float32)),
        grid=(B,),
        in_specs=[x_spec, x_spec] + w_specs,
        out_specs=(out_spec, out_spec),
        compiler_params=pltpu.CompilerParams(
            dimension_semantics=("parallel",),
            vmem_limit_bytes=48 * 1024 * 1024),
    )(mag, ph, *w_m, *w_p)


# -------------------- frequency digit-reversal (no gather) -------------------
def _permute_freq(x):
    """(B, C, F, T) -> (B, C, F*T) with base-4 digit-reversed F ordering.

    Expressed as reshape + transpose (a straight relayout DMA in XLA), not an
    integer-array gather.  With this layout every (4,1)-stride conv of the
    U-Net reads/writes contiguous lane blocks inside the kernel.
    """
    B, C, F, T = x.shape
    g = F // (4 ** DEPTH)
    x = x.reshape((B, C, g) + (4,) * DEPTH + (T,))
    perm = (0, 1) + tuple(range(2 + DEPTH, 2, -1)) + (2, 3 + DEPTH)
    return jnp.transpose(x, perm).reshape(B, C, F * T)


def _unpermute_freq(y, F, T):
    """Inverse of _permute_freq on (B, R, F*T) -> (B, R, F, T)."""
    B, R, _ = y.shape
    g = F // (4 ** DEPTH)
    y = y.reshape((B, R) + (4,) * DEPTH + (g, T))
    perm = (0, 1, 2 + DEPTH) + tuple(range(1 + DEPTH, 1, -1)) + (3 + DEPTH,)
    return jnp.transpose(y, perm).reshape(B, R, F, T)


# ------------------------------ parameters -----------------------------------
def init_params(key):
    """Random weights in the original PyTorch layouts (biases omitted: every
    biased conv is followed by InstanceNorm, which cancels the bias exactly)."""
    keys = iter(jax.random.split(key, 32))

    def nrm(shape, scale=0.1):
        return scale * jax.random.normal(next(keys), shape, dtype=jnp.float32)

    p = {}
    p['conv_mag'] = nrm((BASE_CH, STEREO))              # Conv2d 1x1, bias=False
    p['conv_ph'] = nrm((BASE_CH, STEREO))
    p['enc_m'], p['enc_p'] = [], []
    ch = BASE_CH
    for _ in range(DEPTH):
        p['enc_m'].append(nrm((2 * ch, ch, 4)))         # Conv2d (Cout, Cin, kH)
        p['enc_p'].append(nrm((2 * ch, ch, 4)))
        ch *= 2
    p['bott_m'] = nrm((ch, ch))                         # 1x1 conv bottleneck
    p['bott_p'] = nrm((ch, ch))
    p['dec_m'], p['dec_p'] = [], []
    for _ in range(DEPTH):
        cin, cout = ch * 2, ch // 2                     # concat skip => 2x Cin
        p['dec_m'].append(nrm((cin, cout, 4)))          # ConvT (Cin, Cout, kH)
        p['dec_p'].append(nrm((cin, cout, 4)))
        ch //= 2
    p['conv_mag_final'] = nrm((SOURCES * STEREO, ch))   # bias=False
    p['conv_ph_final'] = nrm((SOURCES * STEREO, ch))
    return p


def prepare_params(p):
    """Rearrange torch-layout weights into kernel-ready f32 tensors."""
    def enc_w(w):
        # Conv2d weight (Cout, Cin, kH=4) -> tap-major (4, Cout, Cin)
        return jnp.transpose(w, (2, 0, 1)).astype(jnp.float32)

    def dec_w(w):
        # ConvTranspose2d weight (2C, Cout, 4): split the concat-skip input
        # channels and stack the 4 taps along output rows -> two (4*Cout, C).
        c = w.shape[0] // 2
        cout = w.shape[1]
        wx = jnp.transpose(w[:c], (2, 1, 0)).reshape(4 * cout, c)
        ws = jnp.transpose(w[c:], (2, 1, 0)).reshape(4 * cout, c)
        return wx.astype(jnp.float32), ws.astype(jnp.float32)

    def path(head, encs, bott, decs, tail):
        ws = [head.astype(jnp.float32)]
        ws += [enc_w(w) for w in encs]
        ws.append(bott.astype(jnp.float32))
        for w in decs:
            wx, wsk = dec_w(w)
            ws += [wx, wsk]
        ws.append(tail.astype(jnp.float32))
        assert len(ws) == _N_W
        return ws

    return {'w_m': path(p['conv_mag'], p['enc_m'], p['bott_m'], p['dec_m'],
                        p['conv_mag_final']),
            'w_p': path(p['conv_ph'], p['enc_p'], p['bott_p'], p['dec_p'],
                        p['conv_ph_final'])}


# ------------------------------- forward --------------------------------------
def model_forward(z, params):
    """z: complex64 (B, STEREO, F, T) -> complex64 (B, SOURCES, STEREO, F, T)."""
    B, C, F, T = z.shape
    assert C == STEREO and F % (4 ** DEPTH) == 0

    # TODO(synk): |z| / atan2 and the final complex() packing stay in plain JAX
    # (atan2 / complex dtypes have no verified Mosaic lowering).
    mag = _permute_freq(jnp.abs(z).astype(jnp.float32))
    ph = _permute_freq(jnp.arctan2(jnp.imag(z), jnp.real(z)).astype(jnp.float32))

    re, im = unet_call(mag, ph, params['w_m'], params['w_p'])

    real = _unpermute_freq(re, F, T).reshape(B, SOURCES, STEREO, F, T)
    imag = _unpermute_freq(im, F, T).reshape(B, SOURCES, STEREO, F, T)
    return jax.lax.complex(real, imag)


if __name__ == "__main__":
    key = jax.random.PRNGKey(0)
    k_re, k_im, k_par = jax.random.split(key, 3)
    B, F, T = 2, 32, 8                                  # F divisible by 4**DEPTH
    zr = jax.random.normal(k_re, (B, STEREO, F, T), jnp.float32)
    zi = jax.random.normal(k_im, (B, STEREO, F, T), jnp.float32)
    z = jax.lax.complex(zr, zi)

    params = prepare_params(init_params(k_par))
    fwd = jax.jit(model_forward)
    out = jax.block_until_ready(fwd(z, params))

    assert out.shape == (B, SOURCES, STEREO, F, T), out.shape
    assert out.dtype == jnp.complex64, out.dtype
    assert bool(jnp.all(jnp.isfinite(jnp.real(out)))
                and jnp.all(jnp.isfinite(jnp.imag(out))))
    print("KERNEL_OK")
</pallas_src>

<mosaic_0001>
module attributes {stable_mosaic.version = 11 : i64} {
  func.func @_unet_kernel(%arg0: i32, %arg1: memref<1x2x256xf32, #tpu.memory_space<vmem>>, %arg2: memref<1x2x256xf32, #tpu.memory_space<vmem>>, %arg3: memref<4x2xf32, #tpu.memory_space<vmem>>, %arg4: memref<4x8x4xf32, #tpu.memory_space<vmem>>, %arg5: memref<4x16x8xf32, #tpu.memory_space<vmem>>, %arg6: memref<16x16xf32, #tpu.memory_space<vmem>>, %arg7: memref<32x16xf32, #tpu.memory_space<vmem>>, %arg8: memref<32x16xf32, #tpu.memory_space<vmem>>, %arg9: memref<16x8xf32, #tpu.memory_space<vmem>>, %arg10: memref<16x8xf32, #tpu.memory_space<vmem>>, %arg11: memref<8x4xf32, #tpu.memory_space<vmem>>, %arg12: memref<4x2xf32, #tpu.memory_space<vmem>>, %arg13: memref<4x8x4xf32, #tpu.memory_space<vmem>>, %arg14: memref<4x16x8xf32, #tpu.memory_space<vmem>>, %arg15: memref<16x16xf32, #tpu.memory_space<vmem>>, %arg16: memref<32x16xf32, #tpu.memory_space<vmem>>, %arg17: memref<32x16xf32, #tpu.memory_space<vmem>>, %arg18: memref<16x8xf32, #tpu.memory_space<vmem>>, %arg19: memref<16x8xf32, #tpu.memory_space<vmem>>, %arg20: memref<8x4xf32, #tpu.memory_space<vmem>>, %arg21: memref<1x8x256xf32, #tpu.memory_space<vmem>>, %arg22: memref<1x8x256xf32, #tpu.memory_space<vmem>>) attributes {dimension_semantics = [#tpu.dimension_semantics<parallel>], iteration_bounds = array<i64: 2>, scalar_prefetch = 0 : i64, scratch_operands = 0 : i64, tpu.core_type = #tpu.core_type<tc>, window_params = [{transform_indices = @transform_0, window_bounds = array<i64: 1, 2, 256>}, {transform_indices = @transform_1, window_bounds = array<i64: 1, 2, 256>}, {pipeline_mode = #tpu.pipeline_mode<synchronous>, transform_indices = @transform_2, window_bounds = array<i64: 4, 2>}, {pipeline_mode = #tpu.pipeline_mode<synchronous>, transform_indices = @transform_3, window_bounds = array<i64: 4, 8, 4>}, {pipeline_mode = #tpu.pipeline_mode<synchronous>, transform_indices = @transform_4, window_bounds = array<i64: 4, 16, 8>}, {pipeline_mode = #tpu.pipeline_mode<synchronous>, transform_indices = @transform_5, window_bounds = array<i64: 16, 16>}, {pipeline_mode = #tpu.pipeline_mode<synchronous>, transform_indices = @transform_6, window_bounds = array<i64: 32, 16>}, {pipeline_mode = #tpu.pipeline_mode<synchronous>, transform_indices = @transform_7, window_bounds = array<i64: 32, 16>}, {pipeline_mode = #tpu.pipeline_mode<synchronous>, transform_indices = @transform_8, window_bounds = array<i64: 16, 8>}, {pipeline_mode = #tpu.pipeline_mode<synchronous>, transform_indices = @transform_9, window_bounds = array<i64: 16, 8>}, {pipeline_mode = #tpu.pipeline_mode<synchronous>, transform_indices = @transform_10, window_bounds = array<i64: 8, 4>}, {pipeline_mode = #tpu.pipeline_mode<synchronous>, transform_indices = @transform_11, window_bounds = array<i64: 4, 2>}, {pipeline_mode = #tpu.pipeline_mode<synchronous>, transform_indices = @transform_12, window_bounds = array<i64: 4, 8, 4>}, {pipeline_mode = #tpu.pipeline_mode<synchronous>, transform_indices = @transform_13, window_bounds = array<i64: 4, 16, 8>}, {pipeline_mode = #tpu.pipeline_mode<synchronous>, transform_indices = @transform_14, window_bounds = array<i64: 16, 16>}, {pipeline_mode = #tpu.pipeline_mode<synchronous>, transform_indices = @transform_15, window_bounds = array<i64: 32, 16>}, {pipeline_mode = #tpu.pipeline_mode<synchronous>, transform_indices = @transform_16, window_bounds = array<i64: 32, 16>}, {pipeline_mode = #tpu.pipeline_mode<synchronous>, transform_indices = @transform_17, window_bounds = array<i64: 16, 8>}, {pipeline_mode = #tpu.pipeline_mode<synchronous>, transform_indices = @transform_18, window_bounds = array<i64: 16, 8>}, {pipeline_mode = #tpu.pipeline_mode<synchronous>, transform_indices = @transform_19, window_bounds = array<i64: 8, 4>}, {transform_indices = @transform_20, window_bounds = array<i64: 1, 8, 256>}, {transform_indices = @transform_21, window_bounds = array<i64: 1, 8, 256>}]} {
    %c0 = arith.constant 0 : index
    %c0_0 = arith.constant 0 : index
    %c0_1 = arith.constant 0 : index
    %0 = vector.load %arg1[%c0, %c0_0, %c0_1] : memref<1x2x256xf32, #tpu.memory_space<vmem>>, vector<1x2x256xf32>
    %1 = vector.shape_cast %0 : vector<1x2x256xf32> to vector<2x256xf32>
    %cst = arith.constant dense<0.000000e+00> : vector<2xf32>
    %2 = vector.multi_reduction <add>, %1, %cst [1] : vector<2x256xf32> to vector<2xf32>
    %3 = vector.shape_cast %2 : vector<2xf32> to vector<2x1xf32>
    %4 = arith.mulf %1, %1 : vector<2x256xf32>
    %cst_2 = arith.constant dense<0.000000e+00> : vector<2xf32>
    %5 = vector.multi_reduction <add>, %4, %cst_2 [1] : vector<2x256xf32> to vector<2xf32>
    %6 = vector.shape_cast %5 : vector<2xf32> to vector<2x1xf32>
    %cst_3 = arith.constant dense<0.000000e+00> : vector<1xf32>
    %7 = vector.multi_reduction <add>, %3, %cst_3 [0] : vector<2x1xf32> to vector<1xf32>
    %8 = vector.shape_cast %7 : vector<1xf32> to vector<1x1xf32>
    %cst_4 = arith.constant dense<0.000000e+00> : vector<1xf32>
    %9 = vector.multi_reduction <add>, %6, %cst_4 [0] : vector<2x1xf32> to vector<1xf32>
    %10 = vector.shape_cast %9 : vector<1xf32> to vector<1x1xf32>
    %cst_5 = arith.constant 5.120000e+02 : f32
    %11 = vector.broadcast %cst_5 : f32 to vector<1x1xf32>
    %12 = arith.divf %8, %11 : vector<1x1xf32>
    %cst_6 = arith.constant 5.120000e+02 : f32
    %13 = vector.broadcast %cst_6 : f32 to vector<1x1xf32>
    %14 = arith.mulf %13, %12 : vector<1x1xf32>
    %15 = arith.mulf %14, %12 : vector<1x1xf32>
    %16 = arith.subf %10, %15 : vector<1x1xf32>
    %cst_7 = arith.constant 5.110000e+02 : f32
    %17 = vector.broadcast %cst_7 : f32 to vector<1x1xf32>
    %18 = arith.divf %16, %17 : vector<1x1xf32>
    %cst_8 = arith.constant 0.000000e+00 : f32
    %19 = vector.broadcast %cst_8 : f32 to vector<1x1xf32>
    %20 = arith.maximumf %18, %19 : vector<1x1xf32>
    %21 = math.sqrt %20 : vector<1x1xf32>
    %22 = vector.broadcast %12 : vector<1x1xf32> to vector<2x256xf32>
    %23 = arith.subf %1, %22 : vector<2x256xf32>
    %cst_9 = arith.constant 9.99999974E-6 : f32
    %24 = vector.broadcast %cst_9 : f32 to vector<1x1xf32>
    %25 = arith.addf %24, %21 : vector<1x1xf32>
    %26 = vector.broadcast %25 : vector<1x1xf32> to vector<2x256xf32>
    %27 = arith.divf %23, %26 : vector<2x256xf32>
    %c0_10 = arith.constant 0 : index
    %c0_11 = arith.constant 0 : index
    %28 = vector.load %arg3[%c0_10, %c0_11] : memref<4x2xf32, #tpu.memory_space<vmem>>, vector<4x2xf32>
    %cst_12 = arith.constant dense<0.000000e+00> : vector<4x256xf32>
    %29 = tpu.matmul %28, %27, %cst_12 {dimension_numbers = #tpu.dot_dimension_numbers<[1], [0], [0], [1], [0, 0, 1, 1], [], []>} : vector<4x2xf32>, vector<2x256xf32>, vector<4x256xf32> -> vector<4x256xf32>
    %c0_13 = arith.constant 0 : index
    %c0_14 = arith.constant 0 : index
    %c0_15 = arith.constant 0 : index
    %30 = vector.load %arg4[%c0_13, %c0_14, %c0_15] : memref<4x8x4xf32, #tpu.memory_space<vmem>>, vector<1x8x4xf32>
    %31 = vector.shape_cast %30 : vector<1x8x4xf32> to vector<8x4xf32>
    %32 = vector.extract_strided_slice %29 {offsets = [0, 0], sizes = [4, 64], strides = [1, 1]} : vector<4x256xf32> to vector<4x64xf32>
    %cst_16 = arith.constant dense<0.000000e+00> : vector<8x64xf32>
    %33 = tpu.matmul %31, %32, %cst_16 {dimension_numbers = #tpu.dot_dimension_numbers<[1], [0], [0], [1], [0, 0, 1, 1], [], []>} : vector<8x4xf32>, vector<4x64xf32>, vector<8x64xf32> -> vector<8x64xf32>
    %c1 = arith.constant 1 : index
    %c0_17 = arith.constant 0 : index
    %c0_18 = arith.constant 0 : index
    %34 = vector.load %arg4[%c1, %c0_17, %c0_18] : memref<4x8x4xf32, #tpu.memory_space<vmem>>, vector<1x8x4xf32>
    %35 = vector.shape_cast %34 : vector<1x8x4xf32> to vector<8x4xf32>
    %36 = vector.extract_strided_slice %29 {offsets = [0, 64], sizes = [4, 64], strides = [1, 1]} : vector<4x256xf32> to vector<4x64xf32>
    %cst_19 = arith.constant dense<0.000000e+00> : vector<8x64xf32>
    %37 = tpu.matmul %35, %36, %cst_19 {dimension_numbers = #tpu.dot_dimension_numbers<[1], [0], [0], [1], [0, 0, 1, 1], [], []>} : vector<8x4xf32>, vector<4x64xf32>, vector<8x64xf32> -> vector<8x64xf32>
    %38 = arith.addf %33, %37 : vector<8x64xf32>
    %c2 = arith.constant 2 : index
    %c0_20 = arith.constant 0 : index
    %c0_21 = arith.constant 0 : index
    %39 = vector.load %arg4[%c2, %c0_20, %c0_21] : memref<4x8x4xf32, #tpu.memory_space<vmem>>, vector<1x8x4xf32>
    %40 = vector.shape_cast %39 : vector<1x8x4xf32> to vector<8x4xf32>
    %41 = vector.extract_strided_slice %29 {offsets = [0, 128], sizes = [4, 64], strides = [1, 1]} : vector<4x256xf32> to vector<4x64xf32>
    %cst_22 = arith.constant dense<0.000000e+00> : vector<8x64xf32>
    %42 = tpu.matmul %40, %41, %cst_22 {dimension_numbers = #tpu.dot_dimension_numbers<[1], [0], [0], [1], [0, 0, 1, 1], [], []>} : vector<8x4xf32>, vector<4x64xf32>, vector<8x64xf32> -> vector<8x64xf32>
    %43 = arith.addf %38, %42 : vector<8x64xf32>
    %c3 = arith.constant 3 : index
    %c0_23 = arith.constant 0 : index
    %c0_24 = arith.constant 0 : index
    %44 = vector.load %arg4[%c3, %c0_23, %c0_24] : memref<4x8x4xf32, #tpu.memory_space<vmem>>, vector<1x8x4xf32>
    %45 = vector.shape_cast %44 : vector<1x8x4xf32> to vector<8x4xf32>
    %46 = vector.extract_strided_slice %29 {offsets = [0, 192], sizes = [4, 64], strides = [1, 1]} : vector<4x256xf32> to vector<4x64xf32>
    %cst_25 = arith.constant dense<0.000000e+00> : vector<8x64xf32>
    %47 = tpu.matmul %45, %46, %cst_25 {dimension_numbers = #tpu.dot_dimension_numbers<[1], [0], [0], [1], [0, 0, 1, 1], [], []>} : vector<8x4xf32>, vector<4x64xf32>, vector<8x64xf32> -> vector<8x64xf32>
    %48 = arith.addf %43, %47 : vector<8x64xf32>
    %cst_26 = arith.constant dense<0.000000e+00> : vector<8xf32>
    %49 = vector.multi_reduction <add>, %48, %cst_26 [1] : vector<8x64xf32> to vector<8xf32>
    %50 = vector.shape_cast %49 : vector<8xf32> to vector<8x1xf32>
    %51 = arith.mulf %48, %48 : vector<8x64xf32>
    %cst_27 = arith.constant dense<0.000000e+00> : vector<8xf32>
    %52 = vector.multi_reduction <add>, %51, %cst_27 [1] : vector<8x64xf32> to vector<8xf32>
    %53 = vector.shape_cast %52 : vector<8xf32> to vector<8x1xf32>
    %cst_28 = arith.constant 6.400000e+01 : f32
    %54 = vector.broadcast %cst_28 : f32 to vector<8x1xf32>
    %55 = arith.divf %50, %54 : vector<8x1xf32>
    %cst_29 = arith.constant 6.400000e+01 : f32
    %56 = vector.broadcast %cst_29 : f32 to vector<8x1xf32>
    %57 = arith.divf %53, %56 : vector<8x1xf32>
    %58 = arith.mulf %55, %55 : vector<8x1xf32>
    %59 = arith.subf %57, %58 : vector<8x1xf32>
    %cst_30 = arith.constant 0.000000e+00 : f32
    %60 = vector.broadcast %cst_30 : f32 to vector<8x1xf32>
    %61 = arith.maximumf %59, %60 : vector<8x1xf32>
    %62 = vector.broadcast %55 : vector<8x1xf32> to vector<8x64xf32>
    %63 = arith.subf %48, %62 : vector<8x64xf32>
    %cst_31 = arith.constant 9.99999974E-6 : f32
    %64 = vector.broadcast %cst_31 : f32 to vector<8x1xf32>
    %65 = arith.addf %61, %64 : vector<8x1xf32>
    %66 = math.rsqrt %65 : vector<8x1xf32>
    %67 = vector.broadcast %66 : vector<8x1xf32> to vector<8x64xf32>
    %68 = arith.mulf %63, %67 : vector<8x64xf32>
    %cst_32 = arith.constant 5.000000e-01 : f32
    %69 = vector.broadcast %cst_32 : f32 to vector<8x64xf32>
    %70 = arith.mulf %69, %68 : vector<8x64xf32>
    %cst_33 = arith.constant 0.707106769 : f32
    %71 = vector.broadcast %cst_33 : f32 to vector<8x64xf32>
    %72 = arith.mulf %68, %71 : vector<8x64xf32>
    %73 = math.erf %72 : vector<8x64xf32>
    %cst_34 = arith.constant 1.000000e+00 : f32
    %74 = vector.broadcast %cst_34 : f32 to vector<8x64xf32>
    %75 = arith.addf %74, %73 : vector<8x64xf32>
    %76 = arith.mulf %70, %75 : vector<8x64xf32>
    %c0_35 = arith.constant 0 : index
    %c0_36 = arith.constant 0 : index
    %c0_37 = arith.constant 0 : index
    %77 = vector.load %arg5[%c0_35, %c0_36, %c0_37] : memref<4x16x8xf32, #tpu.memory_space<vmem>>, vector<1x16x8xf32>
    %78 = vector.shape_cast %77 : vector<1x16x8xf32> to vector<16x8xf32>
    %79 = vector.extract_strided_slice %76 {offsets = [0, 0], sizes = [8, 16], strides = [1, 1]} : vector<8x64xf32> to vector<8x16xf32>
    %cst_38 = arith.constant dense<0.000000e+00> : vector<16x16xf32>
    %80 = tpu.matmul %78, %79, %cst_38 {dimension_numbers = #tpu.dot_dimension_numbers<[1], [0], [0], [1], [0, 0, 1, 1], [], []>} : vector<16x8xf32>, vector<8x16xf32>, vector<16x16xf32> -> vector<16x16xf32>
    %c1_39 = arith.constant 1 : index
    %c0_40 = arith.constant 0 : index
    %c0_41 = arith.constant 0 : index
    %81 = vector.load %arg5[%c1_39, %c0_40, %c0_41] : memref<4x16x8xf32, #tpu.memory_space<vmem>>, vector<1x16x8xf32>
    %82 = vector.shape_cast %81 : vector<1x16x8xf32> to vector<16x8xf32>
    %83 = vector.extract_strided_slice %76 {offsets = [0, 16], sizes = [8, 16], strides = [1, 1]} : vector<8x64xf32> to vector<8x16xf32>
    %cst_42 = arith.constant dense<0.000000e+00> : vector<16x16xf32>
    %84 = tpu.matmul %82, %83, %cst_42 {dimension_numbers = #tpu.dot_dimension_numbers<[1], [0], [0], [1], [0, 0, 1, 1], [], []>} : vector<16x8xf32>, vector<8x16xf32>, vector<16x16xf32> -> vector<16x16xf32>
    %85 = arith.addf %80, %84 : vector<16x16xf32>
    %c2_43 = arith.constant 2 : index
    %c0_44 = arith.constant 0 : index
    %c0_45 = arith.constant 0 : index
    %86 = vector.load %arg5[%c2_43, %c0_44, %c0_45] : memref<4x16x8xf32, #tpu.memory_space<vmem>>, vector<1x16x8xf32>
    %87 = vector.shape_cast %86 : vector<1x16x8xf32> to vector<16x8xf32>
    %88 = vector.extract_strided_slice %76 {offsets = [0, 32], sizes = [8, 16], strides = [1, 1]} : vector<8x64xf32> to vector<8x16xf32>
    %cst_46 = arith.constant dense<0.000000e+00> : vector<16x16xf32>
    %89 = tpu.matmul %87, %88, %cst_46 {dimension_numbers = #tpu.dot_dimension_numbers<[1], [0], [0], [1], [0, 0, 1, 1], [], []>} : vector<16x8xf32>, vector<8x16xf32>, vector<16x16xf32> -> vector<16x16xf32>
    %90 = arith.addf %85, %89 : vector<16x16xf32>
    %c3_47 = arith.constant 3 : index
    %c0_48 = arith.constant 0 : index
    %c0_49 = arith.constant 0 : index
    %91 = vector.load %arg5[%c3_47, %c0_48, %c0_49] : memref<4x16x8xf32, #tpu.memory_space<vmem>>, vector<1x16x8xf32>
    %92 = vector.shape_cast %91 : vector<1x16x8xf32> to vector<16x8xf32>
    %93 = vector.extract_strided_slice %76 {offsets = [0, 48], sizes = [8, 16], strides = [1, 1]} : vector<8x64xf32> to vector<8x16xf32>
    %cst_50 = arith.constant dense<0.000000e+00> : vector<16x16xf32>
    %94 = tpu.matmul %92, %93, %cst_50 {dimension_numbers = #tpu.dot_dimension_numbers<[1], [0], [0], [1], [0, 0, 1, 1], [], []>} : vector<16x8xf32>, vector<8x16xf32>, vector<16x16xf32> -> vector<16x16xf32>
    %95 = arith.addf %90, %94 : vector<16x16xf32>
    %cst_51 = arith.constant dense<0.000000e+00> : vector<16xf32>
    %96 = vector.multi_reduction <add>, %95, %cst_51 [1] : vector<16x16xf32> to vector<16xf32>
    %97 = vector.shape_cast %96 : vector<16xf32> to vector<16x1xf32>
    %98 = arith.mulf %95, %95 : vector<16x16xf32>
    %cst_52 = arith.constant dense<0.000000e+00> : vector<16xf32>
    %99 = vector.multi_reduction <add>, %98, %cst_52 [1] : vector<16x16xf32> to vector<16xf32>
    %100 = vector.shape_cast %99 : vector<16xf32> to vector<16x1xf32>
    %cst_53 = arith.constant 1.600000e+01 : f32
    %101 = vector.broadcast %cst_53 : f32 to vector<16x1xf32>
    %102 = arith.divf %97, %101 : vector<16x1xf32>
    %cst_54 = arith.constant 1.600000e+01 : f32
    %103 = vector.broadcast %cst_54 : f32 to vector<16x1xf32>
    %104 = arith.divf %100, %103 : vector<16x1xf32>
    %105 = arith.mulf %102, %102 : vector<16x1xf32>
    %106 = arith.subf %104, %105 : vector<16x1xf32>
    %cst_55 = arith.constant 0.000000e+00 : f32
    %107 = vector.broadcast %cst_55 : f32 to vector<16x1xf32>
    %108 = arith.maximumf %106, %107 : vector<16x1xf32>
    %109 = vector.broadcast %102 : vector<16x1xf32> to vector<16x16xf32>
    %110 = arith.subf %95, %109 : vector<16x16xf32>
    %cst_56 = arith.constant 9.99999974E-6 : f32
    %111 = vector.broadcast %cst_56 : f32 to vector<16x1xf32>
    %112 = arith.addf %108, %111 : vector<16x1xf32>
    %113 = math.rsqrt %112 : vector<16x1xf32>
    %114 = vector.broadcast %113 : vector<16x1xf32> to vector<16x16xf32>
    %115 = arith.mulf %110, %114 : vector<16x16xf32>
    %cst_57 = arith.constant 5.000000e-01 : f32
    %116 = vector.broadcast %cst_57 : f32 to vector<16x16xf32>
    %117 = arith.mulf %116, %115 : vector<16x16xf32>
    %cst_58 = arith.constant 0.707106769 : f32
    %118 = vector.broadcast %cst_58 : f32 to vector<16x16xf32>
    %119 = arith.mulf %115, %118 : vector<16x16xf32>
    %120 = math.erf %119 : vector<16x16xf32>
    %cst_59 = arith.constant 1.000000e+00 : f32
    %121 = vector.broadcast %cst_59 : f32 to vector<16x16xf32>
    %122 = arith.addf %121, %120 : vector<16x16xf32>
    %123 = arith.mulf %117, %122 : vector<16x16xf32>
    %c0_60 = arith.constant 0 : index
    %c0_61 = arith.constant 0 : index
    %124 = vector.load %arg6[%c0_60, %c0_61] : memref<16x16xf32, #tpu.memory_space<vmem>>, vector<16x16xf32>
    %cst_62 = arith.constant dense<0.000000e+00> : vector<16x16xf32>
    %125 = tpu.matmul %124, %123, %cst_62 {dimension_numbers = #tpu.dot_dimension_numbers<[1], [0], [0], [1], [0, 0, 1, 1], [], []>} : vector<16x16xf32>, vector<16x16xf32>, vector<16x16xf32> -> vector<16x16xf32>
    %cst_63 = arith.constant dense<0.000000e+00> : vector<16xf32>
    %126 = vector.multi_reduction <add>, %125, %cst_63 [1] : vector<16x16xf32> to vector<16xf32>
    %127 = vector.shape_cast %126 : vector<16xf32> to vector<16x1xf32>
    %128 = arith.mulf %125, %125 : vector<16x16xf32>
    %cst_64 = arith.constant dense<0.000000e+00> : vector<16xf32>
    %129 = vector.multi_reduction <add>, %128, %cst_64 [1] : vector<16x16xf32> to vector<16xf32>
    %130 = vector.shape_cast %129 : vector<16xf32> to vector<16x1xf32>
    %cst_65 = arith.constant 1.600000e+01 : f32
    %131 = vector.broadcast %cst_65 : f32 to vector<16x1xf32>
    %132 = arith.divf %127, %131 : vector<16x1xf32>
    %cst_66 = arith.constant 1.600000e+01 : f32
    %133 = vector.broadcast %cst_66 : f32 to vector<16x1xf32>
    %134 = arith.divf %130, %133 : vector<16x1xf32>
    %135 = arith.mulf %132, %132 : vector<16x1xf32>
    %136 = arith.subf %134, %135 : vector<16x1xf32>
    %cst_67 = arith.constant 0.000000e+00 : f32
    %137 = vector.broadcast %cst_67 : f32 to vector<16x1xf32>
    %138 = arith.maximumf %136, %137 : vector<16x1xf32>
    %139 = vector.broadcast %132 : vector<16x1xf32> to vector<16x16xf32>
    %140 = arith.subf %125, %139 : vector<16x16xf32>
    %cst_68 = arith.constant 9.99999974E-6 : f32
    %141 = vector.broadcast %cst_68 : f32 to vector<16x1xf32>
    %142 = arith.addf %138, %141 : vector<16x1xf32>
    %143 = math.rsqrt %142 : vector<16x1xf32>
    %144 = vector.broadcast %143 : vector<16x1xf32> to vector<16x16xf32>
    %145 = arith.mulf %140, %144 : vector<16x16xf32>
    %cst_69 = arith.constant 5.000000e-01 : f32
    %146 = vector.broadcast %cst_69 : f32 to vector<16x16xf32>
    %147 = arith.mulf %146, %145 : vector<16x16xf32>
    %cst_70 = arith.constant 0.707106769 : f32
    %148 = vector.broadcast %cst_70 : f32 to vector<16x16xf32>
    %149 = arith.mulf %145, %148 : vector<16x16xf32>
    %150 = math.erf %149 : vector<16x16xf32>
    %cst_71 = arith.constant 1.000000e+00 : f32
    %151 = vector.broadcast %cst_71 : f32 to vector<16x16xf32>
    %152 = arith.addf %151, %150 : vector<16x16xf32>
    %153 = arith.mulf %147, %152 : vector<16x16xf32>
    %c0_72 = arith.constant 0 : index
    %c0_73 = arith.constant 0 : index
    %154 = vector.load %arg7[%c0_72, %c0_73] : memref<32x16xf32, #tpu.memory_space<vmem>>, vector<32x16xf32>
    %c0_74 = arith.constant 0 : index
    %c0_75 = arith.constant 0 : index
    %155 = vector.load %arg8[%c0_74, %c0_75] : memref<32x16xf32, #tpu.memory_space<vmem>>, vector<32x16xf32>
    %cst_76 = arith.constant dense<0.000000e+00> : vector<32x16xf32>
    %156 = tpu.matmul %154, %153, %cst_76 {dimension_numbers = #tpu.dot_dimension_numbers<[1], [0], [0], [1], [0, 0, 1, 1], [], []>} : vector<32x16xf32>, vector<16x16xf32>, vector<32x16xf32> -> vector<32x16xf32>
    %cst_77 = arith.constant dense<0.000000e+00> : vector<32x16xf32>
    %157 = tpu.matmul %155, %123, %cst_77 {dimension_numbers = #tpu.dot_dimension_numbers<[1], [0], [0], [1], [0, 0, 1, 1], [], []>} : vector<32x16xf32>, vector<16x16xf32>, vector<32x16xf32> -> vector<32x16xf32>
    %158 = arith.addf %156, %157 : vector<32x16xf32>
    %cst_78 = arith.constant dense<0.000000e+00> : vector<32xf32>
    %159 = vector.multi_reduction <add>, %158, %cst_78 [1] : vector<32x16xf32> to vector<32xf32>
    %160 = vector.shape_cast %159 : vector<32xf32> to vector<32x1xf32>
    %161 = arith.mulf %158, %158 : vector<32x16xf32>
    %cst_79 = arith.constant dense<0.000000e+00> : vector<32xf32>
    %162 = vector.multi_reduction <add>, %161, %cst_79 [1] : vector<32x16xf32> to vector<32xf32>
    %163 = vector.shape_cast %162 : vector<32xf32> to vector<32x1xf32>
    %164 = vector.extract_strided_slice %160 {offsets = [0, 0], sizes = [8, 1], strides = [1, 1]} : vector<32x1xf32> to vector<8x1xf32>
    %165 = vector.extract_strided_slice %163 {offsets = [0, 0], sizes = [8, 1], strides = [1, 1]} : vector<32x1xf32> to vector<8x1xf32>
    %166 = vector.extract_strided_slice %160 {offsets = [8, 0], sizes = [8, 1], strides = [1, 1]} : vector<32x1xf32> to vector<8x1xf32>
    %167 = arith.addf %164, %166 : vector<8x1xf32>
    %168 = vector.extract_strided_slice %163 {offsets = [8, 0], sizes = [8, 1], strides = [1, 1]} : vector<32x1xf32> to vector<8x1xf32>
    %169 = arith.addf %165, %168 : vector<8x1xf32>
    %170 = vector.extract_strided_slice %160 {offsets = [16, 0], sizes = [8, 1], strides = [1, 1]} : vector<32x1xf32> to vector<8x1xf32>
    %171 = arith.addf %167, %170 : vector<8x1xf32>
    %172 = vector.extract_strided_slice %163 {offsets = [16, 0], sizes = [8, 1], strides = [1, 1]} : vector<32x1xf32> to vector<8x1xf32>
    %173 = arith.addf %169, %172 : vector<8x1xf32>
    %174 = vector.extract_strided_slice %160 {offsets = [24, 0], sizes = [8, 1], strides = [1, 1]} : vector<32x1xf32> to vector<8x1xf32>
    %175 = arith.addf %171, %174 : vector<8x1xf32>
    %176 = vector.extract_strided_slice %163 {offsets = [24, 0], sizes = [8, 1], strides = [1, 1]} : vector<32x1xf32> to vector<8x1xf32>
    %177 = arith.addf %173, %176 : vector<8x1xf32>
    %cst_80 = arith.constant 6.400000e+01 : f32
    %178 = vector.broadcast %cst_80 : f32 to vector<8x1xf32>
    %179 = arith.divf %175, %178 : vector<8x1xf32>
    %cst_81 = arith.constant 6.400000e+01 : f32
    %180 = vector.broadcast %cst_81 : f32 to vector<8x1xf32>
    %181 = arith.divf %177, %180 : vector<8x1xf32>
    %182 = arith.mulf %179, %179 : vector<8x1xf32>
    %183 = arith.subf %181, %182 : vector<8x1xf32>
    %cst_82 = arith.constant 0.000000e+00 : f32
    %184 = vector.broadcast %cst_82 : f32 to vector<8x1xf32>
    %185 = arith.maximumf %183, %184 : vector<8x1xf32>
    %cst_83 = arith.constant 9.99999974E-6 : f32
    %186 = vector.broadcast %cst_83 : f32 to vector<8x1xf32>
    %187 = arith.addf %185, %186 : vector<8x1xf32>
    %188 = math.rsqrt %187 : vector<8x1xf32>
    %189 = vector.extract_strided_slice %158 {offsets = [0, 0], sizes = [8, 16], strides = [1, 1]} : vector<32x16xf32> to vector<8x16xf32>
    %190 = vector.broadcast %179 : vector<8x1xf32> to vector<8x16xf32>
    %191 = arith.subf %189, %190 : vector<8x16xf32>
    %192 = vector.broadcast %188 : vector<8x1xf32> to vector<8x16xf32>
    %193 = arith.mulf %191, %192 : vector<8x16xf32>
    %cst_84 = arith.constant 5.000000e-01 : f32
    %194 = vector.broadcast %cst_84 : f32 to vector<8x16xf32>
    %195 = arith.mulf %194, %193 : vector<8x16xf32>
    %cst_85 = arith.constant 0.707106769 : f32
    %196 = vector.broadcast %cst_85 : f32 to vector<8x16xf32>
    %197 = arith.mulf %193, %196 : vector<8x16xf32>
    %198 = math.erf %197 : vector<8x16xf32>
    %cst_86 = arith.constant 1.000000e+00 : f32
    %199 = vector.broadcast %cst_86 : f32 to vector<8x16xf32>
    %200 = arith.addf %199, %198 : vector<8x16xf32>
    %201 = arith.mulf %195, %200 : vector<8x16xf32>
    %202 = vector.extract_strided_slice %158 {offsets = [8, 0], sizes = [8, 16], strides = [1, 1]} : vector<32x16xf32> to vector<8x16xf32>
    %203 = vector.broadcast %179 : vector<8x1xf32> to vector<8x16xf32>
    %204 = arith.subf %202, %203 : vector<8x16xf32>
    %205 = vector.broadcast %188 : vector<8x1xf32> to vector<8x16xf32>
    %206 = arith.mulf %204, %205 : vector<8x16xf32>
    %cst_87 = arith.constant 5.000000e-01 : f32
    %207 = vector.broadcast %cst_87 : f32 to vector<8x16xf32>
    %208 = arith.mulf %207, %206 : vector<8x16xf32>
    %cst_88 = arith.constant 0.707106769 : f32
    %209 = vector.broadcast %cst_88 : f32 to vector<8x16xf32>
    %210 = arith.mulf %206, %209 : vector<8x16xf32>
    %211 = math.erf %210 : vector<8x16xf32>
    %cst_89 = arith.constant 1.000000e+00 : f32
    %212 = vector.broadcast %cst_89 : f32 to vector<8x16xf32>
    %213 = arith.addf %212, %211 : vector<8x16xf32>
    %214 = arith.mulf %208, %213 : vector<8x16xf32>
    %215 = vector.extract_strided_slice %158 {offsets = [16, 0], sizes = [8, 16], strides = [1, 1]} : vector<32x16xf32> to vector<8x16xf32>
    %216 = vector.broadcast %179 : vector<8x1xf32> to vector<8x16xf32>
    %217 = arith.subf %215, %216 : vector<8x16xf32>
    %218 = vector.broadcast %188 : vector<8x1xf32> to vector<8x16xf32>
    %219 = arith.mulf %217, %218 : vector<8x16xf32>
    %cst_90 = arith.constant 5.000000e-01 : f32
    %220 = vector.broadcast %cst_90 : f32 to vector<8x16xf32>
    %221 = arith.mulf %220, %219 : vector<8x16xf32>
    %cst_91 = arith.constant 0.707106769 : f32
    %222 = vector.broadcast %cst_91 : f32 to vector<8x16xf32>
    %223 = arith.mulf %219, %222 : vector<8x16xf32>
    %224 = math.erf %223 : vector<8x16xf32>
    %cst_92 = arith.constant 1.000000e+00 : f32
    %225 = vector.broadcast %cst_92 : f32 to vector<8x16xf32>
    %226 = arith.addf %225, %224 : vector<8x16xf32>
    %227 = arith.mulf %221, %226 : vector<8x16xf32>
    %228 = vector.extract_strided_slice %158 {offsets = [24, 0], sizes = [8, 16], strides = [1, 1]} : vector<32x16xf32> to vector<8x16xf32>
    %229 = vector.broadcast %179 : vector<8x1xf32> to vector<8x16xf32>
    %230 = arith.subf %228, %229 : vector<8x16xf32>
    %231 = vector.broadcast %188 : vector<8x1xf32> to vector<8x16xf32>
    %232 = arith.mulf %230, %231 : vector<8x16xf32>
    %cst_93 = arith.constant 5.000000e-01 : f32
    %233 = vector.broadcast %cst_93 : f32 to vector<8x16xf32>
    %234 = arith.mulf %233, %232 : vector<8x16xf32>
    %cst_94 = arith.constant 0.707106769 : f32
    %235 = vector.broadcast %cst_94 : f32 to vector<8x16xf32>
    %236 = arith.mulf %232, %235 : vector<8x16xf32>
    %237 = math.erf %236 : vector<8x16xf32>
    %cst_95 = arith.constant 1.000000e+00 : f32
    %238 = vector.broadcast %cst_95 : f32 to vector<8x16xf32>
    %239 = arith.addf %238, %237 : vector<8x16xf32>
    %240 = arith.mulf %234, %239 : vector<8x16xf32>
    %241 = tpu.concatenate %201, %214, %227, %240 in 1 : vector<8x16xf32>, vector<8x16xf32>, vector<8x16xf32>, vector<8x16xf32> -> vector<8x64xf32>
    %c0_96 = arith.constant 0 : index
    %c0_97 = arith.constant 0 : index
    %242 = vector.load %arg9[%c0_96, %c0_97] : memref<16x8xf32, #tpu.memory_space<vmem>>, vector<16x8xf32>
    %c0_98 = arith.constant 0 : index
    %c0_99 = arith.constant 0 : index
    %243 = vector.load %arg10[%c0_98, %c0_99] : memref<16x8xf32, #tpu.memory_space<vmem>>, vector<16x8xf32>
    %cst_100 = arith.constant dense<0.000000e+00> : vector<16x64xf32>
    %244 = tpu.matmul %242, %241, %cst_100 {dimension_numbers = #tpu.dot_dimension_numbers<[1], [0], [0], [1], [0, 0, 1, 1], [], []>} : vector<16x8xf32>, vector<8x64xf32>, vector<16x64xf32> -> vector<16x64xf32>
    %cst_101 = arith.constant dense<0.000000e+00> : vector<16x64xf32>
    %245 = tpu.matmul %243, %76, %cst_101 {dimension_numbers = #tpu.dot_dimension_numbers<[1], [0], [0], [1], [0, 0, 1, 1], [], []>} : vector<16x8xf32>, vector<8x64xf32>, vector<16x64xf32> -> vector<16x64xf32>
    %246 = arith.addf %244, %245 : vector<16x64xf32>
    %cst_102 = arith.constant dense<0.000000e+00> : vector<16xf32>
    %247 = vector.multi_reduction <add>, %246, %cst_102 [1] : vector<16x64xf32> to vector<16xf32>
    %248 = vector.shape_cast %247 : vector<16xf32> to vector<16x1xf32>
    %249 = arith.mulf %246, %246 : vector<16x64xf32>
    %cst_103 = arith.constant dense<0.000000e+00> : vector<16xf32>
    %250 = vector.multi_reduction <add>, %249, %cst_103 [1] : vector<16x64xf32> to vector<16xf32>
    %251 = vector.shape_cast %250 : vector<16xf32> to vector<16x1xf32>
    %252 = vector.extract_strided_slice %248 {offsets = [0, 0], sizes = [4, 1], strides = [1, 1]} : vector<16x1xf32> to vector<4x1xf32>
    %253 = vector.extract_strided_slice %251 {offsets = [0, 0], sizes = [4, 1], strides = [1, 1]} : vector<16x1xf32> to vector<4x1xf32>
    %254 = vector.extract_strided_slice %248 {offsets = [4, 0], sizes = [4, 1], strides = [1, 1]} : vector<16x1xf32> to vector<4x1xf32>
    %255 = arith.addf %252, %254 : vector<4x1xf32>
    %256 = vector.extract_strided_slice %251 {offsets = [4, 0], sizes = [4, 1], strides = [1, 1]} : vector<16x1xf32> to vector<4x1xf32>
    %257 = arith.addf %253, %256 : vector<4x1xf32>
    %258 = vector.extract_strided_slice %248 {offsets = [8, 0], sizes = [4, 1], strides = [1, 1]} : vector<16x1xf32> to vector<4x1xf32>
    %259 = arith.addf %255, %258 : vector<4x1xf32>
    %260 = vector.extract_strided_slice %251 {offsets = [8, 0], sizes = [4, 1], strides = [1, 1]} : vector<16x1xf32> to vector<4x1xf32>
    %261 = arith.addf %257, %260 : vector<4x1xf32>
    %262 = vector.extract_strided_slice %248 {offsets = [12, 0], sizes = [4, 1], strides = [1, 1]} : vector<16x1xf32> to vector<4x1xf32>
    %263 = arith.addf %259, %262 : vector<4x1xf32>
    %264 = vector.extract_strided_slice %251 {offsets = [12, 0], sizes = [4, 1], strides = [1, 1]} : vector<16x1xf32> to vector<4x1xf32>
    %265 = arith.addf %261, %264 : vector<4x1xf32>
    %cst_104 = arith.constant 2.560000e+02 : f32
    %266 = vector.broadcast %cst_104 : f32 to vector<4x1xf32>
    %267 = arith.divf %263, %266 : vector<4x1xf32>
    %cst_105 = arith.constant 2.560000e+02 : f32
    %268 = vector.broadcast %cst_105 : f32 to vector<4x1xf32>
    %269 = arith.divf %265, %268 : vector<4x1xf32>
    %270 = arith.mulf %267, %267 : vector<4x1xf32>
    %271 = arith.subf %269, %270 : vector<4x1xf32>
    %cst_106 = arith.constant 0.000000e+00 : f32
    %272 = vector.broadcast %cst_106 : f32 to vector<4x1xf32>
    %273 = arith.maximumf %271, %272 : vector<4x1xf32>
    %cst_107 = arith.constant 9.99999974E-6 : f32
    %274 = vector.broadcast %cst_107 : f32 to vector<4x1xf32>
    %275 = arith.addf %273, %274 : vector<4x1xf32>
    %276 = math.rsqrt %275 : vector<4x1xf32>
    %277 = vector.extract_strided_slice %246 {offsets = [0, 0], sizes = [4, 64], strides = [1, 1]} : vector<16x64xf32> to vector<4x64xf32>
    %278 = vector.broadcast %267 : vector<4x1xf32> to vector<4x64xf32>
    %279 = arith.subf %277, %278 : vector<4x64xf32>
    %280 = vector.broadcast %276 : vector<4x1xf32> to vector<4x64xf32>
    %281 = arith.mulf %279, %280 : vector<4x64xf32>
    %cst_108 = arith.constant 5.000000e-01 : f32
    %282 = vector.broadcast %cst_108 : f32 to vector<4x64xf32>
    %283 = arith.mulf %282, %281 : vector<4x64xf32>
    %cst_109 = arith.constant 0.707106769 : f32
    %284 = vector.broadcast %cst_109 : f32 to vector<4x64xf32>
    %285 = arith.mulf %281, %284 : vector<4x64xf32>
    %286 = math.erf %285 : vector<4x64xf32>
    %cst_110 = arith.constant 1.000000e+00 : f32
    %287 = vector.broadcast %cst_110 : f32 to vector<4x64xf32>
    %288 = arith.addf %287, %286 : vector<4x64xf32>
    %289 = arith.mulf %283, %288 : vector<4x64xf32>
    %290 = vector.extract_strided_slice %246 {offsets = [4, 0], sizes = [4, 64], strides = [1, 1]} : vector<16x64xf32> to vector<4x64xf32>
    %291 = vector.broadcast %267 : vector<4x1xf32> to vector<4x64xf32>
    %292 = arith.subf %290, %291 : vector<4x64xf32>
    %293 = vector.broadcast %276 : vector<4x1xf32> to vector<4x64xf32>
    %294 = arith.mulf %292, %293 : vector<4x64xf32>
    %cst_111 = arith.constant 5.000000e-01 : f32
    %295 = vector.broadcast %cst_111 : f32 to vector<4x64xf32>
    %296 = arith.mulf %295, %294 : vector<4x64xf32>
    %cst_112 = arith.constant 0.707106769 : f32
    %297 = vector.broadcast %cst_112 : f32 to vector<4x64xf32>
    %298 = arith.mulf %294, %297 : vector<4x64xf32>
    %299 = math.erf %298 : vector<4x64xf32>
    %cst_113 = arith.constant 1.000000e+00 : f32
    %300 = vector.broadcast %cst_113 : f32 to vector<4x64xf32>
    %301 = arith.addf %300, %299 : vector<4x64xf32>
    %302 = arith.mulf %296, %301 : vector<4x64xf32>
    %303 = vector.extract_strided_slice %246 {offsets = [8, 0], sizes = [4, 64], strides = [1, 1]} : vector<16x64xf32> to vector<4x64xf32>
    %304 = vector.broadcast %267 : vector<4x1xf32> to vector<4x64xf32>
    %305 = arith.subf %303, %304 : vector<4x64xf32>
    %306 = vector.broadcast %276 : vector<4x1xf32> to vector<4x64xf32>
    %307 = arith.mulf %305, %306 : vector<4x64xf32>
    %cst_114 = arith.constant 5.000000e-01 : f32
    %308 = vector.broadcast %cst_114 : f32 to vector<4x64xf32>
    %309 = arith.mulf %308, %307 : vector<4x64xf32>
    %cst_115 = arith.constant 0.707106769 : f32
    %310 = vector.broadcast %cst_115 : f32 to vector<4x64xf32>
    %311 = arith.mulf %307, %310 : vector<4x64xf32>
    %312 = math.erf %311 : vector<4x64xf32>
    %cst_116 = arith.constant 1.000000e+00 : f32
    %313 = vector.broadcast %cst_116 : f32 to vector<4x64xf32>
    %314 = arith.addf %313, %312 : vector<4x64xf32>
    %315 = arith.mulf %309, %314 : vector<4x64xf32>
    %316 = vector.extract_strided_slice %246 {offsets = [12, 0], sizes = [4, 64], strides = [1, 1]} : vector<16x64xf32> to vector<4x64xf32>
    %317 = vector.broadcast %267 : vector<4x1xf32> to vector<4x64xf32>
    %318 = arith.subf %316, %317 : vector<4x64xf32>
    %319 = vector.broadcast %276 : vector<4x1xf32> to vector<4x64xf32>
    %320 = arith.mulf %318, %319 : vector<4x64xf32>
    %cst_117 = arith.constant 5.000000e-01 : f32
    %321 = vector.broadcast %cst_117 : f32 to vector<4x64xf32>
    %322 = arith.mulf %321, %320 : vector<4x64xf32>
    %cst_118 = arith.constant 0.707106769 : f32
    %323 = vector.broadcast %cst_118 : f32 to vector<4x64xf32>
    %324 = arith.mulf %320, %323 : vector<4x64xf32>
    %325 = math.erf %324 : vector<4x64xf32>
    %cst_119 = arith.constant 1.000000e+00 : f32
    %326 = vector.broadcast %cst_119 : f32 to vector<4x64xf32>
    %327 = arith.addf %326, %325 : vector<4x64xf32>
    %328 = arith.mulf %322, %327 : vector<4x64xf32>
    %329 = tpu.concatenate %289, %302, %315, %328 in 1 : vector<4x64xf32>, vector<4x64xf32>, vector<4x64xf32>, vector<4x64xf32> -> vector<4x256xf32>
    %c0_120 = arith.constant 0 : index
    %c0_121 = arith.constant 0 : index
    %330 = vector.load %arg11[%c0_120, %c0_121] : memref<8x4xf32, #tpu.memory_space<vmem>>, vector<8x4xf32>
    %cst_122 = arith.constant dense<0.000000e+00> : vector<8x256xf32>
    %331 = tpu.matmul %330, %329, %cst_122 {dimension_numbers = #tpu.dot_dimension_numbers<[1], [0], [0], [1], [0, 0, 1, 1], [], []>} : vector<8x4xf32>, vector<4x256xf32>, vector<8x256xf32> -> vector<8x256xf32>
    %332 = vector.broadcast %21 : vector<1x1xf32> to vector<8x256xf32>
    %333 = arith.mulf %331, %332 : vector<8x256xf32>
    %334 = vector.broadcast %12 : vector<1x1xf32> to vector<8x256xf32>
    %335 = arith.addf %333, %334 : vector<8x256xf32>
    %c0_123 = arith.constant 0 : index
    %c0_124 = arith.constant 0 : index
    %c0_125 = arith.constant 0 : index
    %336 = vector.load %arg2[%c0_123, %c0_124, %c0_125] : memref<1x2x256xf32, #tpu.memory_space<vmem>>, vector<1x2x256xf32>
    %337 = vector.shape_cast %336 : vector<1x2x256xf32> to vector<2x256xf32>
    %cst_126 = arith.constant dense<0.000000e+00> : vector<2xf32>
    %338 = vector.multi_reduction <add>, %337, %cst_126 [1] : vector<2x256xf32> to vector<2xf32>
    %339 = vector.shape_cast %338 : vector<2xf32> to vector<2x1xf32>
    %340 = arith.mulf %337, %337 : vector<2x256xf32>
    %cst_127 = arith.constant dense<0.000000e+00> : vector<2xf32>
    %341 = vector.multi_reduction <add>, %340, %cst_127 [1] : vector<2x256xf32> to vector<2xf32>
    %342 = vector.shape_cast %341 : vector<2xf32> to vector<2x1xf32>
    %cst_128 = arith.constant dense<0.000000e+00> : vector<1xf32>
    %343 = vector.multi_reduction <add>, %339, %cst_128 [0] : vector<2x1xf32> to vector<1xf32>
    %344 = vector.shape_cast %343 : vector<1xf32> to vector<1x1xf32>
    %cst_129 = arith.constant dense<0.000000e+00> : vector<1xf32>
    %345 = vector.multi_reduction <add>, %342, %cst_129 [0] : vector<2x1xf32> to vector<1xf32>
    %346 = vector.shape_cast %345 : vector<1xf32> to vector<1x1xf32>
    %cst_130 = arith.constant 5.120000e+02 : f32
    %347 = vector.broadcast %cst_130 : f32 to vector<1x1xf32>
    %348 = arith.divf %344, %347 : vector<1x1xf32>
    %cst_131 = arith.constant 5.120000e+02 : f32
    %349 = vector.broadcast %cst_131 : f32 to vector<1x1xf32>
    %350 = arith.mulf %349, %348 : vector<1x1xf32>
    %351 = arith.mulf %350, %348 : vector<1x1xf32>
    %352 = arith.subf %346, %351 : vector<1x1xf32>
    %cst_132 = arith.constant 5.110000e+02 : f32
    %353 = vector.broadcast %cst_132 : f32 to vector<1x1xf32>
    %354 = arith.divf %352, %353 : vector<1x1xf32>
    %cst_133 = arith.constant 0.000000e+00 : f32
    %355 = vector.broadcast %cst_133 : f32 to vector<1x1xf32>
    %356 = arith.maximumf %354, %355 : vector<1x1xf32>
    %357 = math.sqrt %356 : vector<1x1xf32>
    %358 = vector.broadcast %348 : vector<1x1xf32> to vector<2x256xf32>
    %359 = arith.subf %337, %358 : vector<2x256xf32>
    %cst_134 = arith.constant 9.99999974E-6 : f32
    %360 = vector.broadcast %cst_134 : f32 to vector<1x1xf32>
    %361 = arith.addf %360, %357 : vector<1x1xf32>
    %362 = vector.broadcast %361 : vector<1x1xf32> to vector<2x256xf32>
    %363 = arith.divf %359, %362 : vector<2x256xf32>
    %c0_135 = arith.constant 0 : index
    %c0_136 = arith.constant 0 : index
    %364 = vector.load %arg12[%c0_135, %c0_136] : memref<4x2xf32, #tpu.memory_space<vmem>>, vector<4x2xf32>
    %cst_137 = arith.constant dense<0.000000e+00> : vector<4x256xf32>
    %365 = tpu.matmul %364, %363, %cst_137 {dimension_numbers = #tpu.dot_dimension_numbers<[1], [0], [0], [1], [0, 0, 1, 1], [], []>} : vector<4x2xf32>, vector<2x256xf32>, vector<4x256xf32> -> vector<4x256xf32>
    %c0_138 = arith.constant 0 : index
    %c0_139 = arith.constant 0 : index
    %c0_140 = arith.constant 0 : index
    %366 = vector.load %arg13[%c0_138, %c0_139, %c0_140] : memref<4x8x4xf32, #tpu.memory_space<vmem>>, vector<1x8x4xf32>
    %367 = vector.shape_cast %366 : vector<1x8x4xf32> to vector<8x4xf32>
    %368 = vector.extract_strided_slice %365 {offsets = [0, 0], sizes = [4, 64], strides = [1, 1]} : vector<4x256xf32> to vector<4x64xf32>
    %cst_141 = arith.constant dense<0.000000e+00> : vector<8x64xf32>
    %369 = tpu.matmul %367, %368, %cst_141 {dimension_numbers = #tpu.dot_dimension_numbers<[1], [0], [0], [1], [0, 0, 1, 1], [], []>} : vector<8x4xf32>, vector<4x64xf32>, vector<8x64xf32> -> vector<8x64xf32>
    %c1_142 = arith.constant 1 : index
    %c0_143 = arith.constant 0 : index
    %c0_144 = arith.constant 0 : index
    %370 = vector.load %arg13[%c1_142, %c0_143, %c0_144] : memref<4x8x4xf32, #tpu.memory_space<vmem>>, vector<1x8x4xf32>
    %371 = vector.shape_cast %370 : vector<1x8x4xf32> to vector<8x4xf32>
    %372 = vector.extract_strided_slice %365 {offsets = [0, 64], sizes = [4, 64], strides = [1, 1]} : vector<4x256xf32> to vector<4x64xf32>
    %cst_145 = arith.constant dense<0.000000e+00> : vector<8x64xf32>
    %373 = tpu.matmul %371, %372, %cst_145 {dimension_numbers = #tpu.dot_dimension_numbers<[1], [0], [0], [1], [0, 0, 1, 1], [], []>} : vector<8x4xf32>, vector<4x64xf32>, vector<8x64xf32> -> vector<8x64xf32>
    %374 = arith.addf %369, %373 : vector<8x64xf32>
    %c2_146 = arith.constant 2 : index
    %c0_147 = arith.constant 0 : index
    %c0_148 = arith.constant 0 : index
    %375 = vector.load %arg13[%c2_146, %c0_147, %c0_148] : memref<4x8x4xf32, #tpu.memory_space<vmem>>, vector<1x8x4xf32>
    %376 = vector.shape_cast %375 : vector<1x8x4xf32> to vector<8x4xf32>
    %377 = vector.extract_strided_slice %365 {offsets = [0, 128], sizes = [4, 64], strides = [1, 1]} : vector<4x256xf32> to vector<4x64xf32>
    %cst_149 = arith.constant dense<0.000000e+00> : vector<8x64xf32>
    %378 = tpu.matmul %376, %377, %cst_149 {dimension_numbers = #tpu.dot_dimension_numbers<[1], [0], [0], [1], [0, 0, 1, 1], [], []>} : vector<8x4xf32>, vector<4x64xf32>, vector<8x64xf32> -> vector<8x64xf32>
    %379 = arith.addf %374, %378 : vector<8x64xf32>
    %c3_150 = arith.constant 3 : index
    %c0_151 = arith.constant 0 : index
    %c0_152 = arith.constant 0 : index
    %380 = vector.load %arg13[%c3_150, %c0_151, %c0_152] : memref<4x8x4xf32, #tpu.memory_space<vmem>>, vector<1x8x4xf32>
    %381 = vector.shape_cast %380 : vector<1x8x4xf32> to vector<8x4xf32>
    %382 = vector.extract_strided_slice %365 {offsets = [0, 192], sizes = [4, 64], strides = [1, 1]} : vector<4x256xf32> to vector<4x64xf32>
    %cst_153 = arith.constant dense<0.000000e+00> : vector<8x64xf32>
    %383 = tpu.matmul %381, %382, %cst_153 {dimension_numbers = #tpu.dot_dimension_numbers<[1], [0], [0], [1], [0, 0, 1, 1], [], []>} : vector<8x4xf32>, vector<4x64xf32>, vector<8x64xf32> -> vector<8x64xf32>
    %384 = arith.addf %379, %383 : vector<8x64xf32>
    %cst_154 = arith.constant dense<0.000000e+00> : vector<8xf32>
    %385 = vector.multi_reduction <add>, %384, %cst_154 [1] : vector<8x64xf32> to vector<8xf32>
    %386 = vector.shape_cast %385 : vector<8xf32> to vector<8x1xf32>
    %387 = arith.mulf %384, %384 : vector<8x64xf32>
    %cst_155 = arith.constant dense<0.000000e+00> : vector<8xf32>
    %388 = vector.multi_reduction <add>, %387, %cst_155 [1] : vector<8x64xf32> to vector<8xf32>
    %389 = vector.shape_cast %388 : vector<8xf32> to vector<8x1xf32>
    %cst_156 = arith.constant 6.400000e+01 : f32
    %390 = vector.broadcast %cst_156 : f32 to vector<8x1xf32>
    %391 = arith.divf %386, %390 : vector<8x1xf32>
    %cst_157 = arith.constant 6.400000e+01 : f32
    %392 = vector.broadcast %cst_157 : f32 to vector<8x1xf32>
    %393 = arith.divf %389, %392 : vector<8x1xf32>
    %394 = arith.mulf %391, %391 : vector<8x1xf32>
    %395 = arith.subf %393, %394 : vector<8x1xf32>
    %cst_158 = arith.constant 0.000000e+00 : f32
    %396 = vector.broadcast %cst_158 : f32 to vector<8x1xf32>
    %397 = arith.maximumf %395, %396 : vector<8x1xf32>
    %398 = vector.broadcast %391 : vector<8x1xf32> to vector<8x64xf32>
    %399 = arith.subf %384, %398 : vector<8x64xf32>
    %cst_159 = arith.constant 9.99999974E-6 : f32
    %400 = vector.broadcast %cst_159 : f32 to vector<8x1xf32>
    %401 = arith.addf %397, %400 : vector<8x1xf32>
    %402 = math.rsqrt %401 : vector<8x1xf32>
    %403 = vector.broadcast %402 : vector<8x1xf32> to vector<8x64xf32>
    %404 = arith.mulf %399, %403 : vector<8x64xf32>
    %cst_160 = arith.constant 5.000000e-01 : f32
    %405 = vector.broadcast %cst_160 : f32 to vector<8x64xf32>
    %406 = arith.mulf %405, %404 : vector<8x64xf32>
    %cst_161 = arith.constant 0.707106769 : f32
    %407 = vector.broadcast %cst_161 : f32 to vector<8x64xf32>
    %408 = arith.mulf %404, %407 : vector<8x64xf32>
    %409 = math.erf %408 : vector<8x64xf32>
    %cst_162 = arith.constant 1.000000e+00 : f32
    %410 = vector.broadcast %cst_162 : f32 to vector<8x64xf32>
    %411 = arith.addf %410, %409 : vector<8x64xf32>
    %412 = arith.mulf %406, %411 : vector<8x64xf32>
    %c0_163 = arith.constant 0 : index
    %c0_164 = arith.constant 0 : index
    %c0_165 = arith.constant 0 : index
    %413 = vector.load %arg14[%c0_163, %c0_164, %c0_165] : memref<4x16x8xf32, #tpu.memory_space<vmem>>, vector<1x16x8xf32>
    %414 = vector.shape_cast %413 : vector<1x16x8xf32> to vector<16x8xf32>
    %415 = vector.extract_strided_slice %412 {offsets = [0, 0], sizes = [8, 16], strides = [1, 1]} : vector<8x64xf32> to vector<8x16xf32>
    %cst_166 = arith.constant dense<0.000000e+00> : vector<16x16xf32>
    %416 = tpu.matmul %414, %415, %cst_166 {dimension_numbers = #tpu.dot_dimension_numbers<[1], [0], [0], [1], [0, 0, 1, 1], [], []>} : vector<16x8xf32>, vector<8x16xf32>, vector<16x16xf32> -> vector<16x16xf32>
    %c1_167 = arith.constant 1 : index
    %c0_168 = arith.constant 0 : index
    %c0_169 = arith.constant 0 : index
    %417 = vector.load %arg14[%c1_167, %c0_168, %c0_169] : memref<4x16x8xf32, #tpu.memory_space<vmem>>, vector<1x16x8xf32>
    %418 = vector.shape_cast %417 : vector<1x16x8xf32> to vector<16x8xf32>
    %419 = vector.extract_strided_slice %412 {offsets = [0, 16], sizes = [8, 16], strides = [1, 1]} : vector<8x64xf32> to vector<8x16xf32>
    %cst_170 = arith.constant dense<0.000000e+00> : vector<16x16xf32>
    %420 = tpu.matmul %418, %419, %cst_170 {dimension_numbers = #tpu.dot_dimension_numbers<[1], [0], [0], [1], [0, 0, 1, 1], [], []>} : vector<16x8xf32>, vector<8x16xf32>, vector<16x16xf32> -> vector<16x16xf32>
    %421 = arith.addf %416, %420 : vector<16x16xf32>
    %c2_171 = arith.constant 2 : index
    %c0_172 = arith.constant 0 : index
    %c0_173 = arith.constant 0 : index
    %422 = vector.load %arg14[%c2_171, %c0_172, %c0_173] : memref<4x16x8xf32, #tpu.memory_space<vmem>>, vector<1x16x8xf32>
    %423 = vector.shape_cast %422 : vector<1x16x8xf32> to vector<16x8xf32>
    %424 = vector.extract_strided_slice %412 {offsets = [0, 32], sizes = [8, 16], strides = [1, 1]} : vector<8x64xf32> to vector<8x16xf32>
    %cst_174 = arith.constant dense<0.000000e+00> : vector<16x16xf32>
    %425 = tpu.matmul %423, %424, %cst_174 {dimension_numbers = #tpu.dot_dimension_numbers<[1], [0], [0], [1], [0, 0, 1, 1], [], []>} : vector<16x8xf32>, vector<8x16xf32>, vector<16x16xf32> -> vector<16x16xf32>
    %426 = arith.addf %421, %425 : vector<16x16xf32>
    %c3_175 = arith.constant 3 : index
    %c0_176 = arith.constant 0 : index
    %c0_177 = arith.constant 0 : index
    %427 = vector.load %arg14[%c3_175, %c0_176, %c0_177] : memref<4x16x8xf32, #tpu.memory_space<vmem>>, vector<1x16x8xf32>
    %428 = vector.shape_cast %427 : vector<1x16x8xf32> to vector<16x8xf32>
    %429 = vector.extract_strided_slice %412 {offsets = [0, 48], sizes = [8, 16], strides = [1, 1]} : vector<8x64xf32> to vector<8x16xf32>
    %cst_178 = arith.constant dense<0.000000e+00> : vector<16x16xf32>
    %430 = tpu.matmul %428, %429, %cst_178 {dimension_numbers = #tpu.dot_dimension_numbers<[1], [0], [0], [1], [0, 0, 1, 1], [], []>} : vector<16x8xf32>, vector<8x16xf32>, vector<16x16xf32> -> vector<16x16xf32>
    %431 = arith.addf %426, %430 : vector<16x16xf32>
    %cst_179 = arith.constant dense<0.000000e+00> : vector<16xf32>
    %432 = vector.multi_reduction <add>, %431, %cst_179 [1] : vector<16x16xf32> to vector<16xf32>
    %433 = vector.shape_cast %432 : vector<16xf32> to vector<16x1xf32>
    %434 = arith.mulf %431, %431 : vector<16x16xf32>
    %cst_180 = arith.constant dense<0.000000e+00> : vector<16xf32>
    %435 = vector.multi_reduction <add>, %434, %cst_180 [1] : vector<16x16xf32> to vector<16xf32>
    %436 = vector.shape_cast %435 : vector<16xf32> to vector<16x1xf32>
    %cst_181 = arith.constant 1.600000e+01 : f32
    %437 = vector.broadcast %cst_181 : f32 to vector<16x1xf32>
    %438 = arith.divf %433, %437 : vector<16x1xf32>
    %cst_182 = arith.constant 1.600000e+01 : f32
    %439 = vector.broadcast %cst_182 : f32 to vector<16x1xf32>
    %440 = arith.divf %436, %439 : vector<16x1xf32>
    %441 = arith.mulf %438, %438 : vector<16x1xf32>
    %442 = arith.subf %440, %441 : vector<16x1xf32>
    %cst_183 = arith.constant 0.000000e+00 : f32
    %443 = vector.broadcast %cst_183 : f32 to vector<16x1xf32>
    %444 = arith.maximumf %442, %443 : vector<16x1xf32>
    %445 = vector.broadcast %438 : vector<16x1xf32> to vector<16x16xf32>
    %446 = arith.subf %431, %445 : vector<16x16xf32>
    %cst_184 = arith.constant 9.99999974E-6 : f32
    %447 = vector.broadcast %cst_184 : f32 to vector<16x1xf32>
    %448 = arith.addf %444, %447 : vector<16x1xf32>
    %449 = math.rsqrt %448 : vector<16x1xf32>
    %450 = vector.broadcast %449 : vector<16x1xf32> to vector<16x16xf32>
    %451 = arith.mulf %446, %450 : vector<16x16xf32>
    %cst_185 = arith.constant 5.000000e-01 : f32
    %452 = vector.broadcast %cst_185 : f32 to vector<16x16xf32>
    %453 = arith.mulf %452, %451 : vector<16x16xf32>
    %cst_186 = arith.constant 0.707106769 : f32
    %454 = vector.broadcast %cst_186 : f32 to vector<16x16xf32>
    %455 = arith.mulf %451, %454 : vector<16x16xf32>
    %456 = math.erf %455 : vector<16x16xf32>
    %cst_187 = arith.constant 1.000000e+00 : f32
    %457 = vector.broadcast %cst_187 : f32 to vector<16x16xf32>
    %458 = arith.addf %457, %456 : vector<16x16xf32>
    %459 = arith.mulf %453, %458 : vector<16x16xf32>
    %c0_188 = arith.constant 0 : index
    %c0_189 = arith.constant 0 : index
    %460 = vector.load %arg15[%c0_188, %c0_189] : memref<16x16xf32, #tpu.memory_space<vmem>>, vector<16x16xf32>
    %cst_190 = arith.constant dense<0.000000e+00> : vector<16x16xf32>
    %461 = tpu.matmul %460, %459, %cst_190 {dimension_numbers = #tpu.dot_dimension_numbers<[1], [0], [0], [1], [0, 0, 1, 1], [], []>} : vector<16x16xf32>, vector<16x16xf32>, vector<16x16xf32> -> vector<16x16xf32>
    %cst_191 = arith.constant dense<0.000000e+00> : vector<16xf32>
    %462 = vector.multi_reduction <add>, %461, %cst_191 [1] : vector<16x16xf32> to vector<16xf32>
    %463 = vector.shape_cast %462 : vector<16xf32> to vector<16x1xf32>
    %464 = arith.mulf %461, %461 : vector<16x16xf32>
    %cst_192 = arith.constant dense<0.000000e+00> : vector<16xf32>
    %465 = vector.multi_reduction <add>, %464, %cst_192 [1] : vector<16x16xf32> to vector<16xf32>
    %466 = vector.shape_cast %465 : vector<16xf32> to vector<16x1xf32>
    %cst_193 = arith.constant 1.600000e+01 : f32
    %467 = vector.broadcast %cst_193 : f32 to vector<16x1xf32>
    %468 = arith.divf %463, %467 : vector<16x1xf32>
    %cst_194 = arith.constant 1.600000e+01 : f32
    %469 = vector.broadcast %cst_194 : f32 to vector<16x1xf32>
    %470 = arith.divf %466, %469 : vector<16x1xf32>
    %471 = arith.mulf %468, %468 : vector<16x1xf32>
    %472 = arith.subf %470, %471 : vector<16x1xf32>
    %cst_195 = arith.constant 0.000000e+00 : f32
    %473 = vector.broadcast %cst_195 : f32 to vector<16x1xf32>
    %474 = arith.maximumf %472, %473 : vector<16x1xf32>
    %475 = vector.broadcast %468 : vector<16x1xf32> to vector<16x16xf32>
    %476 = arith.subf %461, %475 : vector<16x16xf32>
    %cst_196 = arith.constant 9.99999974E-6 : f32
    %477 = vector.broadcast %cst_196 : f32 to vector<16x1xf32>
    %478 = arith.addf %474, %477 : vector<16x1xf32>
    %479 = math.rsqrt %478 : vector<16x1xf32>
    %480 = vector.broadcast %479 : vector<16x1xf32> to vector<16x16xf32>
    %481 = arith.mulf %476, %480 : vector<16x16xf32>
    %cst_197 = arith.constant 5.000000e-01 : f32
    %482 = vector.broadcast %cst_197 : f32 to vector<16x16xf32>
    %483 = arith.mulf %482, %481 : vector<16x16xf32>
    %cst_198 = arith.constant 0.707106769 : f32
    %484 = vector.broadcast %cst_198 : f32 to vector<16x16xf32>
    %485 = arith.mulf %481, %484 : vector<16x16xf32>
    %486 = math.erf %485 : vector<16x16xf32>
    %cst_199 = arith.constant 1.000000e+00 : f32
    %487 = vector.broadcast %cst_199 : f32 to vector<16x16xf32>
    %488 = arith.addf %487, %486 : vector<16x16xf32>
    %489 = arith.mulf %483, %488 : vector<16x16xf32>
    %c0_200 = arith.constant 0 : index
    %c0_201 = arith.constant 0 : index
    %490 = vector.load %arg16[%c0_200, %c0_201] : memref<32x16xf32, #tpu.memory_space<vmem>>, vector<32x16xf32>
    %c0_202 = arith.constant 0 : index
    %c0_203 = arith.constant 0 : index
    %491 = vector.load %arg17[%c0_202, %c0_203] : memref<32x16xf32, #tpu.memory_space<vmem>>, vector<32x16xf32>
    %cst_204 = arith.constant dense<0.000000e+00> : vector<32x16xf32>
    %492 = tpu.matmul %490, %489, %cst_204 {dimension_numbers = #tpu.dot_dimension_numbers<[1], [0], [0], [1], [0, 0, 1, 1], [], []>} : vector<32x16xf32>, vector<16x16xf32>, vector<32x16xf32> -> vector<32x16xf32>
    %cst_205 = arith.constant dense<0.000000e+00> : vector<32x16xf32>
    %493 = tpu.matmul %491, %459, %cst_205 {dimension_numbers = #tpu.dot_dimension_numbers<[1], [0], [0], [1], [0, 0, 1, 1], [], []>} : vector<32x16xf32>, vector<16x16xf32>, vector<32x16xf32> -> vector<32x16xf32>
    %494 = arith.addf %492, %493 : vector<32x16xf32>
    %cst_206 = arith.constant dense<0.000000e+00> : vector<32xf32>
    %495 = vector.multi_reduction <add>, %494, %cst_206 [1] : vector<32x16xf32> to vector<32xf32>
    %496 = vector.shape_cast %495 : vector<32xf32> to vector<32x1xf32>
    %497 = arith.mulf %494, %494 : vector<32x16xf32>
    %cst_207 = arith.constant dense<0.000000e+00> : vector<32xf32>
    %498 = vector.multi_reduction <add>, %497, %cst_207 [1] : vector<32x16xf32> to vector<32xf32>
    %499 = vector.shape_cast %498 : vector<32xf32> to vector<32x1xf32>
    %500 = vector.extract_strided_slice %496 {offsets = [0, 0], sizes = [8, 1], strides = [1, 1]} : vector<32x1xf32> to vector<8x1xf32>
    %501 = vector.extract_strided_slice %499 {offsets = [0, 0], sizes = [8, 1], strides = [1, 1]} : vector<32x1xf32> to vector<8x1xf32>
    %502 = vector.extract_strided_slice %496 {offsets = [8, 0], sizes = [8, 1], strides = [1, 1]} : vector<32x1xf32> to vector<8x1xf32>
    %503 = arith.addf %500, %502 : vector<8x1xf32>
    %504 = vector.extract_strided_slice %499 {offsets = [8, 0], sizes = [8, 1], strides = [1, 1]} : vector<32x1xf32> to vector<8x1xf32>
    %505 = arith.addf %501, %504 : vector<8x1xf32>
    %506 = vector.extract_strided_slice %496 {offsets = [16, 0], sizes = [8, 1], strides = [1, 1]} : vector<32x1xf32> to vector<8x1xf32>
    %507 = arith.addf %503, %506 : vector<8x1xf32>
    %508 = vector.extract_strided_slice %499 {offsets = [16, 0], sizes = [8, 1], strides = [1, 1]} : vector<32x1xf32> to vector<8x1xf32>
    %509 = arith.addf %505, %508 : vector<8x1xf32>
    %510 = vector.extract_strided_slice %496 {offsets = [24, 0], sizes = [8, 1], strides = [1, 1]} : vector<32x1xf32> to vector<8x1xf32>
    %511 = arith.addf %507, %510 : vector<8x1xf32>
    %512 = vector.extract_strided_slice %499 {offsets = [24, 0], sizes = [8, 1], strides = [1, 1]} : vector<32x1xf32> to vector<8x1xf32>
    %513 = arith.addf %509, %512 : vector<8x1xf32>
    %cst_208 = arith.constant 6.400000e+01 : f32
    %514 = vector.broadcast %cst_208 : f32 to vector<8x1xf32>
    %515 = arith.divf %511, %514 : vector<8x1xf32>
    %cst_209 = arith.constant 6.400000e+01 : f32
    %516 = vector.broadcast %cst_209 : f32 to vector<8x1xf32>
    %517 = arith.divf %513, %516 : vector<8x1xf32>
    %518 = arith.mulf %515, %515 : vector<8x1xf32>
    %519 = arith.subf %517, %518 : vector<8x1xf32>
    %cst_210 = arith.constant 0.000000e+00 : f32
    %520 = vector.broadcast %cst_210 : f32 to vector<8x1xf32>
    %521 = arith.maximumf %519, %520 : vector<8x1xf32>
    %cst_211 = arith.constant 9.99999974E-6 : f32
    %522 = vector.broadcast %cst_211 : f32 to vector<8x1xf32>
    %523 = arith.addf %521, %522 : vector<8x1xf32>
    %524 = math.rsqrt %523 : vector<8x1xf32>
    %525 = vector.extract_strided_slice %494 {offsets = [0, 0], sizes = [8, 16], strides = [1, 1]} : vector<32x16xf32> to vector<8x16xf32>
    %526 = vector.broadcast %515 : vector<8x1xf32> to vector<8x16xf32>
    %527 = arith.subf %525, %526 : vector<8x16xf32>
    %528 = vector.broadcast %524 : vector<8x1xf32> to vector<8x16xf32>
    %529 = arith.mulf %527, %528 : vector<8x16xf32>
    %cst_212 = arith.constant 5.000000e-01 : f32
    %530 = vector.broadcast %cst_212 : f32 to vector<8x16xf32>
    %531 = arith.mulf %530, %529 : vector<8x16xf32>
    %cst_213 = arith.constant 0.707106769 : f32
    %532 = vector.broadcast %cst_213 : f32 to vector<8x16xf32>
    %533 = arith.mulf %529, %532 : vector<8x16xf32>
    %534 = math.erf %533 : vector<8x16xf32>
    %cst_214 = arith.constant 1.000000e+00 : f32
    %535 = vector.broadcast %cst_214 : f32 to vector<8x16xf32>
    %536 = arith.addf %535, %534 : vector<8x16xf32>
    %537 = arith.mulf %531, %536 : vector<8x16xf32>
    %538 = vector.extract_strided_slice %494 {offsets = [8, 0], sizes = [8, 16], strides = [1, 1]} : vector<32x16xf32> to vector<8x16xf32>
    %539 = vector.broadcast %515 : vector<8x1xf32> to vector<8x16xf32>
    %540 = arith.subf %538, %539 : vector<8x16xf32>
    %541 = vector.broadcast %524 : vector<8x1xf32> to vector<8x16xf32>
    %542 = arith.mulf %540, %541 : vector<8x16xf32>
    %cst_215 = arith.constant 5.000000e-01 : f32
    %543 = vector.broadcast %cst_215 : f32 to vector<8x16xf32>
    %544 = arith.mulf %543, %542 : vector<8x16xf32>
    %cst_216 = arith.constant 0.707106769 : f32
    %545 = vector.broadcast %cst_216 : f32 to vector<8x16xf32>
    %546 = arith.mulf %542, %545 : vector<8x16xf32>
    %547 = math.erf %546 : vector<8x16xf32>
    %cst_217 = arith.constant 1.000000e+00 : f32
    %548 = vector.broadcast %cst_217 : f32 to vector<8x16xf32>
    %549 = arith.addf %548, %547 : vector<8x16xf32>
    %550 = arith.mulf %544, %549 : vector<8x16xf32>
    %551 = vector.extract_strided_slice %494 {offsets = [16, 0], sizes = [8, 16], strides = [1, 1]} : vector<32x16xf32> to vector<8x16xf32>
    %552 = vector.broadcast %515 : vector<8x1xf32> to vector<8x16xf32>
    %553 = arith.subf %551, %552 : vector<8x16xf32>
    %554 = vector.broadcast %524 : vector<8x1xf32> to vector<8x16xf32>
    %555 = arith.mulf %553, %554 : vector<8x16xf32>
    %cst_218 = arith.constant 5.000000e-01 : f32
    %556 = vector.broadcast %cst_218 : f32 to vector<8x16xf32>
    %557 = arith.mulf %556, %555 : vector<8x16xf32>
    %cst_219 = arith.constant 0.707106769 : f32
    %558 = vector.broadcast %cst_219 : f32 to vector<8x16xf32>
    %559 = arith.mulf %555, %558 : vector<8x16xf32>
    %560 = math.erf %559 : vector<8x16xf32>
    %cst_220 = arith.constant 1.000000e+00 : f32
    %561 = vector.broadcast %cst_220 : f32 to vector<8x16xf32>
    %562 = arith.addf %561, %560 : vector<8x16xf32>
    %563 = arith.mulf %557, %562 : vector<8x16xf32>
    %564 = vector.extract_strided_slice %494 {offsets = [24, 0], sizes = [8, 16], strides = [1, 1]} : vector<32x16xf32> to vector<8x16xf32>
    %565 = vector.broadcast %515 : vector<8x1xf32> to vector<8x16xf32>
    %566 = arith.subf %564, %565 : vector<8x16xf32>
    %567 = vector.broadcast %524 : vector<8x1xf32> to vector<8x16xf32>
    %568 = arith.mulf %566, %567 : vector<8x16xf32>
    %cst_221 = arith.constant 5.000000e-01 : f32
    %569 = vector.broadcast %cst_221 : f32 to vector<8x16xf32>
    %570 = arith.mulf %569, %568 : vector<8x16xf32>
    %cst_222 = arith.constant 0.707106769 : f32
    %571 = vector.broadcast %cst_222 : f32 to vector<8x16xf32>
    %572 = arith.mulf %568, %571 : vector<8x16xf32>
    %573 = math.erf %572 : vector<8x16xf32>
    %cst_223 = arith.constant 1.000000e+00 : f32
    %574 = vector.broadcast %cst_223 : f32 to vector<8x16xf32>
    %575 = arith.addf %574, %573 : vector<8x16xf32>
    %576 = arith.mulf %570, %575 : vector<8x16xf32>
    %577 = tpu.concatenate %537, %550, %563, %576 in 1 : vector<8x16xf32>, vector<8x16xf32>, vector<8x16xf32>, vector<8x16xf32> -> vector<8x64xf32>
    %c0_224 = arith.constant 0 : index
    %c0_225 = arith.constant 0 : index
    %578 = vector.load %arg18[%c0_224, %c0_225] : memref<16x8xf32, #tpu.memory_space<vmem>>, vector<16x8xf32>
    %c0_226 = arith.constant 0 : index
    %c0_227 = arith.constant 0 : index
    %579 = vector.load %arg19[%c0_226, %c0_227] : memref<16x8xf32, #tpu.memory_space<vmem>>, vector<16x8xf32>
    %cst_228 = arith.constant dense<0.000000e+00> : vector<16x64xf32>
    %580 = tpu.matmul %578, %577, %cst_228 {dimension_numbers = #tpu.dot_dimension_numbers<[1], [0], [0], [1], [0, 0, 1, 1], [], []>} : vector<16x8xf32>, vector<8x64xf32>, vector<16x64xf32> -> vector<16x64xf32>
    %cst_229 = arith.constant dense<0.000000e+00> : vector<16x64xf32>
    %581 = tpu.matmul %579, %412, %cst_229 {dimension_numbers = #tpu.dot_dimension_numbers<[1], [0], [0], [1], [0, 0, 1, 1], [], []>} : vector<16x8xf32>, vector<8x64xf32>, vector<16x64xf32> -> vector<16x64xf32>
    %582 = arith.addf %580, %581 : vector<16x64xf32>
    %cst_230 = arith.constant dense<0.000000e+00> : vector<16xf32>
    %583 = vector.multi_reduction <add>, %582, %cst_230 [1] : vector<16x64xf32> to vector<16xf32>
    %584 = vector.shape_cast %583 : vector<16xf32> to vector<16x1xf32>
    %585 = arith.mulf %582, %582 : vector<16x64xf32>
    %cst_231 = arith.constant dense<0.000000e+00> : vector<16xf32>
    %586 = vector.multi_reduction <add>, %585, %cst_231 [1] : vector<16x64xf32> to vector<16xf32>
    %587 = vector.shape_cast %586 : vector<16xf32> to vector<16x1xf32>
    %588 = vector.extract_strided_slice %584 {offsets = [0, 0], sizes = [4, 1], strides = [1, 1]} : vector<16x1xf32> to vector<4x1xf32>
    %589 = vector.extract_strided_slice %587 {offsets = [0, 0], sizes = [4, 1], strides = [1, 1]} : vector<16x1xf32> to vector<4x1xf32>
    %590 = vector.extract_strided_slice %584 {offsets = [4, 0], sizes = [4, 1], strides = [1, 1]} : vector<16x1xf32> to vector<4x1xf32>
    %591 = arith.addf %588, %590 : vector<4x1xf32>
    %592 = vector.extract_strided_slice %587 {offsets = [4, 0], sizes = [4, 1], strides = [1, 1]} : vector<16x1xf32> to vector<4x1xf32>
    %593 = arith.addf %589, %592 : vector<4x1xf32>
    %594 = vector.extract_strided_slice %584 {offsets = [8, 0], sizes = [4, 1], strides = [1, 1]} : vector<16x1xf32> to vector<4x1xf32>
    %595 = arith.addf %591, %594 : vector<4x1xf32>
    %596 = vector.extract_strided_slice %587 {offsets = [8, 0], sizes = [4, 1], strides = [1, 1]} : vector<16x1xf32> to vector<4x1xf32>
    %597 = arith.addf %593, %596 : vector<4x1xf32>
    %598 = vector.extract_strided_slice %584 {offsets = [12, 0], sizes = [4, 1], strides = [1, 1]} : vector<16x1xf32> to vector<4x1xf32>
    %599 = arith.addf %595, %598 : vector<4x1xf32>
    %600 = vector.extract_strided_slice %587 {offsets = [12, 0], sizes = [4, 1], strides = [1, 1]} : vector<16x1xf32> to vector<4x1xf32>
    %601 = arith.addf %597, %600 : vector<4x1xf32>
    %cst_232 = arith.constant 2.560000e+02 : f32
    %602 = vector.broadcast %cst_232 : f32 to vector<4x1xf32>
    %603 = arith.divf %599, %602 : vector<4x1xf32>
    %cst_233 = arith.constant 2.560000e+02 : f32
    %604 = vector.broadcast %cst_233 : f32 to vector<4x1xf32>
    %605 = arith.divf %601, %604 : vector<4x1xf32>
    %606 = arith.mulf %603, %603 : vector<4x1xf32>
    %607 = arith.subf %605, %606 : vector<4x1xf32>
    %cst_234 = arith.constant 0.000000e+00 : f32
    %608 = vector.broadcast %cst_234 : f32 to vector<4x1xf32>
    %609 = arith.maximumf %607, %608 : vector<4x1xf32>
    %cst_235 = arith.constant 9.99999974E-6 : f32
    %610 = vector.broadcast %cst_235 : f32 to vector<4x1xf32>
    %611 = arith.addf %609, %610 : vector<4x1xf32>
    %612 = math.rsqrt %611 : vector<4x1xf32>
    %613 = vector.extract_strided_slice %582 {offsets = [0, 0], sizes = [4, 64], strides = [1, 1]} : vector<16x64xf32> to vector<4x64xf32>
    %614 = vector.broadcast %603 : vector<4x1xf32> to vector<4x64xf32>
    %615 = arith.subf %613, %614 : vector<4x64xf32>
    %616 = vector.broadcast %612 : vector<4x1xf32> to vector<4x64xf32>
    %617 = arith.mulf %615, %616 : vector<4x64xf32>
    %cst_236 = arith.constant 5.000000e-01 : f32
    %618 = vector.broadcast %cst_236 : f32 to vector<4x64xf32>
    %619 = arith.mulf %618, %617 : vector<4x64xf32>
    %cst_237 = arith.constant 0.707106769 : f32
    %620 = vector.broadcast %cst_237 : f32 to vector<4x64xf32>
    %621 = arith.mulf %617, %620 : vector<4x64xf32>
    %622 = math.erf %621 : vector<4x64xf32>
    %cst_238 = arith.constant 1.000000e+00 : f32
    %623 = vector.broadcast %cst_238 : f32 to vector<4x64xf32>
    %624 = arith.addf %623, %622 : vector<4x64xf32>
    %625 = arith.mulf %619, %624 : vector<4x64xf32>
    %626 = vector.extract_strided_slice %582 {offsets = [4, 0], sizes = [4, 64], strides = [1, 1]} : vector<16x64xf32> to vector<4x64xf32>
    %627 = vector.broadcast %603 : vector<4x1xf32> to vector<4x64xf32>
    %628 = arith.subf %626, %627 : vector<4x64xf32>
    %629 = vector.broadcast %612 : vector<4x1xf32> to vector<4x64xf32>
    %630 = arith.mulf %628, %629 : vector<4x64xf32>
    %cst_239 = arith.constant 5.000000e-01 : f32
    %631 = vector.broadcast %cst_239 : f32 to vector<4x64xf32>
    %632 = arith.mulf %631, %630 : vector<4x64xf32>
    %cst_240 = arith.constant 0.707106769 : f32
    %633 = vector.broadcast %cst_240 : f32 to vector<4x64xf32>
    %634 = arith.mulf %630, %633 : vector<4x64xf32>
    %635 = math.erf %634 : vector<4x64xf32>
    %cst_241 = arith.constant 1.000000e+00 : f32
    %636 = vector.broadcast %cst_241 : f32 to vector<4x64xf32>
    %637 = arith.addf %636, %635 : vector<4x64xf32>
    %638 = arith.mulf %632, %637 : vector<4x64xf32>
    %639 = vector.extract_strided_slice %582 {offsets = [8, 0], sizes = [4, 64], strides = [1, 1]} : vector<16x64xf32> to vector<4x64xf32>
    %640 = vector.broadcast %603 : vector<4x1xf32> to vector<4x64xf32>
    %641 = arith.subf %639, %640 : vector<4x64xf32>
    %642 = vector.broadcast %612 : vector<4x1xf32> to vector<4x64xf32>
    %643 = arith.mulf %641, %642 : vector<4x64xf32>
    %cst_242 = arith.constant 5.000000e-01 : f32
    %644 = vector.broadcast %cst_242 : f32 to vector<4x64xf32>
    %645 = arith.mulf %644, %643 : vector<4x64xf32>
    %cst_243 = arith.constant 0.707106769 : f32
    %646 = vector.broadcast %cst_243 : f32 to vector<4x64xf32>
    %647 = arith.mulf %643, %646 : vector<4x64xf32>
    %648 = math.erf %647 : vector<4x64xf32>
    %cst_244 = arith.constant 1.000000e+00 : f32
    %649 = vector.broadcast %cst_244 : f32 to vector<4x64xf32>
    %650 = arith.addf %649, %648 : vector<4x64xf32>
    %651 = arith.mulf %645, %650 : vector<4x64xf32>
    %652 = vector.extract_strided_slice %582 {offsets = [12, 0], sizes = [4, 64], strides = [1, 1]} : vector<16x64xf32> to vector<4x64xf32>
    %653 = vector.broadcast %603 : vector<4x1xf32> to vector<4x64xf32>
    %654 = arith.subf %652, %653 : vector<4x64xf32>
    %655 = vector.broadcast %612 : vector<4x1xf32> to vector<4x64xf32>
    %656 = arith.mulf %654, %655 : vector<4x64xf32>
    %cst_245 = arith.constant 5.000000e-01 : f32
    %657 = vector.broadcast %cst_245 : f32 to vector<4x64xf32>
    %658 = arith.mulf %657, %656 : vector<4x64xf32>
    %cst_246 = arith.constant 0.707106769 : f32
    %659 = vector.broadcast %cst_246 : f32 to vector<4x64xf32>
    %660 = arith.mulf %656, %659 : vector<4x64xf32>
    %661 = math.erf %660 : vector<4x64xf32>
    %cst_247 = arith.constant 1.000000e+00 : f32
    %662 = vector.broadcast %cst_247 : f32 to vector<4x64xf32>
    %663 = arith.addf %662, %661 : vector<4x64xf32>
    %664 = arith.mulf %658, %663 : vector<4x64xf32>
    %665 = tpu.concatenate %625, %638, %651, %664 in 1 : vector<4x64xf32>, vector<4x64xf32>, vector<4x64xf32>, vector<4x64xf32> -> vector<4x256xf32>
    %c0_248 = arith.constant 0 : index
    %c0_249 = arith.constant 0 : index
    %666 = vector.load %arg20[%c0_248, %c0_249] : memref<8x4xf32, #tpu.memory_space<vmem>>, vector<8x4xf32>
    %cst_250 = arith.constant dense<0.000000e+00> : vector<8x256xf32>
    %667 = tpu.matmul %666, %665, %cst_250 {dimension_numbers = #tpu.dot_dimension_numbers<[1], [0], [0], [1], [0, 0, 1, 1], [], []>} : vector<8x4xf32>, vector<4x256xf32>, vector<8x256xf32> -> vector<8x256xf32>
    %668 = vector.broadcast %357 : vector<1x1xf32> to vector<8x256xf32>
    %669 = arith.mulf %667, %668 : vector<8x256xf32>
    %670 = vector.broadcast %348 : vector<1x1xf32> to vector<8x256xf32>
    %671 = arith.addf %669, %670 : vector<8x256xf32>
    %672 = math.cos %671 : vector<8x256xf32>
    %673 = arith.mulf %335, %672 : vector<8x256xf32>
    %c0_251 = arith.constant 0 : index
    %c0_252 = arith.constant 0 : index
    %c0_253 = arith.constant 0 : index
    %674 = vector.load %arg21[%c0_251, %c0_252, %c0_253] : memref<1x8x256xf32, #tpu.memory_space<vmem>>, vector<1x8x256xf32>
    %675 = vector.shape_cast %674 : vector<1x8x256xf32> to vector<8x256xf32>
    %676 = vector.shape_cast %673 : vector<8x256xf32> to vector<1x8x256xf32>
    tpu.vector_store %arg21[%c0_251, %c0_252, %c0_253], %676 {strides = array<i32>} : memref<1x8x256xf32, #tpu.memory_space<vmem>>, vector<1x8x256xf32>,
    %677 = math.sin %671 : vector<8x256xf32>
    %678 = arith.mulf %335, %677 : vector<8x256xf32>
    %c0_254 = arith.constant 0 : index
    %c0_255 = arith.constant 0 : index
    %c0_256 = arith.constant 0 : index
    %679 = vector.load %arg22[%c0_254, %c0_255, %c0_256] : memref<1x8x256xf32, #tpu.memory_space<vmem>>, vector<1x8x256xf32>
    %680 = vector.shape_cast %679 : vector<1x8x256xf32> to vector<8x256xf32>
    %681 = vector.shape_cast %678 : vector<8x256xf32> to vector<1x8x256xf32>
    tpu.vector_store %arg22[%c0_254, %c0_255, %c0_256], %681 {strides = array<i32>} : memref<1x8x256xf32, #tpu.memory_space<vmem>>, vector<1x8x256xf32>,
    return
  }
  func.func @transform_0(%arg0: i32) -> (i32, i32, i32) {
    %c0_i32 = arith.constant 0 : i32
    %c0_i32_0 = arith.constant 0 : i32
    %c0_i32_1 = arith.constant 0 : i32
    return %arg0, %c0_i32, %c0_i32_0 : i32, i32, i32
  }
  func.func @transform_1(%arg0: i32) -> (i32, i32, i32) {
    %c0_i32 = arith.constant 0 : i32
    %c0_i32_0 = arith.constant 0 : i32
    %c0_i32_1 = arith.constant 0 : i32
    return %arg0, %c0_i32, %c0_i32_0 : i32, i32, i32
  }
  func.func @transform_2(%arg0: i32) -> (i32, i32) {
    %c0_i32 = arith.constant 0 : i32
    %c0_i32_0 = arith.constant 0 : i32
    %c0_i32_1 = arith.constant 0 : i32
    return %c0_i32, %c0_i32_0 : i32, i32
  }
  func.func @transform_3(%arg0: i32) -> (i32, i32, i32) {
    %c0_i32 = arith.constant 0 : i32
    %c0_i32_0 = arith.constant 0 : i32
    %c0_i32_1 = arith.constant 0 : i32
    %c0_i32_2 = arith.constant 0 : i32
    return %c0_i32, %c0_i32_0, %c0_i32_1 : i32, i32, i32
  }
  func.func @transform_4(%arg0: i32) -> (i32, i32, i32) {
    %c0_i32 = arith.constant 0 : i32
    %c0_i32_0 = arith.constant 0 : i32
    %c0_i32_1 = arith.constant 0 : i32
    %c0_i32_2 = arith.constant 0 : i32
    return %c0_i32, %c0_i32_0, %c0_i32_1 : i32, i32, i32
  }
  func.func @transform_5(%arg0: i32) -> (i32, i32) {
    %c0_i32 = arith.constant 0 : i32
    %c0_i32_0 = arith.constant 0 : i32
    %c0_i32_1 = arith.constant 0 : i32
    return %c0_i32, %c0_i32_0 : i32, i32
  }
  func.func @transform_6(%arg0: i32) -> (i32, i32) {
    %c0_i32 = arith.constant 0 : i32
    %c0_i32_0 = arith.constant 0 : i32
    %c0_i32_1 = arith.constant 0 : i32
    return %c0_i32, %c0_i32_0 : i32, i32
  }
  func.func @transform_7(%arg0: i32) -> (i32, i32) {
    %c0_i32 = arith.constant 0 : i32
    %c0_i32_0 = arith.constant 0 : i32
    %c0_i32_1 = arith.constant 0 : i32
    return %c0_i32, %c0_i32_0 : i32, i32
  }
  func.func @transform_8(%arg0: i32) -> (i32, i32) {
    %c0_i32 = arith.constant 0 : i32
    %c0_i32_0 = arith.constant 0 : i32
    %c0_i32_1 = arith.constant 0 : i32
    return %c0_i32, %c0_i32_0 : i32, i32
  }
  func.func @transform_9(%arg0: i32) -> (i32, i32) {
    %c0_i32 = arith.constant 0 : i32
    %c0_i32_0 = arith.constant 0 : i32
    %c0_i32_1 = arith.constant 0 : i32
    return %c0_i32, %c0_i32_0 : i32, i32
  }
  func.func @transform_10(%arg0: i32) -> (i32, i32) {
    %c0_i32 = arith.constant 0 : i32
    %c0_i32_0 = arith.constant 0 : i32
    %c0_i32_1 = arith.constant 0 : i32
    return %c0_i32, %c0_i32_0 : i32, i32
  }
  func.func @transform_11(%arg0: i32) -> (i32, i32) {
    %c0_i32 = arith.constant 0 : i32
    %c0_i32_0 = arith.constant 0 : i32
    %c0_i32_1 = arith.constant 0 : i32
    return %c0_i32, %c0_i32_0 : i32, i32
  }
  func.func @transform_12(%arg0: i32) -> (i32, i32, i32) {
    %c0_i32 = arith.constant 0 : i32
    %c0_i32_0 = arith.constant 0 : i32
    %c0_i32_1 = arith.constant 0 : i32
    %c0_i32_2 = arith.constant 0 : i32
    return %c0_i32, %c0_i32_0, %c0_i32_1 : i32, i32, i32
  }
  func.func @transform_13(%arg0: i32) -> (i32, i32, i32) {
    %c0_i32 = arith.constant 0 : i32
    %c0_i32_0 = arith.constant 0 : i32
    %c0_i32_1 = arith.constant 0 : i32
    %c0_i32_2 = arith.constant 0 : i32
    return %c0_i32, %c0_i32_0, %c0_i32_1 : i32, i32, i32
  }
  func.func @transform_14(%arg0: i32) -> (i32, i32) {
    %c0_i32 = arith.constant 0 : i32
    %c0_i32_0 = arith.constant 0 : i32
    %c0_i32_1 = arith.constant 0 : i32
    return %c0_i32, %c0_i32_0 : i32, i32
  }
  func.func @transform_15(%arg0: i32) -> (i32, i32) {
    %c0_i32 = arith.constant 0 : i32
    %c0_i32_0 = arith.constant 0 : i32
    %c0_i32_1 = arith.constant 0 : i32
    return %c0_i32, %c0_i32_0 : i32, i32
  }
  func.func @transform_16(%arg0: i32) -> (i32, i32) {
    %c0_i32 = arith.constant 0 : i32
    %c0_i32_0 = arith.constant 0 : i32
    %c0_i32_1 = arith.constant 0 : i32
    return %c0_i32, %c0_i32_0 : i32, i32
  }
  func.func @transform_17(%arg0: i32) -> (i32, i32) {
    %c0_i32 = arith.constant 0 : i32
    %c0_i32_0 = arith.constant 0 : i32
    %c0_i32_1 = arith.constant 0 : i32
    return %c0_i32, %c0_i32_0 : i32, i32
  }
  func.func @transform_18(%arg0: i32) -> (i32, i32) {
    %c0_i32 = arith.constant 0 : i32
    %c0_i32_0 = arith.constant 0 : i32
    %c0_i32_1 = arith.constant 0 : i32
    return %c0_i32, %c0_i32_0 : i32, i32
  }
  func.func @transform_19(%arg0: i32) -> (i32, i32) {
    %c0_i32 = arith.constant 0 : i32
    %c0_i32_0 = arith.constant 0 : i32
    %c0_i32_1 = arith.constant 0 : i32
    return %c0_i32, %c0_i32_0 : i32, i32
  }
  func.func @transform_20(%arg0: i32) -> (i32, i32, i32) {
    %c0_i32 = arith.constant 0 : i32
    %c0_i32_0 = arith.constant 0 : i32
    %c0_i32_1 = arith.constant 0 : i32
    return %arg0, %c0_i32, %c0_i32_0 : i32, i32, i32
  }
  func.func @transform_21(%arg0: i32) -> (i32, i32, i32) {
    %c0_i32 = arith.constant 0 : i32
    %c0_i32_0 = arith.constant 0 : i32
    %c0_i32_1 = arith.constant 0 : i32
    return %arg0, %c0_i32, %c0_i32_0 : i32, i32, i32
  }
}

</mosaic_0001>

<llo_original>
// kernel: custom-call.1
$region0: #{custom-call.1}
  %s0 = inlined_call_operand.vmem [shape: c64[2,2,32,8], index: 0, kind: input, shape index: {}]
  %s1 = inlined_call_operand.vmem [shape: f32[2,2,32,8], index: 1, kind: output, shape index: {}]
  %s2 = scalar_lea.vmem %s0, 128
  %v3 = vld [vmem:[%s2] sm:$0xff]
  %4 = vst [vmem:[%s1] sm:$0xff] %v3
  %s5 = scalar_lea.vmem %s1, 8
  %s6 = scalar_lea.vmem %s2, 8
  %v7 = vld [vmem:[%s6] sm:$0xff]
  %8 = vst [vmem:[%s5] sm:$0xff] %v7
  %s9 = scalar_lea.vmem %s1, 16
  %s10 = scalar_lea.vmem %s2, 16
  %v11 = vld [vmem:[%s10] sm:$0xff]
  %12 = vst [vmem:[%s9] sm:$0xff] %v11
  %s13 = scalar_lea.vmem %s1, 24
  %s14 = scalar_lea.vmem %s2, 24
  %v15 = vld [vmem:[%s14] sm:$0xff]
  %16 = vst [vmem:[%s13] sm:$0xff] %v15
  %s17 = scalar_lea.vmem %s1, 32
  %s18 = scalar_lea.vmem %s2, 32
  %v19 = vld [vmem:[%s18] sm:$0xff]
  %20 = vst [vmem:[%s17] sm:$0xff] %v19
  %s21 = scalar_lea.vmem %s1, 40
  %s22 = scalar_lea.vmem %s2, 40
  %v23 = vld [vmem:[%s22] sm:$0xff]
  %24 = vst [vmem:[%s21] sm:$0xff] %v23
  %s25 = scalar_lea.vmem %s1, 48
  %s26 = scalar_lea.vmem %s2, 48
  %v27 = vld [vmem:[%s26] sm:$0xff]
  %28 = vst [vmem:[%s25] sm:$0xff] %v27
  %s29 = scalar_lea.vmem %s1, 56
  %s30 = scalar_lea.vmem %s2, 56
  %v31 = vld [vmem:[%s30] sm:$0xff]
  %32 = vst [vmem:[%s29] sm:$0xff] %v31
  %s33 = scalar_lea.vmem %s1, 64
  %s34 = scalar_lea.vmem %s2, 64
  %v35 = vld [vmem:[%s34] sm:$0xff]
  %36 = vst [vmem:[%s33] sm:$0xff] %v35
  %s37 = scalar_lea.vmem %s1, 72
  %s38 = scalar_lea.vmem %s2, 72
  %v39 = vld [vmem:[%s38] sm:$0xff]
  %40 = vst [vmem:[%s37] sm:$0xff] %v39
  %s41 = scalar_lea.vmem %s1, 80
  %s42 = scalar_lea.vmem %s2, 80
  %v43 = vld [vmem:[%s42] sm:$0xff]
  %44 = vst [vmem:[%s41] sm:$0xff] %v43
  %s45 = scalar_lea.vmem %s1, 88
  %s46 = scalar_lea.vmem %s2, 88
  %v47 = vld [vmem:[%s46] sm:$0xff]
  %48 = vst [vmem:[%s45] sm:$0xff] %v47
  %s49 = scalar_lea.vmem %s1, 96
  %s50 = scalar_lea.vmem %s2, 96
  %v51 = vld [vmem:[%s50] sm:$0xff]
  %52 = vst [vmem:[%s49] sm:$0xff] %v51
  %s53 = scalar_lea.vmem %s1, 104
  %s54 = scalar_lea.vmem %s2, 104
  %v55 = vld [vmem:[%s54] sm:$0xff]
  %56 = vst [vmem:[%s53] sm:$0xff] %v55
  %s57 = scalar_lea.vmem %s1, 112
  %s58 = scalar_lea.vmem %s2, 112
  %v59 = vld [vmem:[%s58] sm:$0xff]
  %60 = vst [vmem:[%s57] sm:$0xff] %v59
  %s61 = scalar_lea.vmem %s1, 120
  %s62 = scalar_lea.vmem %s2, 120
  %v63 = vld [vmem:[%s62] sm:$0xff]
  %64 = vst [vmem:[%s61] sm:$0xff] %v63

// kernel: custom-call
$region0: #{custom-call}
  %s0 = inlined_call_operand.vmem [shape: c64[2,2,32,8], index: 0, kind: input, shape index: {}]
  %s1 = inlined_call_operand.vmem [shape: f32[2,2,32,8], index: 1, kind: output, shape index: {}]
  %v2 = vld [vmem:[%s0] sm:$0xff]
  %3 = vst [vmem:[%s1] sm:$0xff] %v2
  %s4 = scalar_lea.vmem %s1, 8
  %s5 = scalar_lea.vmem %s0, 8
  %v6 = vld [vmem:[%s5] sm:$0xff]
  %7 = vst [vmem:[%s4] sm:$0xff] %v6
  %s8 = scalar_lea.vmem %s1, 16
  %s9 = scalar_lea.vmem %s0, 16
  %v10 = vld [vmem:[%s9] sm:$0xff]
  %11 = vst [vmem:[%s8] sm:$0xff] %v10
  %s12 = scalar_lea.vmem %s1, 24
  %s13 = scalar_lea.vmem %s0, 24
  %v14 = vld [vmem:[%s13] sm:$0xff]
  %15 = vst [vmem:[%s12] sm:$0xff] %v14
  %s16 = scalar_lea.vmem %s1, 32
  %s17 = scalar_lea.vmem %s0, 32
  %v18 = vld [vmem:[%s17] sm:$0xff]
  %19 = vst [vmem:[%s16] sm:$0xff] %v18
  %s20 = scalar_lea.vmem %s1, 40
  %s21 = scalar_lea.vmem %s0, 40
  %v22 = vld [vmem:[%s21] sm:$0xff]
  %23 = vst [vmem:[%s20] sm:$0xff] %v22
  %s24 = scalar_lea.vmem %s1, 48
  %s25 = scalar_lea.vmem %s0, 48
  %v26 = vld [vmem:[%s25] sm:$0xff]
  %27 = vst [vmem:[%s24] sm:$0xff] %v26
  %s28 = scalar_lea.vmem %s1, 56
  %s29 = scalar_lea.vmem %s0, 56
  %v30 = vld [vmem:[%s29] sm:$0xff]
  %31 = vst [vmem:[%s28] sm:$0xff] %v30
  %s32 = scalar_lea.vmem %s1, 64
  %s33 = scalar_lea.vmem %s0, 64
  %v34 = vld [vmem:[%s33] sm:$0xff]
  %35 = vst [vmem:[%s32] sm:$0xff] %v34
  %s36 = scalar_lea.vmem %s1, 72
  %s37 = scalar_lea.vmem %s0, 72
  %v38 = vld [vmem:[%s37] sm:$0xff]
  %39 = vst [vmem:[%s36] sm:$0xff] %v38
  %s40 = scalar_lea.vmem %s1, 80
  %s41 = scalar_lea.vmem %s0, 80
  %v42 = vld [vmem:[%s41] sm:$0xff]
  %43 = vst [vmem:[%s40] sm:$0xff] %v42
  %s44 = scalar_lea.vmem %s1, 88
  %s45 = scalar_lea.vmem %s0, 88
  %v46 = vld [vmem:[%s45] sm:$0xff]
  %47 = vst [vmem:[%s44] sm:$0xff] %v46
  %s48 = scalar_lea.vmem %s1, 96
  %s49 = scalar_lea.vmem %s0, 96
  %v50 = vld [vmem:[%s49] sm:$0xff]
  %51 = vst [vmem:[%s48] sm:$0xff] %v50
  %s52 = scalar_lea.vmem %s1, 104
  %s53 = scalar_lea.vmem %s0, 104
  %v54 = vld [vmem:[%s53] sm:$0xff]
  %55 = vst [vmem:[%s52] sm:$0xff] %v54
  %s56 = scalar_lea.vmem %s1, 112
  %s57 = scalar_lea.vmem %s0, 112
  %v58 = vld [vmem:[%s57] sm:$0xff]
  %59 = vst [vmem:[%s56] sm:$0xff] %v58
  %s60 = scalar_lea.vmem %s1, 120
  %s61 = scalar_lea.vmem %s0, 120
  %v62 = vld [vmem:[%s61] sm:$0xff]
  %63 = vst [vmem:[%s60] sm:$0xff] %v62

// kernel: custom-call.2
$region0: #{custom-call.2}
  %s0 = inlined_call_operand.vmem [shape: f32[2,4,2,32,8], index: 0, kind: input, shape index: {}]
  %s1 = inlined_call_operand.vmem [shape: f32[2,4,2,32,8], index: 1, kind: input, shape index: {}]
  %s2 = inlined_call_operand.vmem [shape: c64[2,4,2,32,8], index: 2, kind: output, shape index: {}]
  %s4 = scalar_lea.vmem %s2, 512
  %v5 = vld [vmem:[%s0] sm:$0xff]
  %6 = vst [vmem:[%s2] sm:$0xff] %v5
  %s7 = scalar_lea.vmem %s2, 8
  %s8 = scalar_lea.vmem %s0, 8
  %v9 = vld [vmem:[%s8] sm:$0xff]
  %10 = vst [vmem:[%s7] sm:$0xff] %v9
  %s11 = scalar_lea.vmem %s2, 16
  %s12 = scalar_lea.vmem %s0, 16
  %v13 = vld [vmem:[%s12] sm:$0xff]
  %14 = vst [vmem:[%s11] sm:$0xff] %v13
  %s15 = scalar_lea.vmem %s2, 24
  %s16 = scalar_lea.vmem %s0, 24
  %v17 = vld [vmem:[%s16] sm:$0xff]
  %18 = vst [vmem:[%s15] sm:$0xff] %v17
  %s19 = scalar_lea.vmem %s2, 32
  %s20 = scalar_lea.vmem %s0, 32
  %v21 = vld [vmem:[%s20] sm:$0xff]
  %22 = vst [vmem:[%s19] sm:$0xff] %v21
  %s23 = scalar_lea.vmem %s2, 40
  %s24 = scalar_lea.vmem %s0, 40
  %v25 = vld [vmem:[%s24] sm:$0xff]
  %26 = vst [vmem:[%s23] sm:$0xff] %v25
  %s27 = scalar_lea.vmem %s2, 48
  %s28 = scalar_lea.vmem %s0, 48
  %v29 = vld [vmem:[%s28] sm:$0xff]
  %30 = vst [vmem:[%s27] sm:$0xff] %v29
  %s31 = scalar_lea.vmem %s2, 56
  %s32 = scalar_lea.vmem %s0, 56
  %v33 = vld [vmem:[%s32] sm:$0xff]
  %34 = vst [vmem:[%s31] sm:$0xff] %v33
  %s35 = scalar_lea.vmem %s2, 64
  %s36 = scalar_lea.vmem %s0, 64
  %v37 = vld [vmem:[%s36] sm:$0xff]
  %38 = vst [vmem:[%s35] sm:$0xff] %v37
  %s39 = scalar_lea.vmem %s2, 72
  %s40 = scalar_lea.vmem %s0, 72
  %v41 = vld [vmem:[%s40] sm:$0xff]
  %42 = vst [vmem:[%s39] sm:$0xff] %v41
  %s43 = scalar_lea.vmem %s2, 80
  %s44 = scalar_lea.vmem %s0, 80
  %v45 = vld [vmem:[%s44] sm:$0xff]
  %46 = vst [vmem:[%s43] sm:$0xff] %v45
  %s47 = scalar_lea.vmem %s2, 88
  %s48 = scalar_lea.vmem %s0, 88
  %v49 = vld [vmem:[%s48] sm:$0xff]
  %50 = vst [vmem:[%s47] sm:$0xff] %v49
  %s51 = scalar_lea.vmem %s2, 96
  %s52 = scalar_lea.vmem %s0, 96
  %v53 = vld [vmem:[%s52] sm:$0xff]
  %54 = vst [vmem:[%s51] sm:$0xff] %v53
  %s55 = scalar_lea.vmem %s2, 104
  %s56 = scalar_lea.vmem %s0, 104
  %v57 = vld [vmem:[%s56] sm:$0xff]
  %58 = vst [vmem:[%s55] sm:$0xff] %v57
  %s59 = scalar_lea.vmem %s2, 112
  %s60 = scalar_lea.vmem %s0, 112
  %v61 = vld [vmem:[%s60] sm:$0xff]
  %62 = vst [vmem:[%s59] sm:$0xff] %v61
  %s63 = scalar_lea.vmem %s2, 120
  %s64 = scalar_lea.vmem %s0, 120
  %v65 = vld [vmem:[%s64] sm:$0xff]
  %66 = vst [vmem:[%s63] sm:$0xff] %v65
  %s67 = scalar_lea.vmem %s2, 128
  %s68 = scalar_lea.vmem %s0, 128
  %v69 = vld [vmem:[%s68] sm:$0xff]
  %70 = vst [vmem:[%s67] sm:$0xff] %v69
  %s71 = scalar_lea.vmem %s2, 136
  %s72 = scalar_lea.vmem %s0, 136
  %v73 = vld [vmem:[%s72] sm:$0xff]
  %74 = vst [vmem:[%s71] sm:$0xff] %v73
  %s75 = scalar_lea.vmem %s2, 144
  %s76 = scalar_lea.vmem %s0, 144
  %v77 = vld [vmem:[%s76] sm:$0xff]
  %78 = vst [vmem:[%s75] sm:$0xff] %v77
  %s79 = scalar_lea.vmem %s2, 152
  %s80 = scalar_lea.vmem %s0, 152
  %v81 = vld [vmem:[%s80] sm:$0xff]
  %82 = vst [vmem:[%s79] sm:$0xff] %v81
  %s83 = scalar_lea.vmem %s2, 160
  %s84 = scalar_lea.vmem %s0, 160
  %v85 = vld [vmem:[%s84] sm:$0xff]
  %86 = vst [vmem:[%s83] sm:$0xff] %v85
  %s87 = scalar_lea.vmem %s2, 168
  %s88 = scalar_lea.vmem %s0, 168
  %v89 = vld [vmem:[%s88] sm:$0xff]
  %90 = vst [vmem:[%s87] sm:$0xff] %v89
  %s91 = scalar_lea.vmem %s2, 176
  %s92 = scalar_lea.vmem %s0, 176
  %v93 = vld [vmem:[%s92] sm:$0xff]
  %94 = vst [vmem:[%s91] sm:$0xff] %v93
  %s95 = scalar_lea.vmem %s2, 184
  %s96 = scalar_lea.vmem %s0, 184
  %v97 = vld [vmem:[%s96] sm:$0xff]
  %98 = vst [vmem:[%s95] sm:$0xff] %v97
  %s99 = scalar_lea.vmem %s2, 192
  %s100 = scalar_lea.vmem %s0, 192
  %v101 = vld [vmem:[%s100] sm:$0xff]
  %102 = vst [vmem:[%s99] sm:$0xff] %v101
  %s103 = scalar_lea.vmem %s2, 200
  %s104 = scalar_lea.vmem %s0, 200
  %v105 = vld [vmem:[%s104] sm:$0xff]
  %106 = vst [vmem:[%s103] sm:$0xff] %v105
  %s107 = scalar_lea.vmem %s2, 208
  %s108 = scalar_lea.vmem %s0, 208
  %v109 = vld [vmem:[%s108] sm:$0xff]
  %110 = vst [vmem:[%s107] sm:$0xff] %v109
  %s111 = scalar_lea.vmem %s2, 216
  %s112 = scalar_lea.vmem %s0, 216
  %v113 = vld [vmem:[%s112] sm:$0xff]
  %114 = vst [vmem:[%s111] sm:$0xff] %v113
  %s115 = scalar_lea.vmem %s2, 224
  %s116 = scalar_lea.vmem %s0, 224
  %v117 = vld [vmem:[%s116] sm:$0xff]
  %118 = vst [vmem:[%s115] sm:$0xff] %v117
  %s119 = scalar_lea.vmem %s2, 232
  %s120 = scalar_lea.vmem %s0, 232
  %v121 = vld [vmem:[%s120] sm:$0xff]
  %122 = vst [vmem:[%s119] sm:$0xff] %v121
  %s123 = scalar_lea.vmem %s2, 240
  %s124 = scalar_lea.vmem %s0, 240
  %v125 = vld [vmem:[%s124] sm:$0xff]
  %126 = vst [vmem:[%s123] sm:$0xff] %v125
  %s127 = scalar_lea.vmem %s2, 248
  %s128 = scalar_lea.vmem %s0, 248
  %v129 = vld [vmem:[%s128] sm:$0xff]
  %130 = vst [vmem:[%s127] sm:$0xff] %v129
  %s131 = scalar_lea.vmem %s2, 256
  %s132 = scalar_lea.vmem %s0, 256
  %v133 = vld [vmem:[%s132] sm:$0xff]
  %134 = vst [vmem:[%s131] sm:$0xff] %v133
  %s135 = scalar_lea.vmem %s2, 264
  %s136 = scalar_lea.vmem %s0, 264
  %v137 = vld [vmem:[%s136] sm:$0xff]
  %138 = vst [vmem:[%s135] sm:$0xff] %v137
  %s139 = scalar_lea.vmem %s2, 272
  %s140 = scalar_lea.vmem %s0, 272
  %v141 = vld [vmem:[%s140] sm:$0xff]
  %142 = vst [vmem:[%s139] sm:$0xff] %v141
  %s143 = scalar_lea.vmem %s2, 280
  %s144 = scalar_lea.vmem %s0, 280
  %v145 = vld [vmem:[%s144] sm:$0xff]
  %146 = vst [vmem:[%s143] sm:$0xff] %v145
  %s147 = scalar_lea.vmem %s2, 288
  %s148 = scalar_lea.vmem %s0, 288
  %v149 = vld [vmem:[%s148] sm:$0xff]
  %150 = vst [vmem:[%s147] sm:$0xff] %v149
  %s151 = scalar_lea.vmem %s2, 296
  %s152 = scalar_lea.vmem %s0, 296
  %v153 = vld [vmem:[%s152] sm:$0xff]
  %154 = vst [vmem:[%s151] sm:$0xff] %v153
  %s155 = scalar_lea.vmem %s2, 304
  %s156 = scalar_lea.vmem %s0, 304
  %v157 = vld [vmem:[%s156] sm:$0xff]
  %158 = vst [vmem:[%s155] sm:$0xff] %v157
  %s159 = scalar_lea.vmem %s2, 312
  %s160 = scalar_lea.vmem %s0, 312
  %v161 = vld [vmem:[%s160] sm:$0xff]
  %162 = vst [vmem:[%s159] sm:$0xff] %v161
  %s163 = scalar_lea.vmem %s2, 320
  %s164 = scalar_lea.vmem %s0, 320
  %v165 = vld [vmem:[%s164] sm:$0xff]
  %166 = vst [vmem:[%s163] sm:$0xff] %v165
  %s167 = scalar_lea.vmem %s2, 328
  %s168 = scalar_lea.vmem %s0, 328
  %v169 = vld [vmem:[%s168] sm:$0xff]
  %170 = vst [vmem:[%s167] sm:$0xff] %v169
  %s171 = scalar_lea.vmem %s2, 336
  %s172 = scalar_lea.vmem %s0, 336
  %v173 = vld [vmem:[%s172] sm:$0xff]
  %174 = vst [vmem:[%s171] sm:$0xff] %v173
  %s175 = scalar_lea.vmem %s2, 344
  %s176 = scalar_lea.vmem %s0, 344
  %v177 = vld [vmem:[%s176] sm:$0xff]
  %178 = vst [vmem:[%s175] sm:$0xff] %v177
  %s179 = scalar_lea.vmem %s2, 352
  %s180 = scalar_lea.vmem %s0, 352
  %v181 = vld [vmem:[%s180] sm:$0xff]
  %182 = vst [vmem:[%s179] sm:$0xff] %v181
  %s183 = scalar_lea.vmem %s2, 360
  %s184 = scalar_lea.vmem %s0, 360
  %v185 = vld [vmem:[%s184] sm:$0xff]
  %186 = vst [vmem:[%s183] sm:$0xff] %v185
  %s187 = scalar_lea.vmem %s2, 368
  %s188 = scalar_lea.vmem %s0, 368
  %v189 = vld [vmem:[%s188] sm:$0xff]
  %190 = vst [vmem:[%s187] sm:$0xff] %v189
  %s191 = scalar_lea.vmem %s2, 376
  %s192 = scalar_lea.vmem %s0, 376
  %v193 = vld [vmem:[%s192] sm:$0xff]
  %194 = vst [vmem:[%s191] sm:$0xff] %v193
  %s195 = scalar_lea.vmem %s2, 384
  %s196 = scalar_lea.vmem %s0, 384
  %v197 = vld [vmem:[%s196] sm:$0xff]
  %198 = vst [vmem:[%s195] sm:$0xff] %v197
  %s199 = scalar_lea.vmem %s2, 392
  %s200 = scalar_lea.vmem %s0, 392
  %v201 = vld [vmem:[%s200] sm:$0xff]
  %202 = vst [vmem:[%s199] sm:$0xff] %v201
  %s203 = scalar_lea.vmem %s2, 400
  %s204 = scalar_lea.vmem %s0, 400
  %v205 = vld [vmem:[%s204] sm:$0xff]
  %206 = vst [vmem:[%s203] sm:$0xff] %v205
  %s207 = scalar_lea.vmem %s2, 408
  %s208 = scalar_lea.vmem %s0, 408
  %v209 = vld [vmem:[%s208] sm:$0xff]
  %210 = vst [vmem:[%s207] sm:$0xff] %v209
  %s211 = scalar_lea.vmem %s2, 416
  %s212 = scalar_lea.vmem %s0, 416
  %v213 = vld [vmem:[%s212] sm:$0xff]
  %214 = vst [vmem:[%s211] sm:$0xff] %v213
  %s215 = scalar_lea.vmem %s2, 424
  %s216 = scalar_lea.vmem %s0, 424
  %v217 = vld [vmem:[%s216] sm:$0xff]
  %218 = vst [vmem:[%s215] sm:$0xff] %v217
  %s219 = scalar_lea.vmem %s2, 432
  %s220 = scalar_lea.vmem %s0, 432
  %v221 = vld [vmem:[%s220] sm:$0xff]
  %222 = vst [vmem:[%s219] sm:$0xff] %v221
  %s223 = scalar_lea.vmem %s2, 440
  %s224 = scalar_lea.vmem %s0, 440
  %v225 = vld [vmem:[%s224] sm:$0xff]
  %226 = vst [vmem:[%s223] sm:$0xff] %v225
  %s227 = scalar_lea.vmem %s2, 448
  %s228 = scalar_lea.vmem %s0, 448
  %v229 = vld [vmem:[%s228] sm:$0xff]
  %230 = vst [vmem:[%s227] sm:$0xff] %v229
  %s231 = scalar_lea.vmem %s2, 456
  %s232 = scalar_lea.vmem %s0, 456
  %v233 = vld [vmem:[%s232] sm:$0xff]
  %234 = vst [vmem:[%s231] sm:$0xff] %v233
  %s235 = scalar_lea.vmem %s2, 464
  %s236 = scalar_lea.vmem %s0, 464
  %v237 = vld [vmem:[%s236] sm:$0xff]
  %238 = vst [vmem:[%s235] sm:$0xff] %v237
  %s239 = scalar_lea.vmem %s2, 472
  %s240 = scalar_lea.vmem %s0, 472
  %v241 = vld [vmem:[%s240] sm:$0xff]
  %242 = vst [vmem:[%s239] sm:$0xff] %v241
  %s243 = scalar_lea.vmem %s2, 480
  %s244 = scalar_lea.vmem %s0, 480
  %v245 = vld [vmem:[%s244] sm:$0xff]
  %246 = vst [vmem:[%s243] sm:$0xff] %v245
  %s247 = scalar_lea.vmem %s2, 488
  %s248 = scalar_lea.vmem %s0, 488
  %v249 = vld [vmem:[%s248] sm:$0xff]
  %250 = vst [vmem:[%s247] sm:$0xff] %v249
  %s251 = scalar_lea.vmem %s2, 496
  %s252 = scalar_lea.vmem %s0, 496
  %v253 = vld [vmem:[%s252] sm:$0xff]
  %254 = vst [vmem:[%s251] sm:$0xff] %v253
  %s255 = scalar_lea.vmem %s2, 504
  %s256 = scalar_lea.vmem %s0, 504
  %v257 = vld [vmem:[%s256] sm:$0xff]
  %258 = vst [vmem:[%s255] sm:$0xff] %v257
  %v259 = vld [vmem:[%s1] sm:$0xff]
  %260 = vst [vmem:[%s4] sm:$0xff] %v259
  %s261 = scalar_lea.vmem %s4, 8
  %s262 = scalar_lea.vmem %s1, 8
  %v263 = vld [vmem:[%s262] sm:$0xff]
  %264 = vst [vmem:[%s261] sm:$0xff] %v263
  %s265 = scalar_lea.vmem %s4, 16
  %s266 = scalar_lea.vmem %s1, 16
  %v267 = vld [vmem:[%s266] sm:$0xff]
  %268 = vst [vmem:[%s265] sm:$0xff] %v267
  %s269 = scalar_lea.vmem %s4, 24
  %s270 = scalar_lea.vmem %s1, 24
  %v271 = vld [vmem:[%s270] sm:$0xff]
  %272 = vst [vmem:[%s269] sm:$0xff] %v271
  %s273 = scalar_lea.vmem %s4, 32
  %s274 = scalar_lea.vmem %s1, 32
  %v275 = vld [vmem:[%s274] sm:$0xff]
  %276 = vst [vmem:[%s273] sm:$0xff] %v275
  %s277 = scalar_lea.vmem %s4, 40
  %s278 = scalar_lea.vmem %s1, 40
  %v279 = vld [vmem:[%s278] sm:$0xff]
  %280 = vst [vmem:[%s277] sm:$0xff] %v279
  %s281 = scalar_lea.vmem %s4, 48
  %s282 = scalar_lea.vmem %s1, 48
  %v283 = vld [vmem:[%s282] sm:$0xff]
  %284 = vst [vmem:[%s281] sm:$0xff] %v283
  %s285 = scalar_lea.vmem %s4, 56
  %s286 = scalar_lea.vmem %s1, 56
  %v287 = vld [vmem:[%s286] sm:$0xff]
  %288 = vst [vmem:[%s285] sm:$0xff] %v287
  %s289 = scalar_lea.vmem %s4, 64
  %s290 = scalar_lea.vmem %s1, 64
  %v291 = vld [vmem:[%s290] sm:$0xff]
  %292 = vst [vmem:[%s289] sm:$0xff] %v291
  %s293 = scalar_lea.vmem %s4, 72
  %s294 = scalar_lea.vmem %s1, 72
  %v295 = vld [vmem:[%s294] sm:$0xff]
  %296 = vst [vmem:[%s293] sm:$0xff] %v295
  %s297 = scalar_lea.vmem %s4, 80
  %s298 = scalar_lea.vmem %s1, 80
  %v299 = vld [vmem:[%s298] sm:$0xff]
  %300 = vst [vmem:[%s297] sm:$0xff] %v299
  %s301 = scalar_lea.vmem %s4, 88
  %s302 = scalar_lea.vmem %s1, 88
  %v303 = vld [vmem:[%s302] sm:$0xff]
  %304 = vst [vmem:[%s301] sm:$0xff] %v303
  %s305 = scalar_lea.vmem %s4, 96
  %s306 = scalar_lea.vmem %s1, 96
  %v307 = vld [vmem:[%s306] sm:$0xff]
  %308 = vst [vmem:[%s305] sm:$0xff] %v307
  %s309 = scalar_lea.vmem %s4, 104
  %s310 = scalar_lea.vmem %s1, 104
  %v311 = vld [vmem:[%s310] sm:$0xff]
  %312 = vst [vmem:[%s309] sm:$0xff] %v311
  %s313 = scalar_lea.vmem %s4, 112
  %s314 = scalar_lea.vmem %s1, 112
  %v315 = vld [vmem:[%s314] sm:$0xff]
  %316 = vst [vmem:[%s313] sm:$0xff] %v315
  %s317 = scalar_lea.vmem %s4, 120
  %s318 = scalar_lea.vmem %s1, 120
  %v319 = vld [vmem:[%s318] sm:$0xff]
  %320 = vst [vmem:[%s317] sm:$0xff] %v319
  %s321 = scalar_lea.vmem %s4, 128
  %s322 = scalar_lea.vmem %s1, 128
  %v323 = vld [vmem:[%s322] sm:$0xff]
  %324 = vst [vmem:[%s321] sm:$0xff] %v323
  %s325 = scalar_lea.vmem %s4, 136
  %s326 = scalar_lea.vmem %s1, 136
  %v327 = vld [vmem:[%s326] sm:$0xff]
  %328 = vst [vmem:[%s325] sm:$0xff] %v327
  %s329 = scalar_lea.vmem %s4, 144
  %s330 = scalar_lea.vmem %s1, 144
  %v331 = vld [vmem:[%s330] sm:$0xff]
  %332 = vst [vmem:[%s329] sm:$0xff] %v331
  %s333 = scalar_lea.vmem %s4, 152
  %s334 = scalar_lea.vmem %s1, 152
  %v335 = vld [vmem:[%s334] sm:$0xff]
  %336 = vst [vmem:[%s333] sm:$0xff] %v335
  %s337 = scalar_lea.vmem %s4, 160
  %s338 = scalar_lea.vmem %s1, 160
  %v339 = vld [vmem:[%s338] sm:$0xff]
  %340 = vst [vmem:[%s337] sm:$0xff] %v339
  %s341 = scalar_lea.vmem %s4, 168
  %s342 = scalar_lea.vmem %s1, 168
  %v343 = vld [vmem:[%s342] sm:$0xff]
  %344 = vst [vmem:[%s341] sm:$0xff] %v343
  %s345 = scalar_lea.vmem %s4, 176
  %s346 = scalar_lea.vmem %s1, 176
  %v347 = vld [vmem:[%s346] sm:$0xff]
  %348 = vst [vmem:[%s345] sm:$0xff] %v347
  %s349 = scalar_lea.vmem %s4, 184
  %s350 = scalar_lea.vmem %s1, 184
  %v351 = vld [vmem:[%s350] sm:$0xff]
  %352 = vst [vmem:[%s349] sm:$0xff] %v351
  %s353 = scalar_lea.vmem %s4, 192
  %s354 = scalar_lea.vmem %s1, 192
  %v355 = vld [vmem:[%s354] sm:$0xff]
  %356 = vst [vmem:[%s353] sm:$0xff] %v355
  %s357 = scalar_lea.vmem %s4, 200
  %s358 = scalar_lea.vmem %s1, 200
  %v359 = vld [vmem:[%s358] sm:$0xff]
  %360 = vst [vmem:[%s357] sm:$0xff] %v359
  %s361 = scalar_lea.vmem %s4, 208
  %s362 = scalar_lea.vmem %s1, 208
  %v363 = vld [vmem:[%s362] sm:$0xff]
  %364 = vst [vmem:[%s361] sm:$0xff] %v363
  %s365 = scalar_lea.vmem %s4, 216
  %s366 = scalar_lea.vmem %s1, 216
  %v367 = vld [vmem:[%s366] sm:$0xff]
  %368 = vst [vmem:[%s365] sm:$0xff] %v367
  %s369 = scalar_lea.vmem %s4, 224
  %s370 = scalar_lea.vmem %s1, 224
  %v371 = vld [vmem:[%s370] sm:$0xff]
  %372 = vst [vmem:[%s369] sm:$0xff] %v371
  %s373 = scalar_lea.vmem %s4, 232
  %s374 = scalar_lea.vmem %s1, 232
  %v375 = vld [vmem:[%s374] sm:$0xff]
  %376 = vst [vmem:[%s373] sm:$0xff] %v375
  %s377 = scalar_lea.vmem %s4, 240
  %s378 = scalar_lea.vmem %s1, 240
  %v379 = vld [vmem:[%s378] sm:$0xff]
  %380 = vst [vmem:[%s377] sm:$0xff] %v379
  %s381 = scalar_lea.vmem %s4, 248
  %s382 = scalar_lea.vmem %s1, 248
  %v383 = vld [vmem:[%s382] sm:$0xff]
  %384 = vst [vmem:[%s381] sm:$0xff] %v383
  %s385 = scalar_lea.vmem %s4, 256
  %s386 = scalar_lea.vmem %s1, 256
  %v387 = vld [vmem:[%s386] sm:$0xff]
  %388 = vst [vmem:[%s385] sm:$0xff] %v387
  %s389 = scalar_lea.vmem %s4, 264
  %s390 = scalar_lea.vmem %s1, 264
  %v391 = vld [vmem:[%s390] sm:$0xff]
  %392 = vst [vmem:[%s389] sm:$0xff] %v391
  %s393 = scalar_lea.vmem %s4, 272
  %s394 = scalar_lea.vmem %s1, 272
  %v395 = vld [vmem:[%s394] sm:$0xff]
  %396 = vst [vmem:[%s393] sm:$0xff] %v395
  %s397 = scalar_lea.vmem %s4, 280
  %s398 = scalar_lea.vmem %s1, 280
  %v399 = vld [vmem:[%s398] sm:$0xff]
  %400 = vst [vmem:[%s397] sm:$0xff] %v399
  %s401 = scalar_lea.vmem %s4, 288
  %s402 = scalar_lea.vmem %s1, 288
  %v403 = vld [vmem:[%s402] sm:$0xff]
  %404 = vst [vmem:[%s401] sm:$0xff] %v403
  %s405 = scalar_lea.vmem %s4, 296
  %s406 = scalar_lea.vmem %s1, 296
  %v407 = vld [vmem:[%s406] sm:$0xff]
  %408 = vst [vmem:[%s405] sm:$0xff] %v407
  %s409 = scalar_lea.vmem %s4, 304
  %s410 = scalar_lea.vmem %s1, 304
  %v411 = vld [vmem:[%s410] sm:$0xff]
  %412 = vst [vmem:[%s409] sm:$0xff] %v411
  %s413 = scalar_lea.vmem %s4, 312
  %s414 = scalar_lea.vmem %s1, 312
  %v415 = vld [vmem:[%s414] sm:$0xff]
  %416 = vst [vmem:[%s413] sm:$0xff] %v415
  %s417 = scalar_lea.vmem %s4, 320
  %s418 = scalar_lea.vmem %s1, 320
  %v419 = vld [vmem:[%s418] sm:$0xff]
  %420 = vst [vmem:[%s417] sm:$0xff] %v419
  %s421 = scalar_lea.vmem %s4, 328
  %s422 = scalar_lea.vmem %s1, 328
  %v423 = vld [vmem:[%s422] sm:$0xff]
  %424 = vst [vmem:[%s421] sm:$0xff] %v423
  %s425 = scalar_lea.vmem %s4, 336
  %s426 = scalar_lea.vmem %s1, 336
  %v427 = vld [vmem:[%s426] sm:$0xff]
  %428 = vst [vmem:[%s425] sm:$0xff] %v427
  %s429 = scalar_lea.vmem %s4, 344
  %s430 = scalar_lea.vmem %s1, 344
  %v431 = vld [vmem:[%s430] sm:$0xff]
  %432 = vst [vmem:[%s429] sm:$0xff] %v431
  %s433 = scalar_lea.vmem %s4, 352
  %s434 = scalar_lea.vmem %s1, 352
  %v435 = vld [vmem:[%s434] sm:$0xff]
  %436 = vst [vmem:[%s433] sm:$0xff] %v435
  %s437 = scalar_lea.vmem %s4, 360
  %s438 = scalar_lea.vmem %s1, 360
  %v439 = vld [vmem:[%s438] sm:$0xff]
  %440 = vst [vmem:[%s437] sm:$0xff] %v439
  %s441 = scalar_lea.vmem %s4, 368
  %s442 = scalar_lea.vmem %s1, 368
  %v443 = vld [vmem:[%s442] sm:$0xff]
  %444 = vst [vmem:[%s441] sm:$0xff] %v443
  %s445 = scalar_lea.vmem %s4, 376
  %s446 = scalar_lea.vmem %s1, 376
  %v447 = vld [vmem:[%s446] sm:$0xff]
  %448 = vst [vmem:[%s445] sm:$0xff] %v447
  %s449 = scalar_lea.vmem %s4, 384
  %s450 = scalar_lea.vmem %s1, 384
  %v451 = vld [vmem:[%s450] sm:$0xff]
  %452 = vst [vmem:[%s449] sm:$0xff] %v451
  %s453 = scalar_lea.vmem %s4, 392
  %s454 = scalar_lea.vmem %s1, 392
  %v455 = vld [vmem:[%s454] sm:$0xff]
  %456 = vst [vmem:[%s453] sm:$0xff] %v455
  %s457 = scalar_lea.vmem %s4, 400
  %s458 = scalar_lea.vmem %s1, 400
  %v459 = vld [vmem:[%s458] sm:$0xff]
  %460 = vst [vmem:[%s457] sm:$0xff] %v459
  %s461 = scalar_lea.vmem %s4, 408
  %s462 = scalar_lea.vmem %s1, 408
  %v463 = vld [vmem:[%s462] sm:$0xff]
  %464 = vst [vmem:[%s461] sm:$0xff] %v463
  %s465 = scalar_lea.vmem %s4, 416
  %s466 = scalar_lea.vmem %s1, 416
  %v467 = vld [vmem:[%s466] sm:$0xff]
  %468 = vst [vmem:[%s465] sm:$0xff] %v467
  %s469 = scalar_lea.vmem %s4, 424
  %s470 = scalar_lea.vmem %s1, 424
  %v471 = vld [vmem:[%s470] sm:$0xff]
  %472 = vst [vmem:[%s469] sm:$0xff] %v471
  %s473 = scalar_lea.vmem %s4, 432
  %s474 = scalar_lea.vmem %s1, 432
  %v475 = vld [vmem:[%s474] sm:$0xff]
  %476 = vst [vmem:[%s473] sm:$0xff] %v475
  %s477 = scalar_lea.vmem %s4, 440
  %s478 = scalar_lea.vmem %s1, 440
  %v479 = vld [vmem:[%s478] sm:$0xff]
  %480 = vst [vmem:[%s477] sm:$0xff] %v479
  %s481 = scalar_lea.vmem %s4, 448
  %s482 = scalar_lea.vmem %s1, 448
  %v483 = vld [vmem:[%s482] sm:$0xff]
  %484 = vst [vmem:[%s481] sm:$0xff] %v483
  %s485 = scalar_lea.vmem %s4, 456
  %s486 = scalar_lea.vmem %s1, 456
  %v487 = vld [vmem:[%s486] sm:$0xff]
  %488 = vst [vmem:[%s485] sm:$0xff] %v487
  %s489 = scalar_lea.vmem %s4, 464
  %s490 = scalar_lea.vmem %s1, 464
  %v491 = vld [vmem:[%s490] sm:$0xff]
  %492 = vst [vmem:[%s489] sm:$0xff] %v491
  %s493 = scalar_lea.vmem %s4, 472
  %s494 = scalar_lea.vmem %s1, 472
  %v495 = vld [vmem:[%s494] sm:$0xff]
  %496 = vst [vmem:[%s493] sm:$0xff] %v495
  %s497 = scalar_lea.vmem %s4, 480
  %s498 = scalar_lea.vmem %s1, 480
  %v499 = vld [vmem:[%s498] sm:$0xff]
  %500 = vst [vmem:[%s497] sm:$0xff] %v499
  %s501 = scalar_lea.vmem %s4, 488
  %s502 = scalar_lea.vmem %s1, 488
  %v503 = vld [vmem:[%s502] sm:$0xff]
  %504 = vst [vmem:[%s501] sm:$0xff] %v503
  %s505 = scalar_lea.vmem %s4, 496
  %s506 = scalar_lea.vmem %s1, 496
  %v507 = vld [vmem:[%s506] sm:$0xff]
  %508 = vst [vmem:[%s505] sm:$0xff] %v507
  %s509 = scalar_lea.vmem %s4, 504
  %s510 = scalar_lea.vmem %s1, 504
  %v511 = vld [vmem:[%s510] sm:$0xff]
  %512 = vst [vmem:[%s509] sm:$0xff] %v511

// kernel: model_forward.1
$region0: #{model_forward.1}
  #allocation0 [shape = 'u32[]', space=smem, size = 0x4, offset = 0x4, fixed_abs, tag = 'smem constant byte address 0x4 - core index']
  #allocation1 [shape = 'u32[144,128]{1,0:T(1,128)}', space=vmem, size = 0x12000, scoped, tag = 'internal scratch']
  %s0 = inlined_call_operand.vmem [shape: f32[2,2,256], index: 0, kind: input, shape index: {}]
  %s1 = inlined_call_operand.vmem [shape: f32[2,2,256], index: 1, kind: input, shape index: {}]
  %s2 = inlined_call_operand.vmem [shape: f32[4,2], index: 2, kind: input, shape index: {}]
  %s3 = inlined_call_operand.vmem [shape: f32[4,8,4], index: 3, kind: input, shape index: {}]
  %s4 = inlined_call_operand.vmem [shape: f32[4,16,8], index: 4, kind: input, shape index: {}]
  %s5 = inlined_call_operand.vmem [shape: f32[16,16], index: 5, kind: input, shape index: {}]
  %s6 = inlined_call_operand.vmem [shape: f32[32,16], index: 6, kind: input, shape index: {}]
  %s7 = inlined_call_operand.vmem [shape: f32[32,16], index: 7, kind: input, shape index: {}]
  %s8 = inlined_call_operand.vmem [shape: f32[16,8], index: 8, kind: input, shape index: {}]
  %s9 = inlined_call_operand.vmem [shape: f32[16,8], index: 9, kind: input, shape index: {}]
  %s10 = inlined_call_operand.vmem [shape: f32[8,4], index: 10, kind: input, shape index: {}]
  %s11 = inlined_call_operand.vmem [shape: f32[4,2], index: 11, kind: input, shape index: {}]
  %s12 = inlined_call_operand.vmem [shape: f32[4,8,4], index: 12, kind: input, shape index: {}]
  %s13 = inlined_call_operand.vmem [shape: f32[4,16,8], index: 13, kind: input, shape index: {}]
  %s14 = inlined_call_operand.vmem [shape: f32[16,16], index: 14, kind: input, shape index: {}]
  %s15 = inlined_call_operand.vmem [shape: f32[32,16], index: 15, kind: input, shape index: {}]
  %s16 = inlined_call_operand.vmem [shape: f32[32,16], index: 16, kind: input, shape index: {}]
  %s17 = inlined_call_operand.vmem [shape: f32[16,8], index: 17, kind: input, shape index: {}]
  %s18 = inlined_call_operand.vmem [shape: f32[16,8], index: 18, kind: input, shape index: {}]
  %s19 = inlined_call_operand.vmem [shape: f32[8,4], index: 19, kind: input, shape index: {}]
  %s20 = inlined_call_operand.vmem [shape: f32[2,8,256], index: 20, kind: output, shape index: {0}]
  %s21 = inlined_call_operand.vmem [shape: f32[2,8,256], index: 21, kind: output, shape index: {1}]
  %22 = xla_tuple %s20, %s21
  %s23 = sld [smem:[#allocation0]]
  $region121: #{model_forward.1} parent=0
    _
  %s25 = ssub.s32 1, %s23
  %s26 = scalar_select 0, %s25, %s23
  loop: start=0, step=1, limit=4
  $region2: #{model_forward.1} parent=0 // loop_pre_header
    _
  $region3: #{model_forward.1} parent=0 // loop_header
    %s28 = sphi 0, %s32
    %p29 = scmp.ge.s32.totalorder %s28, 4
    %s38 = sphi 0, %s40
    %s41 = sphi 0, %s38
    %s42 = sphi 0, %s41
    %s58 = sphi 0, %s42
    %s64 = sphi 0, %s66
    %s67 = sphi 0, %s64
    %s68 = sphi 0, %s67
    %s84 = sphi 0, %s68
    %s88 = sphi 0, %s88
    %s90 = sphi 0, %s88
    %s91 = sphi 0, %s90
    %s105 = sphi 0, %s91
    %s109 = sphi 0, %s109
    %s111 = sphi 0, %s109
    %s112 = sphi 0, %s111
    %s126 = sphi 0, %s112
    %s130 = sphi 0, %s130
    %s132 = sphi 0, %s130
    %s133 = sphi 0, %s132
    %s147 = sphi 0, %s133
    %s151 = sphi 0, %s151
    %s153 = sphi 0, %s151
    %s154 = sphi 0, %s153
    %s168 = sphi 0, %s154
    %s172 = sphi 0, %s172
    %s174 = sphi 0, %s172
    %s175 = sphi 0, %s174
    %s189 = sphi 0, %s175
    %s193 = sphi 0, %s193
    %s195 = sphi 0, %s193
    %s196 = sphi 0, %s195
    %s210 = sphi 0, %s196
    %s214 = sphi 0, %s214
    %s216 = sphi 0, %s214
    %s217 = sphi 0, %s216
    %s231 = sphi 0, %s217
    %s235 = sphi 0, %s235
    %s237 = sphi 0, %s235
    %s238 = sphi 0, %s237
    %s252 = sphi 0, %s238
    %s256 = sphi 0, %s256
    %s258 = sphi 0, %s256
    %s259 = sphi 0, %s258
    %s273 = sphi 0, %s259
    %s277 = sphi 0, %s277
    %s279 = sphi 0, %s277
    %s280 = sphi 0, %s279
    %s294 = sphi 0, %s280
    %s298 = sphi 0, %s298
    %s300 = sphi 0, %s298
    %s301 = sphi 0, %s300
    %s315 = sphi 0, %s301
    %s319 = sphi 0, %s319
    %s321 = sphi 0, %s319
    %s322 = sphi 0, %s321
    %s336 = sphi 0, %s322
    %s340 = sphi 0, %s340
    %s342 = sphi 0, %s340
    %s343 = sphi 0, %s342
    %s357 = sphi 0, %s343
    %s361 = sphi 0, %s361
    %s363 = sphi 0, %s361
    %s364 = sphi 0, %s363
    %s378 = sphi 0, %s364
    %s382 = sphi 0, %s382
    %s384 = sphi 0, %s382
    %s385 = sphi 0, %s384
    %s399 = sphi 0, %s385
    %s403 = sphi 0, %s403
    %s405 = sphi 0, %s403
    %s406 = sphi 0, %s405
    %s420 = sphi 0, %s406
    %s424 = sphi 0, %s424
    %s426 = sphi 0, %s424
    %s427 = sphi 0, %s426
    %s441 = sphi 0, %s427
    %s445 = sphi 0, %s445
    %s447 = sphi 0, %s445
    %s448 = sphi 0, %s447
    %s462 = sphi 0, %s448
    %s468 = sphi 0, %s470
    %s471 = sphi 0, %s468
    %s472 = sphi 0, %s471
    %s488 = sphi 0, %s472
    %s494 = sphi 0, %s496
    %s497 = sphi 0, %s494
    %s498 = sphi 0, %s497
    %s514 = sphi 0, %s498
  $region4: #{model_forward.1} parent=0 // loop_header_branch
    %31 = sbr.rel (%p29) target = $region8
  $region5: #{model_forward.1} parent=0 // loop_body
    %s33 = ssub.s32 %s28, 1
    %s34 = ssub.s32 %s28, 2
    %s35 = sadd.s32 %s28, 1
    %s36 = ssub.s32 %s28, %s35
    %p37 = scmp.eq.s32.totalorder %s36, 0
    %s39 = sadd.s32 %s38, 1
    %s40 = scalar_select %p37, %s38, %s39
    %p43 = pneg %p37
    %p44 = scmp.eq.s32.totalorder %s28, 1
    %p45 = por %p43, %p44
    %p46 = scmp.ne.s32.totalorder %s38, %s41
    %p47 = scmp.eq.s32.totalorder %s28, 0
    %p48 = por %p46, %p47
    %p49 = scmp.ne.s32.totalorder %s38, %s41
    %p50 = scmp.eq.s32.totalorder %s33, 1
    %p51 = por %p49, %p50
    %p52 = scmp.ne.s32.totalorder %s41, %s42
    %p53 = scmp.eq.s32.totalorder %s33, 0
    %p54 = por %p52, %p53
    %p55 = scmp.ne.s32.totalorder %s41, %s42
    %p56 = scmp.eq.s32.totalorder %s34, 1
    %p57 = por %p55, %p56
    %p59 = scmp.ne.s32.totalorder %s42, %s58
    %p60 = scmp.eq.s32.totalorder %s34, 0
    %p61 = por %p59, %p60
    %s62 = ssub.s32 %s28, %s35
    %p63 = scmp.eq.s32.totalorder %s62, 0
    %s65 = sadd.s32 %s64, 1
    %s66 = scalar_select %p63, %s64, %s65
    %p69 = pneg %p63
    %p70 = scmp.eq.s32.totalorder %s28, 1
    %p71 = por %p69, %p70
    %p72 = scmp.ne.s32.totalorder %s64, %s67
    %p73 = scmp.eq.s32.totalorder %s28, 0
    %p74 = por %p72, %p73
    %p75 = scmp.ne.s32.totalorder %s64, %s67
    %p76 = scmp.eq.s32.totalorder %s33, 1
    %p77 = por %p75, %p76
    %p78 = scmp.ne.s32.totalorder %s67, %s68
    %p79 = scmp.eq.s32.totalorder %s33, 0
    %p80 = por %p78, %p79
    %p81 = scmp.ne.s32.totalorder %s67, %s68
    %p82 = scmp.eq.s32.totalorder %s34, 1
    %p83 = por %p81, %p82
    %p85 = scmp.ne.s32.totalorder %s68, %s84
    %p86 = scmp.eq.s32.totalorder %s34, 0
    %p87 = por %p85, %p86
    %s89 = sadd.s32 %s88, 1
    %p92 = scmp.eq.s32.totalorder %s28, 1
    %p93 = scmp.ne.s32.totalorder %s88, %s90
    %p94 = scmp.eq.s32.totalorder %s28, 0
    %p95 = por %p93, %p94
    %p96 = scmp.ne.s32.totalorder %s88, %s90
    %p97 = scmp.eq.s32.totalorder %s33, 1
    %p98 = por %p96, %p97
    %p99 = scmp.ne.s32.totalorder %s90, %s91
    %p100 = scmp.eq.s32.totalorder %s33, 0
    %p101 = por %p99, %p100
    %p102 = scmp.ne.s32.totalorder %s90, %s91
    %p103 = scmp.eq.s32.totalorder %s34, 1
    %p104 = por %p102, %p103
    %p106 = scmp.ne.s32.totalorder %s91, %s105
    %p107 = scmp.eq.s32.totalorder %s34, 0
    %p108 = por %p106, %p107
    %s110 = sadd.s32 %s109, 1
    %p113 = scmp.eq.s32.totalorder %s28, 1
    %p114 = scmp.ne.s32.totalorder %s109, %s111
    %p115 = scmp.eq.s32.totalorder %s28, 0
    %p116 = por %p114, %p115
    %p117 = scmp.ne.s32.totalorder %s109, %s111
    %p118 = scmp.eq.s32.totalorder %s33, 1
    %p119 = por %p117, %p118
    %p120 = scmp.ne.s32.totalorder %s111, %s112
    %p121 = scmp.eq.s32.totalorder %s33, 0
    %p122 = por %p120, %p121
    %p123 = scmp.ne.s32.totalorder %s111, %s112
    %p124 = scmp.eq.s32.totalorder %s34, 1
    %p125 = por %p123, %p124
    %p127 = scmp.ne.s32.totalorder %s112, %s126
    %p128 = scmp.eq.s32.totalorder %s34, 0
    %p129 = por %p127, %p128
    %s131 = sadd.s32 %s130, 1
    %p134 = scmp.eq.s32.totalorder %s28, 1
    %p135 = scmp.ne.s32.totalorder %s130, %s132
    %p136 = scmp.eq.s32.totalorder %s28, 0
    %p137 = por %p135, %p136
    %p138 = scmp.ne.s32.totalorder %s130, %s132
    %p139 = scmp.eq.s32.totalorder %s33, 1
    %p140 = por %p138, %p139
    %p141 = scmp.ne.s32.totalorder %s132, %s133
    %p142 = scmp.eq.s32.totalorder %s33, 0
    %p143 = por %p141, %p142
    %p144 = scmp.ne.s32.totalorder %s132, %s133
    %p145 = scmp.eq.s32.totalorder %s34, 1
    %p146 = por %p144, %p145
    %p148 = scmp.ne.s32.totalorder %s133, %s147
    %p149 = scmp.eq.s32.totalorder %s34, 0
    %p150 = por %p148, %p149
    %s152 = sadd.s32 %s151, 1
    %p155 = scmp.eq.s32.totalorder %s28, 1
    %p156 = scmp.ne.s32.totalorder %s151, %s153
    %p157 = scmp.eq.s32.totalorder %s28, 0
    %p158 = por %p156, %p157
    %p159 = scmp.ne.s32.totalorder %s151, %s153
    %p160 = scmp.eq.s32.totalorder %s33, 1
    %p161 = por %p159, %p160
    %p162 = scmp.ne.s32.totalorder %s153, %s154
    %p163 = scmp.eq.s32.totalorder %s33, 0
    %p164 = por %p162, %p163
    %p165 = scmp.ne.s32.totalorder %s153, %s154
    %p166 = scmp.eq.s32.totalorder %s34, 1
    %p167 = por %p165, %p166
    %p169 = scmp.ne.s32.totalorder %s154, %s168
    %p170 = scmp.eq.s32.totalorder %s34, 0
    %p171 = por %p169, %p170
    %s173 = sadd.s32 %s172, 1
    %p176 = scmp.eq.s32.totalorder %s28, 1
    %p177 = scmp.ne.s32.totalorder %s172, %s174
    %p178 = scmp.eq.s32.totalorder %s28, 0
    %p179 = por %p177, %p178
    %p180 = scmp.ne.s32.totalorder %s172, %s174
    %p181 = scmp.eq.s32.totalorder %s33, 1
    %p182 = por %p180, %p181
    %p183 = scmp.ne.s32.totalorder %s174, %s175
    %p184 = scmp.eq.s32.totalorder %s33, 0
    %p185 = por %p183, %p184
    %p186 = scmp.ne.s32.totalorder %s174, %s175
    %p187 = scmp.eq.s32.totalorder %s34, 1
    %p188 = por %p186, %p187
    %p190 = scmp.ne.s32.totalorder %s175, %s189
    %p191 = scmp.eq.s32.totalorder %s34, 0
    %p192 = por %p190, %p191
    %s194 = sadd.s32 %s193, 1
    %p197 = scmp.eq.s32.totalorder %s28, 1
    %p198 = scmp.ne.s32.totalorder %s193, %s195
    %p199 = scmp.eq.s32.totalorder %s28, 0
    %p200 = por %p198, %p199
    %p201 = scmp.ne.s32.totalorder %s193, %s195
    %p202 = scmp.eq.s32.totalorder %s33, 1
    %p203 = por %p201, %p202
    %p204 = scmp.ne.s32.totalorder %s195, %s196
    %p205 = scmp.eq.s32.totalorder %s33, 0
    %p206 = por %p204, %p205
    %p207 = scmp.ne.s32.totalorder %s195, %s196
    %p208 = scmp.eq.s32.totalorder %s34, 1
    %p209 = por %p207, %p208
    %p211 = scmp.ne.s32.totalorder %s196, %s210
    %p212 = scmp.eq.s32.totalorder %s34, 0
    %p213 = por %p211, %p212
    %s215 = sadd.s32 %s214, 1
    %p218 = scmp.eq.s32.totalorder %s28, 1
    %p219 = scmp.ne.s32.totalorder %s214, %s216
    %p220 = scmp.eq.s32.totalorder %s28, 0
    %p221 = por %p219, %p220
    %p222 = scmp.ne.s32.totalorder %s214, %s216
    %p223 = scmp.eq.s32.totalorder %s33, 1
    %p224 = por %p222, %p223
    %p225 = scmp.ne.s32.totalorder %s216, %s217
    %p226 = scmp.eq.s32.totalorder %s33, 0
    %p227 = por %p225, %p226
    %p228 = scmp.ne.s32.totalorder %s216, %s217
    %p229 = scmp.eq.s32.totalorder %s34, 1
    %p230 = por %p228, %p229
    %p232 = scmp.ne.s32.totalorder %s217, %s231
    %p233 = scmp.eq.s32.totalorder %s34, 0
    %p234 = por %p232, %p233
    %s236 = sadd.s32 %s235, 1
    %p239 = scmp.eq.s32.totalorder %s28, 1
    %p240 = scmp.ne.s32.totalorder %s235, %s237
    %p241 = scmp.eq.s32.totalorder %s28, 0
    %p242 = por %p240, %p241
    %p243 = scmp.ne.s32.totalorder %s235, %s237
    %p244 = scmp.eq.s32.totalorder %s33, 1
    %p245 = por %p243, %p244
    %p246 = scmp.ne.s32.totalorder %s237, %s238
    %p247 = scmp.eq.s32.totalorder %s33, 0
    %p248 = por %p246, %p247
    %p249 = scmp.ne.s32.totalorder %s237, %s238
    %p250 = scmp.eq.s32.totalorder %s34, 1
    %p251 = por %p249, %p250
    %p253 = scmp.ne.s32.totalorder %s238, %s252
    %p254 = scmp.eq.s32.totalorder %s34, 0
    %p255 = por %p253, %p254
    %s257 = sadd.s32 %s256, 1
    %p260 = scmp.eq.s32.totalorder %s28, 1
    %p261 = scmp.ne.s32.totalorder %s256, %s258
    %p262 = scmp.eq.s32.totalorder %s28, 0
    %p263 = por %p261, %p262
    %p264 = scmp.ne.s32.totalorder %s256, %s258
    %p265 = scmp.eq.s32.totalorder %s33, 1
    %p266 = por %p264, %p265
    %p267 = scmp.ne.s32.totalorder %s258, %s259
    %p268 = scmp.eq.s32.totalorder %s33, 0
    %p269 = por %p267, %p268
    %p270 = scmp.ne.s32.totalorder %s258, %s259
    %p271 = scmp.eq.s32.totalorder %s34, 1
    %p272 = por %p270, %p271
    %p274 = scmp.ne.s32.totalorder %s259, %s273
    %p275 = scmp.eq.s32.totalorder %s34, 0
    %p276 = por %p274, %p275
    %s278 = sadd.s32 %s277, 1
    %p281 = scmp.eq.s32.totalorder %s28, 1
    %p282 = scmp.ne.s32.totalorder %s277, %s279
    %p283 = scmp.eq.s32.totalorder %s28, 0
    %p284 = por %p282, %p283
    %p285 = scmp.ne.s32.totalorder %s277, %s279
    %p286 = scmp.eq.s32.totalorder %s33, 1
    %p287 = por %p285, %p286
    %p288 = scmp.ne.s32.totalorder %s279, %s280
    %p289 = scmp.eq.s32.totalorder %s33, 0
    %p290 = por %p288, %p289
    %p291 = scmp.ne.s32.totalorder %s279, %s280
    %p292 = scmp.eq.s32.totalorder %s34, 1
    %p293 = por %p291, %p292
    %p295 = scmp.ne.s32.totalorder %s280, %s294
    %p296 = scmp.eq.s32.totalorder %s34, 0
    %p297 = por %p295, %p296
    %s299 = sadd.s32 %s298, 1
    %p302 = scmp.eq.s32.totalorder %s28, 1
    %p303 = scmp.ne.s32.totalorder %s298, %s300
    %p304 = scmp.eq.s32.totalorder %s28, 0
    %p305 = por %p303, %p304
    %p306 = scmp.ne.s32.totalorder %s298, %s300
    %p307 = scmp.eq.s32.totalorder %s33, 1
    %p308 = por %p306, %p307
    %p309 = scmp.ne.s32.totalorder %s300, %s301
    %p310 = scmp.eq.s32.totalorder %s33, 0
    %p311 = por %p309, %p310
    %p312 = scmp.ne.s32.totalorder %s300, %s301
    %p313 = scmp.eq.s32.totalorder %s34, 1
    %p314 = por %p312, %p313
    %p316 = scmp.ne.s32.totalorder %s301, %s315
    %p317 = scmp.eq.s32.totalorder %s34, 0
    %p318 = por %p316, %p317
    %s320 = sadd.s32 %s319, 1
    %p323 = scmp.eq.s32.totalorder %s28, 1
    %p324 = scmp.ne.s32.totalorder %s319, %s321
    %p325 = scmp.eq.s32.totalorder %s28, 0
    %p326 = por %p324, %p325
    %p327 = scmp.ne.s32.totalorder %s319, %s321
    %p328 = scmp.eq.s32.totalorder %s33, 1
    %p329 = por %p327, %p328
    %p330 = scmp.ne.s32.totalorder %s321, %s322
    %p331 = scmp.eq.s32.totalorder %s33, 0
    %p332 = por %p330, %p331
    %p333 = scmp.ne.s32.totalorder %s321, %s322
    %p334 = scmp.eq.s32.totalorder %s34, 1
    %p335 = por %p333, %p334
    %p337 = scmp.ne.s32.totalorder %s322, %s336
    %p338 = scmp.eq.s32.totalorder %s34, 0
    %p339 = por %p337, %p338
    %s341 = sadd.s32 %s340, 1
    %p344 = scmp.eq.s32.totalorder %s28, 1
    %p345 = scmp.ne.s32.totalorder %s340, %s342
    %p346 = scmp.eq.s32.totalorder %s28, 0
    %p347 = por %p345, %p346
    %p348 = scmp.ne.s32.totalorder %s340, %s342
    %p349 = scmp.eq.s32.totalorder %s33, 1
    %p350 = por %p348, %p349
    %p351 = scmp.ne.s32.totalorder %s342, %s343
    %p352 = scmp.eq.s32.totalorder %s33, 0
    %p353 = por %p351, %p352
    %p354 = scmp.ne.s32.totalorder %s342, %s343
    %p355 = scmp.eq.s32.totalorder %s34, 1
    %p356 = por %p354, %p355
    %p358 = scmp.ne.s32.totalorder %s343, %s357
    %p359 = scmp.eq.s32.totalorder %s34, 0
    %p360 = por %p358, %p359
    %s362 = sadd.s32 %s361, 1
    %p365 = scmp.eq.s32.totalorder %s28, 1
    %p366 = scmp.ne.s32.totalorder %s361, %s363
    %p367 = scmp.eq.s32.totalorder %s28, 0
    %p368 = por %p366, %p367
    %p369 = scmp.ne.s32.totalorder %s361, %s363
    %p370 = scmp.eq.s32.totalorder %s33, 1
    %p371 = por %p369, %p370
    %p372 = scmp.ne.s32.totalorder %s363, %s364
    %p373 = scmp.eq.s32.totalorder %s33, 0
    %p374 = por %p372, %p373
    %p375 = scmp.ne.s32.totalorder %s363, %s364
    %p376 = scmp.eq.s32.totalorder %s34, 1
    %p377 = por %p375, %p376
    %p379 = scmp.ne.s32.totalorder %s364, %s378
    %p380 = scmp.eq.s32.totalorder %s34, 0
    %p381 = por %p379, %p380
    %s383 = sadd.s32 %s382, 1
    %p386 = scmp.eq.s32.totalorder %s28, 1
    %p387 = scmp.ne.s32.totalorder %s382, %s384
    %p388 = scmp.eq.s32.totalorder %s28, 0
    %p389 = por %p387, %p388
    %p390 = scmp.ne.s32.totalorder %s382, %s384
    %p391 = scmp.eq.s32.totalorder %s33, 1
    %p392 = por %p390, %p391
    %p393 = scmp.ne.s32.totalorder %s384, %s385
    %p394 = scmp.eq.s32.totalorder %s33, 0
    %p395 = por %p393, %p394
    %p396 = scmp.ne.s32.totalorder %s384, %s385
    %p397 = scmp.eq.s32.totalorder %s34, 1
    %p398 = por %p396, %p397
    %p400 = scmp.ne.s32.totalorder %s385, %s399
    %p401 = scmp.eq.s32.totalorder %s34, 0
    %p402 = por %p400, %p401
    %s404 = sadd.s32 %s403, 1
    %p407 = scmp.eq.s32.totalorder %s28, 1
    %p408 = scmp.ne.s32.totalorder %s403, %s405
    %p409 = scmp.eq.s32.totalorder %s28, 0
    %p410 = por %p408, %p409
    %p411 = scmp.ne.s32.totalorder %s403, %s405
    %p412 = scmp.eq.s32.totalorder %s33, 1
    %p413 = por %p411, %p412
    %p414 = scmp.ne.s32.totalorder %s405, %s406
    %p415 = scmp.eq.s32.totalorder %s33, 0
    %p416 = por %p414, %p415
    %p417 = scmp.ne.s32.totalorder %s405, %s406
    %p418 = scmp.eq.s32.totalorder %s34, 1
    %p419 = por %p417, %p418
    %p421 = scmp.ne.s32.totalorder %s406, %s420
    %p422 = scmp.eq.s32.totalorder %s34, 0
    %p423 = por %p421, %p422
    %s425 = sadd.s32 %s424, 1
    %p428 = scmp.eq.s32.totalorder %s28, 1
    %p429 = scmp.ne.s32.totalorder %s424, %s426
    %p430 = scmp.eq.s32.totalorder %s28, 0
    %p431 = por %p429, %p430
    %p432 = scmp.ne.s32.totalorder %s424, %s426
    %p433 = scmp.eq.s32.totalorder %s33, 1
    %p434 = por %p432, %p433
    %p435 = scmp.ne.s32.totalorder %s426, %s427
    %p436 = scmp.eq.s32.totalorder %s33, 0
    %p437 = por %p435, %p436
    %p438 = scmp.ne.s32.totalorder %s426, %s427
    %p439 = scmp.eq.s32.totalorder %s34, 1
    %p440 = por %p438, %p439
    %p442 = scmp.ne.s32.totalorder %s427, %s441
    %p443 = scmp.eq.s32.totalorder %s34, 0
    %p444 = por %p442, %p443
    %s446 = sadd.s32 %s445, 1
    %p449 = scmp.eq.s32.totalorder %s28, 1
    %p450 = scmp.ne.s32.totalorder %s445, %s447
    %p451 = scmp.eq.s32.totalorder %s28, 0
    %p452 = por %p450, %p451
    %p453 = scmp.ne.s32.totalorder %s445, %s447
    %p454 = scmp.eq.s32.totalorder %s33, 1
    %p455 = por %p453, %p454
    %p456 = scmp.ne.s32.totalorder %s447, %s448
    %p457 = scmp.eq.s32.totalorder %s33, 0
    %p458 = por %p456, %p457
    %p459 = scmp.ne.s32.totalorder %s447, %s448
    %p460 = scmp.eq.s32.totalorder %s34, 1
    %p461 = por %p459, %p460
    %p463 = scmp.ne.s32.totalorder %s448, %s462
    %p464 = scmp.eq.s32.totalorder %s34, 0
    %p465 = por %p463, %p464
    %s466 = ssub.s32 %s28, %s35
    %p467 = scmp.eq.s32.totalorder %s466, 0
    %s469 = sadd.s32 %s468, 1
    %s470 = scalar_select %p467, %s468, %s469
    %p473 = pneg %p467
    %p474 = scmp.eq.s32.totalorder %s28, 1
    %p475 = por %p473, %p474
    %p476 = scmp.ne.s32.totalorder %s468, %s471
    %p477 = scmp.eq.s32.totalorder %s28, 0
    %p478 = por %p476, %p477
    %p479 = scmp.ne.s32.totalorder %s468, %s471
    %p480 = scmp.eq.s32.totalorder %s33, 1
    %p481 = por %p479, %p480
    %p482 = scmp.ne.s32.totalorder %s471, %s472
    %p483 = scmp.eq.s32.totalorder %s33, 0
    %p484 = por %p482, %p483
    %p485 = scmp.ne.s32.totalorder %s471, %s472
    %p486 = scmp.eq.s32.totalorder %s34, 1
    %p487 = por %p485, %p486
    %p489 = scmp.ne.s32.totalorder %s472, %s488
    %p490 = scmp.eq.s32.totalorder %s34, 0
    %p491 = por %p489, %p490
    %s492 = ssub.s32 %s28, %s35
    %p493 = scmp.eq.s32.totalorder %s492, 0
    %s495 = sadd.s32 %s494, 1
    %s496 = scalar_select %p493, %s494, %s495
    %p499 = pneg %p493
    %p500 = scmp.eq.s32.totalorder %s28, 1
    %p501 = por %p499, %p500
    %p502 = scmp.ne.s32.totalorder %s494, %s497
    %p503 = scmp.eq.s32.totalorder %s28, 0
    %p504 = por %p502, %p503
    %p505 = scmp.ne.s32.totalorder %s494, %s497
    %p506 = scmp.eq.s32.totalorder %s33, 1
    %p507 = por %p505, %p506
    %p508 = scmp.ne.s32.totalorder %s497, %s498
    %p509 = scmp.eq.s32.totalorder %s33, 0
    %p510 = por %p508, %p509
    %p511 = scmp.ne.s32.totalorder %s497, %s498
    %p512 = scmp.eq.s32.totalorder %s34, 1
    %p513 = por %p511, %p512
    %p515 = scmp.ne.s32.totalorder %s498, %s514
    %p516 = scmp.eq.s32.totalorder %s34, 0
    %p517 = por %p515, %p516
    %p518 = scmp.le.s32.totalorder 1, %s28
    %p519 = scmp.lt.s32.totalorder %s28, 3
    %p520 = pnand %p518, %p519
    %p521 = pneg %p520
    // Predicated region
    $region9: #{model_forward.1} parent=5 // pred_check
      _
    $region10: #{model_forward.1} parent=5 // pred_check_branch
      %523 = sbr.rel (%p520) target = $region12
    $region11: #{model_forward.1} parent=5 // pred_region
      %s524 = ssub.s32 %s28, 1
      // Predicated region
      $region13: #{model_forward.1} parent=11 // pred_check
        %p525 = pneg %p101
      $region14: #{model_forward.1} parent=11 // pred_check_branch
        %527 = sbr.rel (%p525) target = $region16
      $region15: #{model_forward.1} parent=11 // pred_region
        _
      $region16: #{model_forward.1} parent=11 // pred_fallthru
        _
      // Predicated region
      $region17: #{model_forward.1} parent=11 // pred_check
        %p528 = pneg %p122
      $region18: #{model_forward.1} parent=11 // pred_check_branch
        %530 = sbr.rel (%p528) target = $region20
      $region19: #{model_forward.1} parent=11 // pred_region
        _
      $region20: #{model_forward.1} parent=11 // pred_fallthru
        _
      // Predicated region
      $region21: #{model_forward.1} parent=11 // pred_check
        %p531 = pneg %p143
      $region22: #{model_forward.1} parent=11 // pred_check_branch
        %533 = sbr.rel (%p531) target = $region24
      $region23: #{model_forward.1} parent=11 // pred_region
        _
      $region24: #{model_forward.1} parent=11 // pred_fallthru
        _
      // Predicated region
      $region25: #{model_forward.1} parent=11 // pred_check
        %p534 = pneg %p164
      $region26: #{model_forward.1} parent=11 // pred_check_branch
        %536 = sbr.rel (%p534) target = $region28
      $region27: #{model_forward.1} parent=11 // pred_region
        _
      $region28: #{model_forward.1} parent=11 // pred_fallthru
        _
      // Predicated region
      $region29: #{model_forward.1} parent=11 // pred_check
        %p537 = pneg %p185
      $region30: #{model_forward.1} parent=11 // pred_check_branch
        %539 = sbr.rel (%p537) target = $region32
      $region31: #{model_forward.1} parent=11 // pred_region
        _
      $region32: #{model_forward.1} parent=11 // pred_fallthru
        _
      // Predicated region
      $region33: #{model_forward.1} parent=11 // pred_check
        %p540 = pneg %p206
      $region34: #{model_forward.1} parent=11 // pred_check_branch
        %542 = sbr.rel (%p540) target = $region36
      $region35: #{model_forward.1} parent=11 // pred_region
        _
      $region36: #{model_forward.1} parent=11 // pred_fallthru
        _
      // Predicated region
      $region37: #{model_forward.1} parent=11 // pred_check
        %p543 = pneg %p227
      $region38: #{model_forward.1} parent=11 // pred_check_branch
        %545 = sbr.rel (%p543) target = $region40
      $region39: #{model_forward.1} parent=11 // pred_region
        _
      $region40: #{model_forward.1} parent=11 // pred_fallthru
        _
      // Predicated region
      $region41: #{model_forward.1} parent=11 // pred_check
        %p546 = pneg %p248
      $region42: #{model_forward.1} parent=11 // pred_check_branch
        %548 = sbr.rel (%p546) target = $region44
      $region43: #{model_forward.1} parent=11 // pred_region
        _
      $region44: #{model_forward.1} parent=11 // pred_fallthru
        _
      // Predicated region
      $region45: #{model_forward.1} parent=11 // pred_check
        %p549 = pneg %p269
      $region46: #{model_forward.1} parent=11 // pred_check_branch
        %551 = sbr.rel (%p549) target = $region48
      $region47: #{model_forward.1} parent=11 // pred_region
        _
      $region48: #{model_forward.1} parent=11 // pred_fallthru
        _
      // Predicated region
      $region49: #{model_forward.1} parent=11 // pred_check
        %p552 = pneg %p290
      $region50: #{model_forward.1} parent=11 // pred_check_branch
        %554 = sbr.rel (%p552) target = $region52
      $region51: #{model_forward.1} parent=11 // pred_region
        _
      $region52: #{model_forward.1} parent=11 // pred_fallthru
        _
      // Predicated region
      $region53: #{model_forward.1} parent=11 // pred_check
        %p555 = pneg %p311
      $region54: #{model_forward.1} parent=11 // pred_check_branch
        %557 = sbr.rel (%p555) target = $region56
      $region55: #{model_forward.1} parent=11 // pred_region
        _
      $region56: #{model_forward.1} parent=11 // pred_fallthru
        _
      // Predicated region
      $region57: #{model_forward.1} parent=11 // pred_check
        %p558 = pneg %p332
      $region58: #{model_forward.1} parent=11 // pred_check_branch
        %560 = sbr.rel (%p558) target = $region60
      $region59: #{model_forward.1} parent=11 // pred_region
        _
      $region60: #{model_forward.1} parent=11 // pred_fallthru
        _
      // Predicated region
      $region61: #{model_forward.1} parent=11 // pred_check
        %p561 = pneg %p353
      $region62: #{model_forward.1} parent=11 // pred_check_branch
        %563 = sbr.rel (%p561) target = $region64
      $region63: #{model_forward.1} parent=11 // pred_region
        _
      $region64: #{model_forward.1} parent=11 // pred_fallthru
        _
      // Predicated region
      $region65: #{model_forward.1} parent=11 // pred_check
        %p564 = pneg %p374
      $region66: #{model_forward.1} parent=11 // pred_check_branch
        %566 = sbr.rel (%p564) target = $region68
      $region67: #{model_forward.1} parent=11 // pred_region
        _
      $region68: #{model_forward.1} parent=11 // pred_fallthru
        _
      // Predicated region
      $region69: #{model_forward.1} parent=11 // pred_check
        %p567 = pneg %p395
      $region70: #{model_forward.1} parent=11 // pred_check_branch
        %569 = sbr.rel (%p567) target = $region72
      $region71: #{model_forward.1} parent=11 // pred_region
        _
      $region72: #{model_forward.1} parent=11 // pred_fallthru
        _
      // Predicated region
      $region73: #{model_forward.1} parent=11 // pred_check
        %p570 = pneg %p416
      $region74: #{model_forward.1} parent=11 // pred_check_branch
        %572 = sbr.rel (%p570) target = $region76
      $region75: #{model_forward.1} parent=11 // pred_region
        _
      $region76: #{model_forward.1} parent=11 // pred_fallthru
        _
      // Predicated region
      $region77: #{model_forward.1} parent=11 // pred_check
        %p573 = pneg %p437
      $region78: #{model_forward.1} parent=11 // pred_check_branch
        %575 = sbr.rel (%p573) target = $region80
      $region79: #{model_forward.1} parent=11 // pred_region
        _
      $region80: #{model_forward.1} parent=11 // pred_fallthru
        _
      // Predicated region
      $region81: #{model_forward.1} parent=11 // pred_check
        %p576 = pneg %p458
      $region82: #{model_forward.1} parent=11 // pred_check_branch
        %578 = sbr.rel (%p576) target = $region84
      $region83: #{model_forward.1} parent=11 // pred_region
        _
      $region84: #{model_forward.1} parent=11 // pred_fallthru
        _
    $region12: #{model_forward.1} parent=5 // pred_fallthru
      _
    %p579 = scmp.lt.s32.totalorder %s28, 2
    // Predicated region
    $region85: #{model_forward.1} parent=5 // pred_check
      %p580 = pneg %p579
    $region86: #{model_forward.1} parent=5 // pred_check_branch
      %582 = sbr.rel (%p580) target = $region88
    $region87: #{model_forward.1} parent=5 // pred_region
      // Predicated region
      $region89: #{model_forward.1} parent=87 // pred_check
        %p583 = pneg %p48
      $region90: #{model_forward.1} parent=87 // pred_check_branch
        %585 = sbr.rel (%p583) target = $region92
      $region91: #{model_forward.1} parent=87 // pred_region
        %p586 = scmp.lt.s32.totalorder %s28, 1
        %s587 = scalar_select %p586, %s28, 1
        %s588 = smul.addr %s587, 2
        %s589 = smul.addr %s588, 2
        %s590 = scalar_lea.vmem %s0, %s589
      $region92: #{model_forward.1} parent=87 // pred_fallthru
        _
      // Predicated region
      $region93: #{model_forward.1} parent=87 // pred_check
        %p591 = pneg %p74
      $region94: #{model_forward.1} parent=87 // pred_check_branch
        %593 = sbr.rel (%p591) target = $region96
      $region95: #{model_forward.1} parent=87 // pred_region
        %p594 = scmp.lt.s32.totalorder %s28, 1
        %s595 = scalar_select %p594, %s28, 1
        %s596 = smul.addr %s595, 2
        %s597 = smul.addr %s596, 2
        %s598 = scalar_lea.vmem %s1, %s597
      $region96: #{model_forward.1} parent=87 // pred_fallthru
        _
    $region88: #{model_forward.1} parent=5 // pred_fallthru
      _
    %p599 = scmp.le.s32.totalorder 1, %s28
    %p600 = scmp.lt.s32.totalorder %s28, 3
    %p601 = pnand %p599, %p600
    %p602 = pneg %p601
    // Predicated region
    $region97: #{model_forward.1} parent=5 // pred_check
      _
    $region98: #{model_forward.1} parent=5 // pred_check_branch
      %604 = sbr.rel (%p601) target = $region100
    $region99: #{model_forward.1} parent=5 // pred_region
      %s605 = ssub.s32 %s28, 1
      %p606 = scmp.lt.s32.totalorder %s33, 1
      %s607 = scalar_select %p606, %s33, 1
      %s608 = smul.addr %s607, 2
      %s609 = smul.addr %s608, 2
      %s610 = scalar_lea.vmem %s0, %s609
      %p611 = pneg %p54
      %p612 = pneg %p51
      %p613 = scmp.lt.s32.totalorder %s33, 1
      %s614 = scalar_select %p613, %s33, 1
      %s615 = smul.addr %s614, 2
      %s616 = smul.addr %s615, 2
      %s617 = scalar_lea.vmem %s1, %s616
      %p618 = pneg %p80
      %p619 = pneg %p77
      %p620 = pneg %p101
      %p621 = pneg %p98
      %p622 = pneg %p122
      %p623 = pneg %p119
      %p624 = pneg %p143
      %p625 = pneg %p140
      %p626 = pneg %p164
      %p627 = pneg %p161
      %p628 = pneg %p185
      %p629 = pneg %p182
      %p630 = pneg %p206
      %p631 = pneg %p203
      %p632 = pneg %p227
      %p633 = pneg %p224
      %p634 = pneg %p248
      %p635 = pneg %p245
      %p636 = pneg %p269
      %p637 = pneg %p266
      %p638 = pneg %p290
      %p639 = pneg %p287
      %p640 = pneg %p311
      %p641 = pneg %p308
      %p642 = pneg %p332
      %p643 = pneg %p329
      %p644 = pneg %p353
      %p645 = pneg %p350
      %p646 = pneg %p374
      %p647 = pneg %p371
      %p648 = pneg %p395
      %p649 = pneg %p392
      %p650 = pneg %p416
      %p651 = pneg %p413
      %p652 = pneg %p437
      %p653 = pneg %p434
      %p654 = pneg %p458
      %p655 = pneg %p455
      %p656 = pneg %p484
      %p657 = pneg %p481
      %p658 = scmp.lt.s32.totalorder %s33, 1
      %s659 = scalar_select %p658, %s33, 1
      %s660 = smul.addr %s659, 2
      %s661 = smul.addr %s660, 8
      %s662 = scalar_lea.vmem %s20, %s661
      %p663 = pneg %p510
      %p664 = pneg %p507
      %p665 = scmp.lt.s32.totalorder %s33, 1
      %s666 = scalar_select %p665, %s33, 1
      %s667 = smul.addr %s666, 2
      %s668 = smul.addr %s667, 8
      %s669 = scalar_lea.vmem %s21, %s668
      %p670 = scmp.lt.s32.totalorder %s33, 1
      %s671 = scalar_select %p670, %s33, 1
      %s672 = smul.addr %s671, 2
      %s673 = smul.addr %s672, 2
      %s674 = scalar_lea.vmem %s0, %s673
      %p675 = scmp.lt.s32.totalorder %s33, 1
      %s676 = scalar_select %p675, %s33, 1
      %s677 = smul.addr %s676, 2
      %s678 = smul.addr %s677, 2
      %s679 = scalar_lea.vmem %s1, %s678
      %p680 = scmp.lt.s32.totalorder %s33, 1
      %s681 = scalar_select %p680, %s33, 1
      %s682 = smul.addr %s681, 2
      %s683 = smul.addr %s682, 8
      %s684 = scalar_lea.vmem %s20, %s683
      %p685 = scmp.lt.s32.totalorder %s33, 1
      %s686 = scalar_select %p685, %s33, 1
      %s687 = smul.addr %s686, 2
      %s688 = smul.addr %s687, 8
      %s689 = scalar_lea.vmem %s21, %s688
      %v690 = vld [vmem:[%s674] sm:$0xf]
      %v693 = vunpack.c.l.s4 1983009808
      %v694 = vunpack.c.0.s8 %v693
      %v695 = vlaneseq
      %v696 = vshrl.u32 %v695, 7
      %v697 = vsub.s32 %v694, %v696
      %v698 = vrot.slane %v690, %v697
      %v699 = vcombine.high %v698, %v698
      %vm702 = vcmask 1041408
      %v703 = vsel %vm702, %v698, 0.0
      %v704 = vsel %vm702, %v699, 0.0
      %v705 = vadd.f32 %v703, %v704
      %706 = vadd.xlane.f32.xlu0 %v705
      %v707 = vpop.xlane.xlu0 %706
      %v708 = vmul.f32 %v690, %v690
      %v711 = vunpack.c.l.s4 1983009808
      %v712 = vunpack.c.0.s8 %v711
      %v713 = vlaneseq
      %v714 = vshrl.u32 %v713, 7
      %v715 = vsub.s32 %v712, %v714
      %v716 = vrot.slane %v708, %v715
      %v717 = vcombine.high %v716, %v716
      %v720 = vsel %vm702, %v716, 0.0
      %v721 = vsel %vm702, %v717, 0.0
      %v722 = vadd.f32 %v720, %v721
      %723 = vadd.xlane.f32.xlu0 %v722
      %v724 = vpop.xlane.xlu0 %723
      %v725 = vsel %vm702, %v707, 0.0
      %v726 = vrot.slane %v725, 4
      %v727 = vadd.f32 %v725, %v726
      %v728 = vrot.slane %v727, 2
      %v729 = vadd.f32 %v727, %v728
      %v730 = vrot.slane %v729, 1
      %v731 = vadd.f32 %v729, %v730
      %v732 = vsel %vm702, %v724, 0.0
      %v733 = vrot.slane %v732, 4
      %v734 = vadd.f32 %v732, %v733
      %v735 = vrot.slane %v734, 2
      %v736 = vadd.f32 %v734, %v735
      %v737 = vrot.slane %v736, 1
      %v738 = vadd.f32 %v736, %v737
      %v739 = vrcp.pop 512.0
      %v740 = vmul.f32 %v731, %v739
      %v741 = vmul.f32 %v740, 512.0
      %v742 = vmul.f32 %v741, %v740
      %v743 = vsub.f32 %v738, %v742
      %v744 = vrcp.pop 511.0
      %v745 = vmul.f32 %v743, %v744
      %v746 = vmax.f32 %v745, 0.0
      %v747 = vrsqrt.pop %v746
      %v748 = vmul.f32 %v746, %v747
      %vm749 = vcmp.eq.f32.partialorder %v746, inf
      %v750 = vsel %vm749, %v746, %v748
      %vm751 = vcmp.eq.f32.partialorder %v746, 0.0
      %v752 = vand.u32 %v746, 2147483648
      %v753 = vsel %vm751, %v752, %v750
      %v754 = vsub.f32 %v690, %v740
      %v755 = vadd.f32 %v753, 1e-05
      %v756 = vrcp.pop %v755
      %v757 = vmul.f32 %v754, %v756
      %v758 = vld [vmem:[%s2] sm:$0xf]
      %v761 = vunpack.c.l.s4 1983009808
      %v762 = vunpack.c.0.s8 %v761
      %v763 = vlaneseq
      %v764 = vshrl.u32 %v763, 7
      %v765 = vsub.s32 %v762, %v764
      %v766 = vrot.slane %v757, %v765
      %v767 = vcombine.high %v766, %v766
      %vm768 = vcmask 15360
      %v770 = vsel %vm768, %v758, 0
      %v772 = vsel %vm702, %v766, 0
      %v774 = vsel %vm702, %v767, 0
      %776 = vmatprep.subr.mxu0 0.0
      %777 = vmatpush1.msra.mxu0 0.0
      %778 = vmatprep.subr.mxu0 0.0
      %779 = vmatpush1.msra.mxu0 0.0
      %780 = vmatprep.subr.mxu0 0.0
      %781 = vmatpush1.msra.mxu0 0.0
      %782 = vmatprep.subr.mxu0 0.0
      %783 = vmatpush1.msra.mxu0 0.0
      %784 = vmatprep.subr.mxu0 0.0
      %785 = vmatpush1.msra.mxu0 0.0
      %786 = vmatprep.subr.mxu0 0.0
      %787 = vmatpush1.msra.mxu0 0.0
      %788 = vmatprep.subr.mxu0 0.0
      %789 = vmatpush1.msra.mxu0 0.0
      %790 = vmatprep.subr.mxu0 0.0
      %791 = vmatpush1.msra.mxu0 0.0
      %792 = vmatprep.subr.mxu0 0.0
      %793 = vmatpush1.msra.mxu0 0.0
      %794 = vmatprep.subr.mxu0 0.0
      %795 = vmatpush1.msra.mxu0 0.0
      %796 = vmatprep.subr.mxu0 0.0
      %797 = vmatpush1.msra.mxu0 0.0
      %798 = vmatprep.subr.mxu0 0.0
      %799 = vmatpush1.msra.mxu0 0.0
      %800 = vmatprep.subr.mxu0 0.0
      %801 = vmatpush1.msra.mxu0 0.0
      %802 = vmatprep.subr.mxu0 0.0
      %803 = vmatpush1.msra.mxu0 0.0
      %804 = vmatprep.subr.mxu0 0.0
      %805 = vmatpush1.msra.mxu0 0.0
      %806 = vmatprep.subr.mxu0 %v774
      %807 = vmatpush1.msra.mxu0 %v772
      %808 = vmatprep.subr.mxu0 0.0
      %809 = vmatpush2.msra.mxu0 0.0
      %810 = vmatprep.subr.mxu0 0.0
      %811 = vmatpush2.msra.mxu0 0.0
      %812 = vmatprep.subr.mxu0 0.0
      %813 = vmatpush2.msra.mxu0 0.0
      %814 = vmatprep.subr.mxu0 0.0
      %815 = vmatpush2.msra.mxu0 0.0
      %816 = vmatprep.subr.mxu0 0.0
      %817 = vmatpush2.msra.mxu0 0.0
      %818 = vmatprep.subr.mxu0 0.0
      %819 = vmatpush2.msra.mxu0 0.0
      %820 = vmatprep.subr.mxu0 0.0
      %821 = vmatpush2.msra.mxu0 0.0
      %822 = vmatprep.subr.mxu0 0.0
      %823 = vmatpush2.msra.mxu0 0.0
      %824 = vmatprep.subr.mxu0 0.0
      %825 = vmatpush2.msra.mxu0 0.0
      %826 = vmatprep.subr.mxu0 0.0
      %827 = vmatpush2.msra.mxu0 0.0
      %828 = vmatprep.subr.mxu0 0.0
      %829 = vmatpush2.msra.mxu0 0.0
      %830 = vmatprep.subr.mxu0 0.0
      %831 = vmatpush2.msra.mxu0 0.0
      %832 = vmatprep.subr.mxu0 0.0
      %833 = vmatpush2.msra.mxu0 0.0
      %834 = vmatprep.subr.mxu0 0.0
      %835 = vmatpush2.msra.mxu0 0.0
      %836 = vmatprep.subr.mxu0 0.0
      %837 = vmatpush2.msra.mxu0 0.0
      %838 = vmatprep.subr.mxu0 0.0
      %839 = vmatpush2.msra.mxu0 0.0
      %840 = vmatprep.mubr.f32.mxu0 0.0
      %841 = vmatmul.mubr.f32.gmra.mxu0 %v770
      %v842 = vpop.f32.mrf.mxu0
      %v843 = vadd.f32 0.0, %v842
      %v844 = vpop.f32.mrf.mxu0
      %v845 = vadd.f32 0.0, %v844
      %846 = vdwg.mxu0
      %v847 = vld [vmem:[%s3] sm:$0xff]
      %s848 = scalar_lea.vmem %s3, 8
      %v849 = vld [vmem:[%s848] sm:$0xff]
      %851 = vrot.lane.b32.xlu0 %v843, 64
      %v852 = vpop.permute.xlu0 %851
      %vm853 = vcmask 31744
      %v855 = vsel %vm853, %v849, 0
      %vm857 = vcmask 1043456
      %v858 = vsel %vm857, %v852, 0
      %860 = vmatprep.subr.mxu0 0.0
      %861 = vmatpush1.msra.mxu0 0.0
      %862 = vmatprep.subr.mxu0 0.0
      %863 = vmatpush1.msra.mxu0 0.0
      %864 = vmatprep.subr.mxu0 0.0
      %865 = vmatpush1.msra.mxu0 0.0
      %866 = vmatprep.subr.mxu0 0.0
      %867 = vmatpush1.msra.mxu0 0.0
      %868 = vmatprep.subr.mxu0 0.0
      %869 = vmatpush1.msra.mxu0 0.0
      %870 = vmatprep.subr.mxu0 0.0
      %871 = vmatpush1.msra.mxu0 0.0
      %872 = vmatprep.subr.mxu0 0.0
      %873 = vmatpush1.msra.mxu0 0.0
      %874 = vmatprep.subr.mxu0 0.0
      %875 = vmatpush1.msra.mxu0 0.0
      %876 = vmatprep.subr.mxu0 0.0
      %877 = vmatpush1.msra.mxu0 0.0
      %878 = vmatprep.subr.mxu0 0.0
      %879 = vmatpush1.msra.mxu0 0.0
      %880 = vmatprep.subr.mxu0 0.0
      %881 = vmatpush1.msra.mxu0 0.0
      %882 = vmatprep.subr.mxu0 0.0
      %883 = vmatpush1.msra.mxu0 0.0
      %884 = vmatprep.subr.mxu0 0.0
      %885 = vmatpush1.msra.mxu0 0.0
      %886 = vmatprep.subr.mxu0 0.0
      %887 = vmatpush1.msra.mxu0 0.0
      %888 = vmatprep.subr.mxu0 0.0
      %889 = vmatpush1.msra.mxu0 0.0
      %890 = vmatprep.subr.mxu0 0.0
      %891 = vmatpush1.msra.mxu0 %v858
      %892 = vmatprep.subr.mxu0 0.0
      %893 = vmatpush2.msra.mxu0 0.0
      %894 = vmatprep.subr.mxu0 0.0
      %895 = vmatpush2.msra.mxu0 0.0
      %896 = vmatprep.subr.mxu0 0.0
      %897 = vmatpush2.msra.mxu0 0.0
      %898 = vmatprep.subr.mxu0 0.0
      %899 = vmatpush2.msra.mxu0 0.0
      %900 = vmatprep.subr.mxu0 0.0
      %901 = vmatpush2.msra.mxu0 0.0
      %902 = vmatprep.subr.mxu0 0.0
      %903 = vmatpush2.msra.mxu0 0.0
      %904 = vmatprep.subr.mxu0 0.0
      %905 = vmatpush2.msra.mxu0 0.0
      %906 = vmatprep.subr.mxu0 0.0
      %907 = vmatpush2.msra.mxu0 0.0
      %908 = vmatprep.subr.mxu0 0.0
      %909 = vmatpush2.msra.mxu0 0.0
      %910 = vmatprep.subr.mxu0 0.0
      %911 = vmatpush2.msra.mxu0 0.0
      %912 = vmatprep.subr.mxu0 0.0
      %913 = vmatpush2.msra.mxu0 0.0
      %914 = vmatprep.subr.mxu0 0.0
      %915 = vmatpush2.msra.mxu0 0.0
      %916 = vmatprep.subr.mxu0 0.0
      %917 = vmatpush2.msra.mxu0 0.0
      %918 = vmatprep.subr.mxu0 0.0
      %919 = vmatpush2.msra.mxu0 0.0
      %920 = vmatprep.subr.mxu0 0.0
      %921 = vmatpush2.msra.mxu0 0.0
      %922 = vmatprep.subr.mxu0 0.0
      %923 = vmatpush2.msra.mxu0 0.0
      %924 = vmatprep.mubr.f32.mxu0 0.0
      %925 = vmatmul.mubr.f32.gmra.mxu0 %v855
      %v926 = vpop.f32.mrf.mxu0
      %v927 = vadd.f32 0.0, %v926
      %v928 = vpop.f32.mrf.mxu0
      %929 = vdwg.mxu0
      %v931 = vsel %vm853, %v847, 0
      %v933 = vsel %vm857, %v843, 0
      %935 = vmatprep.subr.mxu0 0.0
      %936 = vmatpush1.msra.mxu0 0.0
      %937 = vmatprep.subr.mxu0 0.0
      %938 = vmatpush1.msra.mxu0 0.0
      %939 = vmatprep.subr.mxu0 0.0
      %940 = vmatpush1.msra.mxu0 0.0
      %941 = vmatprep.subr.mxu0 0.0
      %942 = vmatpush1.msra.mxu0 0.0
      %943 = vmatprep.subr.mxu0 0.0
      %944 = vmatpush1.msra.mxu0 0.0
      %945 = vmatprep.subr.mxu0 0.0
      %946 = vmatpush1.msra.mxu0 0.0
      %947 = vmatprep.subr.mxu0 0.0
      %948 = vmatpush1.msra.mxu0 0.0
      %949 = vmatprep.subr.mxu0 0.0
      %950 = vmatpush1.msra.mxu0 0.0
      %951 = vmatprep.subr.mxu0 0.0
      %952 = vmatpush1.msra.mxu0 0.0
      %953 = vmatprep.subr.mxu0 0.0
      %954 = vmatpush1.msra.mxu0 0.0
      %955 = vmatprep.subr.mxu0 0.0
      %956 = vmatpush1.msra.mxu0 0.0
      %957 = vmatprep.subr.mxu0 0.0
      %958 = vmatpush1.msra.mxu0 0.0
      %959 = vmatprep.subr.mxu0 0.0
      %960 = vmatpush1.msra.mxu0 0.0
      %961 = vmatprep.subr.mxu0 0.0
      %962 = vmatpush1.msra.mxu0 0.0
      %963 = vmatprep.subr.mxu0 0.0
      %964 = vmatpush1.msra.mxu0 0.0
      %965 = vmatprep.subr.mxu0 0.0
      %966 = vmatpush1.msra.mxu0 %v933
      %967 = vmatprep.subr.mxu0 0.0
      %968 = vmatpush2.msra.mxu0 0.0
      %969 = vmatprep.subr.mxu0 0.0
      %970 = vmatpush2.msra.mxu0 0.0
      %971 = vmatprep.subr.mxu0 0.0
      %972 = vmatpush2.msra.mxu0 0.0
      %973 = vmatprep.subr.mxu0 0.0
      %974 = vmatpush2.msra.mxu0 0.0
      %975 = vmatprep.subr.mxu0 0.0
      %976 = vmatpush2.msra.mxu0 0.0
      %977 = vmatprep.subr.mxu0 0.0
      %978 = vmatpush2.msra.mxu0 0.0
      %979 = vmatprep.subr.mxu0 0.0
      %980 = vmatpush2.msra.mxu0 0.0
      %981 = vmatprep.subr.mxu0 0.0
      %982 = vmatpush2.msra.mxu0 0.0
      %983 = vmatprep.subr.mxu0 0.0
      %984 = vmatpush2.msra.mxu0 0.0
      %985 = vmatprep.subr.mxu0 0.0
      %986 = vmatpush2.msra.mxu0 0.0
      %987 = vmatprep.subr.mxu0 0.0
      %988 = vmatpush2.msra.mxu0 0.0
      %989 = vmatprep.subr.mxu0 0.0
      %990 = vmatpush2.msra.mxu0 0.0
      %991 = vmatprep.subr.mxu0 0.0
      %992 = vmatpush2.msra.mxu0 0.0
      %993 = vmatprep.subr.mxu0 0.0
      %994 = vmatpush2.msra.mxu0 0.0
      %995 = vmatprep.subr.mxu0 0.0
      %996 = vmatpush2.msra.mxu0 0.0
      %997 = vmatprep.subr.mxu0 0.0
      %998 = vmatpush2.msra.mxu0 0.0
      %999 = vmatprep.mubr.f32.mxu0 0.0
      %1000 = vmatmul.mubr.f32.gmra.mxu0 %v931
      %v1001 = vpop.f32.mrf.mxu0
      %v1002 = vadd.f32 %v927, %v1001
      %v1003 = vpop.f32.mrf.mxu0
      %1004 = vdwg.mxu0
      %s1005 = scalar_lea.vmem %s3, 16
      %v1006 = vld [vmem:[%s1005] sm:$0xff]
      %v1008 = vsel %vm853, %v1006, 0
      %v1011 = vsel %vm857, %v845, 0
      %1013 = vmatprep.subr.mxu0 0.0
      %1014 = vmatpush1.msra.mxu0 0.0
      %1015 = vmatprep.subr.mxu0 0.0
      %1016 = vmatpush1.msra.mxu0 0.0
      %1017 = vmatprep.subr.mxu0 0.0
      %1018 = vmatpush1.msra.mxu0 0.0
      %1019 = vmatprep.subr.mxu0 0.0
      %1020 = vmatpush1.msra.mxu0 0.0
      %1021 = vmatprep.subr.mxu0 0.0
      %1022 = vmatpush1.msra.mxu0 0.0
      %1023 = vmatprep.subr.mxu0 0.0
      %1024 = vmatpush1.msra.mxu0 0.0
      %1025 = vmatprep.subr.mxu0 0.0
      %1026 = vmatpush1.msra.mxu0 0.0
      %1027 = vmatprep.subr.mxu0 0.0
      %1028 = vmatpush1.msra.mxu0 0.0
      %1029 = vmatprep.subr.mxu0 0.0
      %1030 = vmatpush1.msra.mxu0 0.0
      %1031 = vmatprep.subr.mxu0 0.0
      %1032 = vmatpush1.msra.mxu0 0.0
      %1033 = vmatprep.subr.mxu0 0.0
      %1034 = vmatpush1.msra.mxu0 0.0
      %1035 = vmatprep.subr.mxu0 0.0
      %1036 = vmatpush1.msra.mxu0 0.0
      %1037 = vmatprep.subr.mxu0 0.0
      %1038 = vmatpush1.msra.mxu0 0.0
      %1039 = vmatprep.subr.mxu0 0.0
      %1040 = vmatpush1.msra.mxu0 0.0
      %1041 = vmatprep.subr.mxu0 0.0
      %1042 = vmatpush1.msra.mxu0 0.0
      %1043 = vmatprep.subr.mxu0 0.0
      %1044 = vmatpush1.msra.mxu0 %v1011
      %1045 = vmatprep.subr.mxu0 0.0
      %1046 = vmatpush2.msra.mxu0 0.0
      %1047 = vmatprep.subr.mxu0 0.0
      %1048 = vmatpush2.msra.mxu0 0.0
      %1049 = vmatprep.subr.mxu0 0.0
      %1050 = vmatpush2.msra.mxu0 0.0
      %1051 = vmatprep.subr.mxu0 0.0
      %1052 = vmatpush2.msra.mxu0 0.0
      %1053 = vmatprep.subr.mxu0 0.0
      %1054 = vmatpush2.msra.mxu0 0.0
      %1055 = vmatprep.subr.mxu0 0.0
      %1056 = vmatpush2.msra.mxu0 0.0
      %1057 = vmatprep.subr.mxu0 0.0
      %1058 = vmatpush2.msra.mxu0 0.0
      %1059 = vmatprep.subr.mxu0 0.0
      %1060 = vmatpush2.msra.mxu0 0.0
      %1061 = vmatprep.subr.mxu0 0.0
      %1062 = vmatpush2.msra.mxu0 0.0
      %1063 = vmatprep.subr.mxu0 0.0
      %1064 = vmatpush2.msra.mxu0 0.0
      %1065 = vmatprep.subr.mxu0 0.0
      %1066 = vmatpush2.msra.mxu0 0.0
      %1067 = vmatprep.subr.mxu0 0.0
      %1068 = vmatpush2.msra.mxu0 0.0
      %1069 = vmatprep.subr.mxu0 0.0
      %1070 = vmatpush2.msra.mxu0 0.0
      %1071 = vmatprep.subr.mxu0 0.0
      %1072 = vmatpush2.msra.mxu0 0.0
      %1073 = vmatprep.subr.mxu0 0.0
      %1074 = vmatpush2.msra.mxu0 0.0
      %1075 = vmatprep.subr.mxu0 0.0
      %1076 = vmatpush2.msra.mxu0 0.0
      %1077 = vmatprep.mubr.f32.mxu0 0.0
      %1078 = vmatmul.mubr.f32.gmra.mxu0 %v1008
      %v1079 = vpop.f32.mrf.mxu0
      %v1080 = vadd.f32 0.0, %v1079
      %v1081 = vpop.f32.mrf.mxu0
      %1082 = vdwg.mxu0
      %v1083 = vadd.f32 %v1002, %v1080
      %s1084 = scalar_lea.vmem %s3, 24
      %v1085 = vld [vmem:[%s1084] sm:$0xff]
      %1086 = vrot.lane.b32.xlu0 %v845, 64
      %v1087 = vpop.permute.xlu0 %1086
      %v1089 = vsel %vm853, %v1085, 0
      %v1091 = vsel %vm857, %v1087, 0
      %1093 = vmatprep.subr.mxu0 0.0
      %1094 = vmatpush1.msra.mxu0 0.0
      %1095 = vmatprep.subr.mxu0 0.0
      %1096 = vmatpush1.msra.mxu0 0.0
      %1097 = vmatprep.subr.mxu0 0.0
      %1098 = vmatpush1.msra.mxu0 0.0
      %1099 = vmatprep.subr.mxu0 0.0
      %1100 = vmatpush1.msra.mxu0 0.0
      %1101 = vmatprep.subr.mxu0 0.0
      %1102 = vmatpush1.msra.mxu0 0.0
      %1103 = vmatprep.subr.mxu0 0.0
      %1104 = vmatpush1.msra.mxu0 0.0
      %1105 = vmatprep.subr.mxu0 0.0
      %1106 = vmatpush1.msra.mxu0 0.0
      %1107 = vmatprep.subr.mxu0 0.0
      %1108 = vmatpush1.msra.mxu0 0.0
      %1109 = vmatprep.subr.mxu0 0.0
      %1110 = vmatpush1.msra.mxu0 0.0
      %1111 = vmatprep.subr.mxu0 0.0
      %1112 = vmatpush1.msra.mxu0 0.0
      %1113 = vmatprep.subr.mxu0 0.0
      %1114 = vmatpush1.msra.mxu0 0.0
      %1115 = vmatprep.subr.mxu0 0.0
      %1116 = vmatpush1.msra.mxu0 0.0
      %1117 = vmatprep.subr.mxu0 0.0
      %1118 = vmatpush1.msra.mxu0 0.0
      %1119 = vmatprep.subr.mxu0 0.0
      %1120 = vmatpush1.msra.mxu0 0.0
      %1121 = vmatprep.subr.mxu0 0.0
      %1122 = vmatpush1.msra.mxu0 0.0
      %1123 = vmatprep.subr.mxu0 0.0
      %1124 = vmatpush1.msra.mxu0 %v1091
      %1125 = vmatprep.subr.mxu0 0.0
      %1126 = vmatpush2.msra.mxu0 0.0
      %1127 = vmatprep.subr.mxu0 0.0
      %1128 = vmatpush2.msra.mxu0 0.0
      %1129 = vmatprep.subr.mxu0 0.0
      %1130 = vmatpush2.msra.mxu0 0.0
      %1131 = vmatprep.subr.mxu0 0.0
      %1132 = vmatpush2.msra.mxu0 0.0
      %1133 = vmatprep.subr.mxu0 0.0
      %1134 = vmatpush2.msra.mxu0 0.0
      %1135 = vmatprep.subr.mxu0 0.0
      %1136 = vmatpush2.msra.mxu0 0.0
      %1137 = vmatprep.subr.mxu0 0.0
      %1138 = vmatpush2.msra.mxu0 0.0
      %1139 = vmatprep.subr.mxu0 0.0
      %1140 = vmatpush2.msra.mxu0 0.0
      %1141 = vmatprep.subr.mxu0 0.0
      %1142 = vmatpush2.msra.mxu0 0.0
      %1143 = vmatprep.subr.mxu0 0.0
      %1144 = vmatpush2.msra.mxu0 0.0
      %1145 = vmatprep.subr.mxu0 0.0
      %1146 = vmatpush2.msra.mxu0 0.0
      %1147 = vmatprep.subr.mxu0 0.0
      %1148 = vmatpush2.msra.mxu0 0.0
      %1149 = vmatprep.subr.mxu0 0.0
      %1150 = vmatpush2.msra.mxu0 0.0
      %1151 = vmatprep.subr.mxu0 0.0
      %1152 = vmatpush2.msra.mxu0 0.0
      %1153 = vmatprep.subr.mxu0 0.0
      %1154 = vmatpush2.msra.mxu0 0.0
      %1155 = vmatprep.subr.mxu0 0.0
      %1156 = vmatpush2.msra.mxu0 0.0
      %1157 = vmatprep.mubr.f32.mxu0 0.0
      %1158 = vmatmul.mubr.f32.gmra.mxu0 %v1089
      %v1159 = vpop.f32.mrf.mxu0
      %v1160 = vadd.f32 0.0, %v1159
      %v1161 = vpop.f32.mrf.mxu0
      %1162 = vdwg.mxu0
      %v1163 = vadd.f32 %v1083, %v1160
      %vm1164 = vcmask 523264
      %v1165 = vsel %vm1164, %v1163, 0.0
      %1166 = vadd.xlane.f32.xlu0 %v1165
      %v1167 = vpop.xlane.xlu0 %1166
      %v1168 = vmul.f32 %v1163, %v1163
      %v1169 = vsel %vm1164, %v1168, 0.0
      %1170 = vadd.xlane.f32.xlu0 %v1169
      %v1171 = vpop.xlane.xlu0 %1170
      %v1172 = vrcp.pop 64.0
      %v1173 = vmul.f32 %v1167, %v1172
      %v1174 = vmul.f32 %v1171, %v1172
      %v1175 = vmul.f32 %v1173, %v1173
      %v1176 = vsub.f32 %v1174, %v1175
      %v1177 = vmax.f32 %v1176, 0.0
      %v1178 = vsub.f32 %v1163, %v1173
      %v1179 = vadd.f32 %v1177, 1e-05
      %v1180 = vrsqrt.pop %v1179
      %v1181 = vmul.f32 %v1178, %v1180
      %v1182 = vmul.f32 %v1181, 0.5
      %v1183 = vmul.f32 %v1181, 0.70710677
      %v1184 = verf.f32.pop %v1183
      %v1185 = vadd.f32 %v1184, 1.0
      %v1186 = vmul.f32 %v1182, %v1185
      %v1187 = vld [vmem:[%s4] sm:$0xff]
      %v1188 = vld [vmem:[%s4 + $0x8] sm:$0xff]
      %s1189 = scalar_lea.vmem %s4, 16
      %v1190 = vld [vmem:[%s1189] sm:$0xff]
      %v1191 = vld [vmem:[%s1189 + $0x8] sm:$0xff]
      %1193 = vrot.lane.b32.xlu0 %v1186, 112
      %v1194 = vpop.permute.xlu0 %1193
      %vm1196 = vcmask 64512
      %v1198 = vsel %vm1196, %v1190, 0
      %v1201 = vsel %vm1196, %v1191, 0
      %1203 = vmatprep.subr.mxu0 0.0
      %1204 = vmatpush1.msra.mxu0 0.0
      %1205 = vmatprep.subr.mxu0 0.0
      %1206 = vmatpush1.msra.mxu0 0.0
      %1207 = vmatprep.subr.mxu0 0.0
      %1208 = vmatpush1.msra.mxu0 0.0
      %1209 = vmatprep.subr.mxu0 0.0
      %1210 = vmatpush1.msra.mxu0 0.0
      %1211 = vmatprep.subr.mxu0 0.0
      %1212 = vmatpush1.msra.mxu0 0.0
      %1213 = vmatprep.subr.mxu0 0.0
      %1214 = vmatpush1.msra.mxu0 0.0
      %1215 = vmatprep.subr.mxu0 0.0
      %1216 = vmatpush1.msra.mxu0 0.0
      %1217 = vmatprep.subr.mxu0 0.0
      %1218 = vmatpush1.msra.mxu0 0.0
      %1219 = vmatprep.subr.mxu0 0.0
      %1220 = vmatpush1.msra.mxu0 0.0
      %1221 = vmatprep.subr.mxu0 0.0
      %1222 = vmatpush1.msra.mxu0 0.0
      %1223 = vmatprep.subr.mxu0 0.0
      %1224 = vmatpush1.msra.mxu0 0.0
      %1225 = vmatprep.subr.mxu0 0.0
      %1226 = vmatpush1.msra.mxu0 0.0
      %1227 = vmatprep.subr.mxu0 0.0
      %1228 = vmatpush1.msra.mxu0 0.0
      %1229 = vmatprep.subr.mxu0 0.0
      %1230 = vmatpush1.msra.mxu0 0.0
      %1231 = vmatprep.subr.mxu0 0.0
      %1232 = vmatpush1.msra.mxu0 0.0
      %1233 = vmatprep.subr.mxu0 0.0
      %1234 = vmatpush1.msra.mxu0 %v1194
      %1235 = vmatprep.subr.mxu0 0.0
      %1236 = vmatpush2.msra.mxu0 0.0
      %1237 = vmatprep.subr.mxu0 0.0
      %1238 = vmatpush2.msra.mxu0 0.0
      %1239 = vmatprep.subr.mxu0 0.0
      %1240 = vmatpush2.msra.mxu0 0.0
      %1241 = vmatprep.subr.mxu0 0.0
      %1242 = vmatpush2.msra.mxu0 0.0
      %1243 = vmatprep.subr.mxu0 0.0
      %1244 = vmatpush2.msra.mxu0 0.0
      %1245 = vmatprep.subr.mxu0 0.0
      %1246 = vmatpush2.msra.mxu0 0.0
      %1247 = vmatprep.subr.mxu0 0.0
      %1248 = vmatpush2.msra.mxu0 0.0
      %1249 = vmatprep.subr.mxu0 0.0
      %1250 = vmatpush2.msra.mxu0 0.0
      %1251 = vmatprep.subr.mxu0 0.0
      %1252 = vmatpush2.msra.mxu0 0.0
      %1253 = vmatprep.subr.mxu0 0.0
      %1254 = vmatpush2.msra.mxu0 0.0
      %1255 = vmatprep.subr.mxu0 0.0
      %1256 = vmatpush2.msra.mxu0 0.0
      %1257 = vmatprep.subr.mxu0 0.0
      %1258 = vmatpush2.msra.mxu0 0.0
      %1259 = vmatprep.subr.mxu0 0.0
      %1260 = vmatpush2.msra.mxu0 0.0
      %1261 = vmatprep.subr.mxu0 0.0
      %1262 = vmatpush2.msra.mxu0 0.0
      %1263 = vmatprep.subr.mxu0 0.0
      %1264 = vmatpush2.msra.mxu0 0.0
      %1265 = vmatprep.subr.mxu0 0.0
      %1266 = vmatpush2.msra.mxu0 0.0
      %1267 = vmatprep.mubr.f32.mxu0 0.0
      %1268 = vmatmul.mubr.f32.gmra.mxu0 %v1198
      %v1269 = vpop.f32.mrf.mxu0
      %v1270 = vadd.f32 0.0, %v1269
      %v1271 = vpop.f32.mrf.mxu0
      %1272 = vmatprep.mubr.f32.mxu0 0.0
      %1273 = vmatmul.mubr.f32.gmra.mxu0 %v1201
      %v1274 = vpop.f32.mrf.mxu0
      %v1275 = vadd.f32 0.0, %v1274
      %v1276 = vpop.f32.mrf.mxu0
      %1277 = vdwg.mxu0
      %v1279 = vsel %vm1196, %v1187, 0
      %v1282 = vsel %vm1196, %v1188, 0
      %1284 = vmatprep.subr.mxu0 0.0
      %1285 = vmatpush1.msra.mxu0 0.0
      %1286 = vmatprep.subr.mxu0 0.0
      %1287 = vmatpush1.msra.mxu0 0.0
      %1288 = vmatprep.subr.mxu0 0.0
      %1289 = vmatpush1.msra.mxu0 0.0
      %1290 = vmatprep.subr.mxu0 0.0
      %1291 = vmatpush1.msra.mxu0 0.0
      %1292 = vmatprep.subr.mxu0 0.0
      %1293 = vmatpush1.msra.mxu0 0.0
      %1294 = vmatprep.subr.mxu0 0.0
      %1295 = vmatpush1.msra.mxu0 0.0
      %1296 = vmatprep.subr.mxu0 0.0
      %1297 = vmatpush1.msra.mxu0 0.0
      %1298 = vmatprep.subr.mxu0 0.0
      %1299 = vmatpush1.msra.mxu0 0.0
      %1300 = vmatprep.subr.mxu0 0.0
      %1301 = vmatpush1.msra.mxu0 0.0
      %1302 = vmatprep.subr.mxu0 0.0
      %1303 = vmatpush1.msra.mxu0 0.0
      %1304 = vmatprep.subr.mxu0 0.0
      %1305 = vmatpush1.msra.mxu0 0.0
      %1306 = vmatprep.subr.mxu0 0.0
      %1307 = vmatpush1.msra.mxu0 0.0
      %1308 = vmatprep.subr.mxu0 0.0
      %1309 = vmatpush1.msra.mxu0 0.0
      %1310 = vmatprep.subr.mxu0 0.0
      %1311 = vmatpush1.msra.mxu0 0.0
      %1312 = vmatprep.subr.mxu0 0.0
      %1313 = vmatpush1.msra.mxu0 0.0
      %1314 = vmatprep.subr.mxu0 0.0
      %1315 = vmatpush1.msra.mxu0 %v1186
      %1316 = vmatprep.subr.mxu0 0.0
      %1317 = vmatpush2.msra.mxu0 0.0
      %1318 = vmatprep.subr.mxu0 0.0
      %1319 = vmatpush2.msra.mxu0 0.0
      %1320 = vmatprep.subr.mxu0 0.0
      %1321 = vmatpush2.msra.mxu0 0.0
      %1322 = vmatprep.subr.mxu0 0.0
      %1323 = vmatpush2.msra.mxu0 0.0
      %1324 = vmatprep.subr.mxu0 0.0
      %1325 = vmatpush2.msra.mxu0 0.0
      %1326 = vmatprep.subr.mxu0 0.0
      %1327 = vmatpush2.msra.mxu0 0.0
      %1328 = vmatprep.subr.mxu0 0.0
      %1329 = vmatpush2.msra.mxu0 0.0
      %1330 = vmatprep.subr.mxu0 0.0
      %1331 = vmatpush2.msra.mxu0 0.0
      %1332 = vmatprep.subr.mxu0 0.0
      %1333 = vmatpush2.msra.mxu0 0.0
      %1334 = vmatprep.subr.mxu0 0.0
      %1335 = vmatpush2.msra.mxu0 0.0
      %1336 = vmatprep.subr.mxu0 0.0
      %1337 = vmatpush2.msra.mxu0 0.0
      %1338 = vmatprep.subr.mxu0 0.0
      %1339 = vmatpush2.msra.mxu0 0.0
      %1340 = vmatprep.subr.mxu0 0.0
      %1341 = vmatpush2.msra.mxu0 0.0
      %1342 = vmatprep.subr.mxu0 0.0
      %1343 = vmatpush2.msra.mxu0 0.0
      %1344 = vmatprep.subr.mxu0 0.0
      %1345 = vmatpush2.msra.mxu0 0.0
      %1346 = vmatprep.subr.mxu0 0.0
      %1347 = vmatpush2.msra.mxu0 0.0
      %1348 = vmatprep.mubr.f32.mxu0 0.0
      %1349 = vmatmul.mubr.f32.gmra.mxu0 %v1279
      %v1350 = vpop.f32.mrf.mxu0
      %v1351 = vadd.f32 %v1270, %v1350
      %v1352 = vpop.f32.mrf.mxu0
      %1353 = vmatprep.mubr.f32.mxu0 0.0
      %1354 = vmatmul.mubr.f32.gmra.mxu0 %v1282
      %v1355 = vpop.f32.mrf.mxu0
      %v1356 = vadd.f32 %v1275, %v1355
      %v1357 = vpop.f32.mrf.mxu0
      %1358 = vdwg.mxu0
      %s1359 = scalar_lea.vmem %s4, 32
      %v1360 = vld [vmem:[%s1359] sm:$0xff]
      %v1361 = vld [vmem:[%s1359 + $0x8] sm:$0xff]
      %1362 = vrot.lane.b32.xlu0 %v1186, 96
      %v1363 = vpop.permute.xlu0 %1362
      %v1366 = vsel %vm1196, %v1360, 0
      %v1369 = vsel %vm1196, %v1361, 0
      %1371 = vmatprep.subr.mxu0 0.0
      %1372 = vmatpush1.msra.mxu0 0.0
      %1373 = vmatprep.subr.mxu0 0.0
      %1374 = vmatpush1.msra.mxu0 0.0
      %1375 = vmatprep.subr.mxu0 0.0
      %1376 = vmatpush1.msra.mxu0 0.0
      %1377 = vmatprep.subr.mxu0 0.0
      %1378 = vmatpush1.msra.mxu0 0.0
      %1379 = vmatprep.subr.mxu0 0.0
      %1380 = vmatpush1.msra.mxu0 0.0
      %1381 = vmatprep.subr.mxu0 0.0
      %1382 = vmatpush1.msra.mxu0 0.0
      %1383 = vmatprep.subr.mxu0 0.0
      %1384 = vmatpush1.msra.mxu0 0.0
      %1385 = vmatprep.subr.mxu0 0.0
      %1386 = vmatpush1.msra.mxu0 0.0
      %1387 = vmatprep.subr.mxu0 0.0
      %1388 = vmatpush1.msra.mxu0 0.0
      %1389 = vmatprep.subr.mxu0 0.0
      %1390 = vmatpush1.msra.mxu0 0.0
      %1391 = vmatprep.subr.mxu0 0.0
      %1392 = vmatpush1.msra.mxu0 0.0
      %1393 = vmatprep.subr.mxu0 0.0
      %1394 = vmatpush1.msra.mxu0 0.0
      %1395 = vmatprep.subr.mxu0 0.0
      %1396 = vmatpush1.msra.mxu0 0.0
      %1397 = vmatprep.subr.mxu0 0.0
      %1398 = vmatpush1.msra.mxu0 0.0
      %1399 = vmatprep.subr.mxu0 0.0
      %1400 = vmatpush1.msra.mxu0 0.0
      %1401 = vmatprep.subr.mxu0 0.0
      %1402 = vmatpush1.msra.mxu0 %v1363
      %1403 = vmatprep.subr.mxu0 0.0
      %1404 = vmatpush2.msra.mxu0 0.0
      %1405 = vmatprep.subr.mxu0 0.0
      %1406 = vmatpush2.msra.mxu0 0.0
      %1407 = vmatprep.subr.mxu0 0.0
      %1408 = vmatpush2.msra.mxu0 0.0
      %1409 = vmatprep.subr.mxu0 0.0
      %1410 = vmatpush2.msra.mxu0 0.0
      %1411 = vmatprep.subr.mxu0 0.0
      %1412 = vmatpush2.msra.mxu0 0.0
      %1413 = vmatprep.subr.mxu0 0.0
      %1414 = vmatpush2.msra.mxu0 0.0
      %1415 = vmatprep.subr.mxu0 0.0
      %1416 = vmatpush2.msra.mxu0 0.0
      %1417 = vmatprep.subr.mxu0 0.0
      %1418 = vmatpush2.msra.mxu0 0.0
      %1419 = vmatprep.subr.mxu0 0.0
      %1420 = vmatpush2.msra.mxu0 0.0
      %1421 = vmatprep.subr.mxu0 0.0
      %1422 = vmatpush2.msra.mxu0 0.0
      %1423 = vmatprep.subr.mxu0 0.0
      %1424 = vmatpush2.msra.mxu0 0.0
      %1425 = vmatprep.subr.mxu0 0.0
      %1426 = vmatpush2.msra.mxu0 0.0
      %1427 = vmatprep.subr.mxu0 0.0
      %1428 = vmatpush2.msra.mxu0 0.0
      %1429 = vmatprep.subr.mxu0 0.0
      %1430 = vmatpush2.msra.mxu0 0.0
      %1431 = vmatprep.subr.mxu0 0.0
      %1432 = vmatpush2.msra.mxu0 0.0
      %1433 = vmatprep.subr.mxu0 0.0
      %1434 = vmatpush2.msra.mxu0 0.0
      %1435 = vmatprep.mubr.f32.mxu0 0.0
      %1436 = vmatmul.mubr.f32.gmra.mxu0 %v1366
      %v1437 = vpop.f32.mrf.mxu0
      %v1438 = vadd.f32 0.0, %v1437
      %v1439 = vpop.f32.mrf.mxu0
      %1440 = vmatprep.mubr.f32.mxu0 0.0
      %1441 = vmatmul.mubr.f32.gmra.mxu0 %v1369
      %v1442 = vpop.f32.mrf.mxu0
      %v1443 = vadd.f32 0.0, %v1442
      %v1444 = vpop.f32.mrf.mxu0
      %1445 = vdwg.mxu0
      %v1446 = vadd.f32 %v1351, %v1438
      %v1447 = vadd.f32 %v1356, %v1443
      %s1448 = scalar_lea.vmem %s4, 48
      %v1449 = vld [vmem:[%s1448] sm:$0xff]
      %v1450 = vld [vmem:[%s1448 + $0x8] sm:$0xff]
      %1451 = vrot.lane.b32.xlu0 %v1186, 80
      %v1452 = vpop.permute.xlu0 %1451
      %v1455 = vsel %vm1196, %v1449, 0
      %v1458 = vsel %vm1196, %v1450, 0
      %1460 = vmatprep.subr.mxu0 0.0
      %1461 = vmatpush1.msra.mxu0 0.0
      %1462 = vmatprep.subr.mxu0 0.0
      %1463 = vmatpush1.msra.mxu0 0.0
      %1464 = vmatprep.subr.mxu0 0.0
      %1465 = vmatpush1.msra.mxu0 0.0
      %1466 = vmatprep.subr.mxu0 0.0
      %1467 = vmatpush1.msra.mxu0 0.0
      %1468 = vmatprep.subr.mxu0 0.0
      %1469 = vmatpush1.msra.mxu0 0.0
      %1470 = vmatprep.subr.mxu0 0.0
      %1471 = vmatpush1.msra.mxu0 0.0
      %1472 = vmatprep.subr.mxu0 0.0
      %1473 = vmatpush1.msra.mxu0 0.0
      %1474 = vmatprep.subr.mxu0 0.0
      %1475 = vmatpush1.msra.mxu0 0.0
      %1476 = vmatprep.subr.mxu0 0.0
      %1477 = vmatpush1.msra.mxu0 0.0
      %1478 = vmatprep.subr.mxu0 0.0
      %1479 = vmatpush1.msra.mxu0 0.0
      %1480 = vmatprep.subr.mxu0 0.0
      %1481 = vmatpush1.msra.mxu0 0.0
      %1482 = vmatprep.subr.mxu0 0.0
      %1483 = vmatpush1.msra.mxu0 0.0
      %1484 = vmatprep.subr.mxu0 0.0
      %1485 = vmatpush1.msra.mxu0 0.0
      %1486 = vmatprep.subr.mxu0 0.0
      %1487 = vmatpush1.msra.mxu0 0.0
      %1488 = vmatprep.subr.mxu0 0.0
      %1489 = vmatpush1.msra.mxu0 0.0
      %1490 = vmatprep.subr.mxu0 0.0
      %1491 = vmatpush1.msra.mxu0 %v1452
      %1492 = vmatprep.subr.mxu0 0.0
      %1493 = vmatpush2.msra.mxu0 0.0
      %1494 = vmatprep.subr.mxu0 0.0
      %1495 = vmatpush2.msra.mxu0 0.0
      %1496 = vmatprep.subr.mxu0 0.0
      %1497 = vmatpush2.msra.mxu0 0.0
      %1498 = vmatprep.subr.mxu0 0.0
      %1499 = vmatpush2.msra.mxu0 0.0
      %1500 = vmatprep.subr.mxu0 0.0
      %1501 = vmatpush2.msra.mxu0 0.0
      %1502 = vmatprep.subr.mxu0 0.0
      %1503 = vmatpush2.msra.mxu0 0.0
      %1504 = vmatprep.subr.mxu0 0.0
      %1505 = vmatpush2.msra.mxu0 0.0
      %1506 = vmatprep.subr.mxu0 0.0
      %1507 = vmatpush2.msra.mxu0 0.0
      %1508 = vmatprep.subr.mxu0 0.0
      %1509 = vmatpush2.msra.mxu0 0.0
      %1510 = vmatprep.subr.mxu0 0.0
      %1511 = vmatpush2.msra.mxu0 0.0
      %1512 = vmatprep.subr.mxu0 0.0
      %1513 = vmatpush2.msra.mxu0 0.0
      %1514 = vmatprep.subr.mxu0 0.0
      %1515 = vmatpush2.msra.mxu0 0.0
      %1516 = vmatprep.subr.mxu0 0.0
      %1517 = vmatpush2.msra.mxu0 0.0
      %1518 = vmatprep.subr.mxu0 0.0
      %1519 = vmatpush2.msra.mxu0 0.0
      %1520 = vmatprep.subr.mxu0 0.0
      %1521 = vmatpush2.msra.mxu0 0.0
      %1522 = vmatprep.subr.mxu0 0.0
      %1523 = vmatpush2.msra.mxu0 0.0
      %1524 = vmatprep.mubr.f32.mxu0 0.0
      %1525 = vmatmul.mubr.f32.gmra.mxu0 %v1455
      %v1526 = vpop.f32.mrf.mxu0
      %v1527 = vadd.f32 0.0, %v1526
      %v1528 = vpop.f32.mrf.mxu0
      %1529 = vmatprep.mubr.f32.mxu0 0.0
      %1530 = vmatmul.mubr.f32.gmra.mxu0 %v1458
      %v1531 = vpop.f32.mrf.mxu0
      %v1532 = vadd.f32 0.0, %v1531
      %v1533 = vpop.f32.mrf.mxu0
      %1534 = vdwg.mxu0
      %v1535 = vadd.f32 %v1446, %v1527
      %v1536 = vadd.f32 %v1447, %v1532
      %vm1537 = vcmask 130048
      %v1538 = vsel %vm1537, %v1535, 0.0
      %1539 = vadd.xlane.f32.xlu0 %v1538
      %v1540 = vpop.xlane.xlu0 %1539
      %v1541 = vsel %vm1537, %v1536, 0.0
      %1542 = vadd.xlane.f32.xlu0 %v1541
      %v1543 = vpop.xlane.xlu0 %1542
      %v1544 = vmul.f32 %v1535, %v1535
      %v1545 = vmul.f32 %v1536, %v1536
      %v1546 = vsel %vm1537, %v1544, 0.0
      %1547 = vadd.xlane.f32.xlu0 %v1546
      %v1548 = vpop.xlane.xlu0 %1547
      %v1549 = vsel %vm1537, %v1545, 0.0
      %1550 = vadd.xlane.f32.xlu0 %v1549
      %v1551 = vpop.xlane.xlu0 %1550
      %v1552 = vrcp.pop 16.0
      %v1553 = vmul.f32 %v1540, %v1552
      %v1554 = vmul.f32 %v1543, %v1552
      %v1555 = vmul.f32 %v1548, %v1552
      %v1556 = vmul.f32 %v1551, %v1552
      %v1557 = vmul.f32 %v1553, %v1553
      %v1558 = vmul.f32 %v1554, %v1554
      %v1559 = vsub.f32 %v1555, %v1557
      %v1560 = vsub.f32 %v1556, %v1558
      %v1561 = vmax.f32 %v1559, 0.0
      %v1562 = vmax.f32 %v1560, 0.0
      %v1563 = vsub.f32 %v1535, %v1553
      %v1564 = vsub.f32 %v1536, %v1554
      %v1565 = vadd.f32 %v1561, 1e-05
      %v1566 = vadd.f32 %v1562, 1e-05
      %v1567 = vrsqrt.pop %v1565
      %v1568 = vrsqrt.pop %v1566
      %v1569 = vmul.f32 %v1563, %v1567
      %v1570 = vmul.f32 %v1564, %v1568
      %v1571 = vmul.f32 %v1569, 0.5
      %v1572 = vmul.f32 %v1570, 0.5
      %v1573 = vmul.f32 %v1569, 0.70710677
      %v1574 = vmul.f32 %v1570, 0.70710677
      %v1575 = verf.f32.pop %v1573
      %v1576 = verf.f32.pop %v1574
      %v1577 = vadd.f32 %v1575, 1.0
      %v1578 = vadd.f32 %v1576, 1.0
      %v1579 = vmul.f32 %v1571, %v1577
      %v1580 = vmul.f32 %v1572, %v1578
      %v1581 = vld [vmem:[%s5] sm:$0xff]
      %v1582 = vld [vmem:[%s5 + $0x8] sm:$0xff]
      %v1584 = vsel %vm1537, %v1581, 0
      %v1587 = vsel %vm1537, %v1582, 0
      %1589 = vmatprep.subr.mxu0 0.0
      %1590 = vmatpush1.msra.mxu0 0.0
      %1591 = vmatprep.subr.mxu0 0.0
      %1592 = vmatpush1.msra.mxu0 0.0
      %1593 = vmatprep.subr.mxu0 0.0
      %1594 = vmatpush1.msra.mxu0 0.0
      %1595 = vmatprep.subr.mxu0 0.0
      %1596 = vmatpush1.msra.mxu0 0.0
      %1597 = vmatprep.subr.mxu0 0.0
      %1598 = vmatpush1.msra.mxu0 0.0
      %1599 = vmatprep.subr.mxu0 0.0
      %1600 = vmatpush1.msra.mxu0 0.0
      %1601 = vmatprep.subr.mxu0 0.0
      %1602 = vmatpush1.msra.mxu0 0.0
      %1603 = vmatprep.subr.mxu0 0.0
      %1604 = vmatpush1.msra.mxu0 0.0
      %1605 = vmatprep.subr.mxu0 0.0
      %1606 = vmatpush1.msra.mxu0 0.0
      %1607 = vmatprep.subr.mxu0 0.0
      %1608 = vmatpush1.msra.mxu0 0.0
      %1609 = vmatprep.subr.mxu0 0.0
      %1610 = vmatpush1.msra.mxu0 0.0
      %1611 = vmatprep.subr.mxu0 0.0
      %1612 = vmatpush1.msra.mxu0 0.0
      %1613 = vmatprep.subr.mxu0 0.0
      %1614 = vmatpush1.msra.mxu0 0.0
      %1615 = vmatprep.subr.mxu0 0.0
      %1616 = vmatpush1.msra.mxu0 0.0
      %1617 = vmatprep.subr.mxu0 0.0
      %1618 = vmatpush1.msra.mxu0 %v1580
      %1619 = vmatprep.subr.mxu0 0.0
      %1620 = vmatpush1.msra.mxu0 %v1579
      %1621 = vmatprep.subr.mxu0 0.0
      %1622 = vmatpush2.msra.mxu0 0.0
      %1623 = vmatprep.subr.mxu0 0.0
      %1624 = vmatpush2.msra.mxu0 0.0
      %1625 = vmatprep.subr.mxu0 0.0
      %1626 = vmatpush2.msra.mxu0 0.0
      %1627 = vmatprep.subr.mxu0 0.0
      %1628 = vmatpush2.msra.mxu0 0.0
      %1629 = vmatprep.subr.mxu0 0.0
      %1630 = vmatpush2.msra.mxu0 0.0
      %1631 = vmatprep.subr.mxu0 0.0
      %1632 = vmatpush2.msra.mxu0 0.0
      %1633 = vmatprep.subr.mxu0 0.0
      %1634 = vmatpush2.msra.mxu0 0.0
      %1635 = vmatprep.subr.mxu0 0.0
      %1636 = vmatpush2.msra.mxu0 0.0
      %1637 = vmatprep.subr.mxu0 0.0
      %1638 = vmatpush2.msra.mxu0 0.0
      %1639 = vmatprep.subr.mxu0 0.0
      %1640 = vmatpush2.msra.mxu0 0.0
      %1641 = vmatprep.subr.mxu0 0.0
      %1642 = vmatpush2.msra.mxu0 0.0
      %1643 = vmatprep.subr.mxu0 0.0
      %1644 = vmatpush2.msra.mxu0 0.0
      %1645 = vmatprep.subr.mxu0 0.0
      %1646 = vmatpush2.msra.mxu0 0.0
      %1647 = vmatprep.subr.mxu0 0.0
      %1648 = vmatpush2.msra.mxu0 0.0
      %1649 = vmatprep.subr.mxu0 0.0
      %1650 = vmatpush2.msra.mxu0 0.0
      %1651 = vmatprep.subr.mxu0 0.0
      %1652 = vmatpush2.msra.mxu0 0.0
      %1653 = vmatprep.mubr.f32.mxu0 0.0
      %1654 = vmatmul.mubr.f32.gmra.mxu0 %v1584
      %v1655 = vpop.f32.mrf.mxu0
      %v1656 = vadd.f32 0.0, %v1655
      %v1657 = vpop.f32.mrf.mxu0
      %1658 = vmatprep.mubr.f32.mxu0 0.0
      %1659 = vmatmul.mubr.f32.gmra.mxu0 %v1587
      %v1660 = vpop.f32.mrf.mxu0
      %v1661 = vadd.f32 0.0, %v1660
      %v1662 = vpop.f32.mrf.mxu0
      %1663 = vdwg.mxu0
      %v1664 = vsel %vm1537, %v1656, 0.0
      %1665 = vadd.xlane.f32.xlu0 %v1664
      %v1666 = vpop.xlane.xlu0 %1665
      %v1667 = vsel %vm1537, %v1661, 0.0
      %1668 = vadd.xlane.f32.xlu0 %v1667
      %v1669 = vpop.xlane.xlu0 %1668
      %v1670 = vmul.f32 %v1656, %v1656
      %v1671 = vmul.f32 %v1661, %v1661
      %v1672 = vsel %vm1537, %v1670, 0.0
      %1673 = vadd.xlane.f32.xlu0 %v1672
      %v1674 = vpop.xlane.xlu0 %1673
      %v1675 = vsel %vm1537, %v1671, 0.0
      %1676 = vadd.xlane.f32.xlu0 %v1675
      %v1677 = vpop.xlane.xlu0 %1676
      %v1678 = vmul.f32 %v1666, %v1552
      %v1679 = vmul.f32 %v1669, %v1552
      %v1680 = vmul.f32 %v1674, %v1552
      %v1681 = vmul.f32 %v1677, %v1552
      %v1682 = vmul.f32 %v1678, %v1678
      %v1683 = vmul.f32 %v1679, %v1679
      %v1684 = vsub.f32 %v1680, %v1682
      %v1685 = vsub.f32 %v1681, %v1683
      %v1686 = vmax.f32 %v1684, 0.0
      %v1687 = vmax.f32 %v1685, 0.0
      %v1688 = vsub.f32 %v1656, %v1678
      %v1689 = vsub.f32 %v1661, %v1679
      %v1690 = vadd.f32 %v1686, 1e-05
      %v1691 = vadd.f32 %v1687, 1e-05
      %v1692 = vrsqrt.pop %v1690
      %v1693 = vrsqrt.pop %v1691
      %v1694 = vmul.f32 %v1688, %v1692
      %v1695 = vmul.f32 %v1689, %v1693
      %v1696 = vmul.f32 %v1694, 0.5
      %v1697 = vmul.f32 %v1695, 0.5
      %v1698 = vmul.f32 %v1694, 0.70710677
      %v1699 = vmul.f32 %v1695, 0.70710677
      %v1700 = verf.f32.pop %v1698
      %v1701 = verf.f32.pop %v1699
      %v1702 = vadd.f32 %v1700, 1.0
      %v1703 = vadd.f32 %v1701, 1.0
      %v1704 = vmul.f32 %v1696, %v1702
      %v1705 = vmul.f32 %v1697, %v1703
      %v1706 = vld [vmem:[%s6] sm:$0xff]
      %v1707 = vld [vmem:[%s6 + $0x8] sm:$0xff]
      %v1708 = vld [vmem:[%s6 + $0x10] sm:$0xff]
      %v1709 = vld [vmem:[%s6 + $0x18] sm:$0xff]
      %v1710 = vld [vmem:[%s7] sm:$0xff]
      %v1711 = vld [vmem:[%s7 + $0x8] sm:$0xff]
      %v1712 = vld [vmem:[%s7 + $0x10] sm:$0xff]
      %v1713 = vld [vmem:[%s7 + $0x18] sm:$0xff]
      %v1715 = vsel %vm1537, %v1710, 0
      %v1718 = vsel %vm1537, %v1711, 0
      %v1721 = vsel %vm1537, %v1712, 0
      %v1724 = vsel %vm1537, %v1713, 0
      %1726 = vmatprep.subr.mxu0 0.0
      %1727 = vmatpush1.msra.mxu0 0.0
      %1728 = vmatprep.subr.mxu0 0.0
      %1729 = vmatpush1.msra.mxu0 0.0
      %1730 = vmatprep.subr.mxu0 0.0
      %1731 = vmatpush1.msra.mxu0 0.0
      %1732 = vmatprep.subr.mxu0 0.0
      %1733 = vmatpush1.msra.mxu0 0.0
      %1734 = vmatprep.subr.mxu0 0.0
      %1735 = vmatpush1.msra.mxu0 0.0
      %1736 = vmatprep.subr.mxu0 0.0
      %1737 = vmatpush1.msra.mxu0 0.0
      %1738 = vmatprep.subr.mxu0 0.0
      %1739 = vmatpush1.msra.mxu0 0.0
      %1740 = vmatprep.subr.mxu0 0.0
      %1741 = vmatpush1.msra.mxu0 0.0
      %1742 = vmatprep.subr.mxu0 0.0
      %1743 = vmatpush1.msra.mxu0 0.0
      %1744 = vmatprep.subr.mxu0 0.0
      %1745 = vmatpush1.msra.mxu0 0.0
      %1746 = vmatprep.subr.mxu0 0.0
      %1747 = vmatpush1.msra.mxu0 0.0
      %1748 = vmatprep.subr.mxu0 0.0
      %1749 = vmatpush1.msra.mxu0 0.0
      %1750 = vmatprep.subr.mxu0 0.0
      %1751 = vmatpush1.msra.mxu0 0.0
      %1752 = vmatprep.subr.mxu0 0.0
      %1753 = vmatpush1.msra.mxu0 0.0
      %1754 = vmatprep.subr.mxu0 0.0
      %1755 = vmatpush1.msra.mxu0 %v1580
      %1756 = vmatprep.subr.mxu0 0.0
      %1757 = vmatpush1.msra.mxu0 %v1579
      %1758 = vmatprep.subr.mxu0 0.0
      %1759 = vmatpush2.msra.mxu0 0.0
      %1760 = vmatprep.subr.mxu0 0.0
      %1761 = vmatpush2.msra.mxu0 0.0
      %1762 = vmatprep.subr.mxu0 0.0
      %1763 = vmatpush2.msra.mxu0 0.0
      %1764 = vmatprep.subr.mxu0 0.0
      %1765 = vmatpush2.msra.mxu0 0.0
      %1766 = vmatprep.subr.mxu0 0.0
      %1767 = vmatpush2.msra.mxu0 0.0
      %1768 = vmatprep.subr.mxu0 0.0
      %1769 = vmatpush2.msra.mxu0 0.0
      %1770 = vmatprep.subr.mxu0 0.0
      %1771 = vmatpush2.msra.mxu0 0.0
      %1772 = vmatprep.subr.mxu0 0.0
      %1773 = vmatpush2.msra.mxu0 0.0
      %1774 = vmatprep.subr.mxu0 0.0
      %1775 = vmatpush2.msra.mxu0 0.0
      %1776 = vmatprep.subr.mxu0 0.0
      %1777 = vmatpush2.msra.mxu0 0.0
      %1778 = vmatprep.subr.mxu0 0.0
      %1779 = vmatpush2.msra.mxu0 0.0
      %1780 = vmatprep.subr.mxu0 0.0
      %1781 = vmatpush2.msra.mxu0 0.0
      %1782 = vmatprep.subr.mxu0 0.0
      %1783 = vmatpush2.msra.mxu0 0.0
      %1784 = vmatprep.subr.mxu0 0.0
      %1785 = vmatpush2.msra.mxu0 0.0
      %1786 = vmatprep.subr.mxu0 0.0
      %1787 = vmatpush2.msra.mxu0 0.0
      %1788 = vmatprep.subr.mxu0 0.0
      %1789 = vmatpush2.msra.mxu0 0.0
      %1790 = vmatprep.mubr.f32.mxu0 0.0
      %1791 = vmatmul.mubr.f32.gmra.mxu0 %v1715
      %v1792 = vpop.f32.mrf.mxu0
      %v1793 = vadd.f32 0.0, %v1792
      %v1794 = vpop.f32.mrf.mxu0
      %1795 = vmatprep.mubr.f32.mxu0 0.0
      %1796 = vmatmul.mubr.f32.gmra.mxu0 %v1718
      %v1797 = vpop.f32.mrf.mxu0
      %v1798 = vadd.f32 0.0, %v1797
      %v1799 = vpop.f32.mrf.mxu0
      %1800 = vmatprep.mubr.f32.mxu0 0.0
      %1801 = vmatmul.mubr.f32.gmra.mxu0 %v1721
      %v1802 = vpop.f32.mrf.mxu0
      %v1803 = vadd.f32 0.0, %v1802
      %v1804 = vpop.f32.mrf.mxu0
      %1805 = vmatprep.mubr.f32.mxu0 0.0
      %1806 = vmatmul.mubr.f32.gmra.mxu0 %v1724
      %v1807 = vpop.f32.mrf.mxu0
      %v1808 = vadd.f32 0.0, %v1807
      %v1809 = vpop.f32.mrf.mxu0
      %1810 = vdwg.mxu0
      %v1812 = vsel %vm1537, %v1706, 0
      %v1815 = vsel %vm1537, %v1707, 0
      %v1818 = vsel %vm1537, %v1708, 0
      %v1821 = vsel %vm1537, %v1709, 0
      %1823 = vmatprep.subr.mxu0 0.0
      %1824 = vmatpush1.msra.mxu0 0.0
      %1825 = vmatprep.subr.mxu0 0.0
      %1826 = vmatpush1.msra.mxu0 0.0
      %1827 = vmatprep.subr.mxu0 0.0
      %1828 = vmatpush1.msra.mxu0 0.0
      %1829 = vmatprep.subr.mxu0 0.0
      %1830 = vmatpush1.msra.mxu0 0.0
      %1831 = vmatprep.subr.mxu0 0.0
      %1832 = vmatpush1.msra.mxu0 0.0
      %1833 = vmatprep.subr.mxu0 0.0
      %1834 = vmatpush1.msra.mxu0 0.0
      %1835 = vmatprep.subr.mxu0 0.0
      %1836 = vmatpush1.msra.mxu0 0.0
      %1837 = vmatprep.subr.mxu0 0.0
      %1838 = vmatpush1.msra.mxu0 0.0
      %1839 = vmatprep.subr.mxu0 0.0
      %1840 = vmatpush1.msra.mxu0 0.0
      %1841 = vmatprep.subr.mxu0 0.0
      %1842 = vmatpush1.msra.mxu0 0.0
      %1843 = vmatprep.subr.mxu0 0.0
      %1844 = vmatpush1.msra.mxu0 0.0
      %1845 = vmatprep.subr.mxu0 0.0
      %1846 = vmatpush1.msra.mxu0 0.0
      %1847 = vmatprep.subr.mxu0 0.0
      %1848 = vmatpush1.msra.mxu0 0.0
      %1849 = vmatprep.subr.mxu0 0.0
      %1850 = vmatpush1.msra.mxu0 0.0
      %1851 = vmatprep.subr.mxu0 0.0
      %1852 = vmatpush1.msra.mxu0 %v1705
      %1853 = vmatprep.subr.mxu0 0.0
      %1854 = vmatpush1.msra.mxu0 %v1704
      %1855 = vmatprep.subr.mxu0 0.0
      %1856 = vmatpush2.msra.mxu0 0.0
      %1857 = vmatprep.subr.mxu0 0.0
      %1858 = vmatpush2.msra.mxu0 0.0
      %1859 = vmatprep.subr.mxu0 0.0
      %1860 = vmatpush2.msra.mxu0 0.0
      %1861 = vmatprep.subr.mxu0 0.0
      %1862 = vmatpush2.msra.mxu0 0.0
      %1863 = vmatprep.subr.mxu0 0.0
      %1864 = vmatpush2.msra.mxu0 0.0
      %1865 = vmatprep.subr.mxu0 0.0
      %1866 = vmatpush2.msra.mxu0 0.0
      %1867 = vmatprep.subr.mxu0 0.0
      %1868 = vmatpush2.msra.mxu0 0.0
      %1869 = vmatprep.subr.mxu0 0.0
      %1870 = vmatpush2.msra.mxu0 0.0
      %1871 = vmatprep.subr.mxu0 0.0
      %1872 = vmatpush2.msra.mxu0 0.0
      %1873 = vmatprep.subr.mxu0 0.0
      %1874 = vmatpush2.msra.mxu0 0.0
      %1875 = vmatprep.subr.mxu0 0.0
      %1876 = vmatpush2.msra.mxu0 0.0
      %1877 = vmatprep.subr.mxu0 0.0
      %1878 = vmatpush2.msra.mxu0 0.0
      %1879 = vmatprep.subr.mxu0 0.0
      %1880 = vmatpush2.msra.mxu0 0.0
      %1881 = vmatprep.subr.mxu0 0.0
      %1882 = vmatpush2.msra.mxu0 0.0
      %1883 = vmatprep.subr.mxu0 0.0
      %1884 = vmatpush2.msra.mxu0 0.0
      %1885 = vmatprep.subr.mxu0 0.0
      %1886 = vmatpush2.msra.mxu0 0.0
      %1887 = vmatprep.mubr.f32.mxu0 0.0
      %1888 = vmatmul.mubr.f32.gmra.mxu0 %v1812
      %v1889 = vpop.f32.mrf.mxu0
      %v1890 = vadd.f32 %v1793, %v1889
      %v1891 = vpop.f32.mrf.mxu0
      %1892 = vmatprep.mubr.f32.mxu0 0.0
      %1893 = vmatmul.mubr.f32.gmra.mxu0 %v1815
      %v1894 = vpop.f32.mrf.mxu0
      %v1895 = vadd.f32 %v1798, %v1894
      %v1896 = vpop.f32.mrf.mxu0
      %1897 = vmatprep.mubr.f32.mxu0 0.0
      %1898 = vmatmul.mubr.f32.gmra.mxu0 %v1818
      %v1899 = vpop.f32.mrf.mxu0
      %v1900 = vadd.f32 %v1803, %v1899
      %v1901 = vpop.f32.mrf.mxu0
      %1902 = vmatprep.mubr.f32.mxu0 0.0
      %1903 = vmatmul.mubr.f32.gmra.mxu0 %v1821
      %v1904 = vpop.f32.mrf.mxu0
      %v1905 = vadd.f32 %v1808, %v1904
      %v1906 = vpop.f32.mrf.mxu0
      %1907 = vdwg.mxu0
      %v1908 = vsel %vm1537, %v1890, 0.0
      %1909 = vadd.xlane.f32.xlu0 %v1908
      %v1910 = vpop.xlane.xlu0 %1909
      %v1911 = vsel %vm1537, %v1895, 0.0
      %1912 = vadd.xlane.f32.xlu0 %v1911
      %v1913 = vpop.xlane.xlu0 %1912
      %v1914 = vsel %vm1537, %v1900, 0.0
      %1915 = vadd.xlane.f32.xlu0 %v1914
      %v1916 = vpop.xlane.xlu0 %1915
      %v1917 = vsel %vm1537, %v1905, 0.0
      %1918 = vadd.xlane.f32.xlu0 %v1917
      %v1919 = vpop.xlane.xlu0 %1918
      %v1920 = vmul.f32 %v1890, %v1890
      %v1921 = vmul.f32 %v1895, %v1895
      %v1922 = vmul.f32 %v1900, %v1900
      %v1923 = vmul.f32 %v1905, %v1905
      %v1924 = vsel %vm1537, %v1920, 0.0
      %1925 = vadd.xlane.f32.xlu0 %v1924
      %v1926 = vpop.xlane.xlu0 %1925
      %v1927 = vsel %vm1537, %v1921, 0.0
      %1928 = vadd.xlane.f32.xlu0 %v1927
      %v1929 = vpop.xlane.xlu0 %1928
      %v1930 = vsel %vm1537, %v1922, 0.0
      %1931 = vadd.xlane.f32.xlu0 %v1930
      %v1932 = vpop.xlane.xlu0 %1931
      %v1933 = vsel %vm1537, %v1923, 0.0
      %1934 = vadd.xlane.f32.xlu0 %v1933
      %v1935 = vpop.xlane.xlu0 %1934
      %v1936 = vadd.f32 %v1910, %v1913
      %v1937 = vadd.f32 %v1926, %v1929
      %v1938 = vadd.f32 %v1936, %v1916
      %v1939 = vadd.f32 %v1937, %v1932
      %v1940 = vadd.f32 %v1938, %v1919
      %v1941 = vadd.f32 %v1939, %v1935
      %v1942 = vmul.f32 %v1940, %v1172
      %v1943 = vmul.f32 %v1941, %v1172
      %v1944 = vmul.f32 %v1942, %v1942
      %v1945 = vsub.f32 %v1943, %v1944
      %v1946 = vmax.f32 %v1945, 0.0
      %v1947 = vadd.f32 %v1946, 1e-05
      %v1948 = vrsqrt.pop %v1947
      %v1949 = vsub.f32 %v1890, %v1942
      %v1950 = vmul.f32 %v1949, %v1948
      %v1951 = vmul.f32 %v1950, 0.5
      %v1952 = vmul.f32 %v1950, 0.70710677
      %v1953 = verf.f32.pop %v1952
      %v1954 = vadd.f32 %v1953, 1.0
      %v1955 = vmul.f32 %v1951, %v1954
      %v1956 = vsub.f32 %v1895, %v1942
      %v1957 = vmul.f32 %v1956, %v1948
      %v1958 = vmul.f32 %v1957, 0.5
      %v1959 = vmul.f32 %v1957, 0.70710677
      %v1960 = verf.f32.pop %v1959
      %v1961 = vadd.f32 %v1960, 1.0
      %v1962 = vmul.f32 %v1958, %v1961
      %v1963 = vsub.f32 %v1900, %v1942
      %v1964 = vmul.f32 %v1963, %v1948
      %v1965 = vmul.f32 %v1964, 0.5
      %v1966 = vmul.f32 %v1964, 0.70710677
      %v1967 = verf.f32.pop %v1966
      %v1968 = vadd.f32 %v1967, 1.0
      %v1969 = vmul.f32 %v1965, %v1968
      %v1970 = vsub.f32 %v1905, %v1942
      %v1971 = vmul.f32 %v1970, %v1948
      %v1972 = vmul.f32 %v1971, 0.5
      %v1973 = vmul.f32 %v1971, 0.70710677
      %v1974 = verf.f32.pop %v1973
      %v1975 = vadd.f32 %v1974, 1.0
      %v1976 = vmul.f32 %v1972, %v1975
      %1978 = vrot.lane.b32.xlu0 %v1962, 16
      %v1979 = vpop.permute.xlu0 %1978
      %1982 = vrot.lane.b32.xlu0 %v1969, 32
      %v1983 = vpop.permute.xlu0 %1982
      %1986 = vrot.lane.b32.xlu0 %v1976, 48
      %v1987 = vpop.permute.xlu0 %1986
      %v1989 = vsel %vm1537, %v1955, %v1979
      %vm1990 = vcmask 261120
      %v1991 = vsel %vm1990, %v1989, %v1983
      %vm1992 = vcmask 392192
      %v1993 = vsel %vm1992, %v1991, %v1987
      %v1994 = vld [vmem:[%s8] sm:$0xff]
      %v1995 = vld [vmem:[%s8 + $0x8] sm:$0xff]
      %v1996 = vld [vmem:[%s9] sm:$0xff]
      %v1997 = vld [vmem:[%s9 + $0x8] sm:$0xff]
      %v1999 = vsel %vm1196, %v1996, 0
      %v2002 = vsel %vm1196, %v1997, 0
      %2004 = vmatprep.subr.mxu0 0.0
      %2005 = vmatpush1.msra.mxu0 0.0
      %2006 = vmatprep.subr.mxu0 0.0
      %2007 = vmatpush1.msra.mxu0 0.0
      %2008 = vmatprep.subr.mxu0 0.0
      %2009 = vmatpush1.msra.mxu0 0.0
      %2010 = vmatprep.subr.mxu0 0.0
      %2011 = vmatpush1.msra.mxu0 0.0
      %2012 = vmatprep.subr.mxu0 0.0
      %2013 = vmatpush1.msra.mxu0 0.0
      %2014 = vmatprep.subr.mxu0 0.0
      %2015 = vmatpush1.msra.mxu0 0.0
      %2016 = vmatprep.subr.mxu0 0.0
      %2017 = vmatpush1.msra.mxu0 0.0
      %2018 = vmatprep.subr.mxu0 0.0
      %2019 = vmatpush1.msra.mxu0 0.0
      %2020 = vmatprep.subr.mxu0 0.0
      %2021 = vmatpush1.msra.mxu0 0.0
      %2022 = vmatprep.subr.mxu0 0.0
      %2023 = vmatpush1.msra.mxu0 0.0
      %2024 = vmatprep.subr.mxu0 0.0
      %2025 = vmatpush1.msra.mxu0 0.0
      %2026 = vmatprep.subr.mxu0 0.0
      %2027 = vmatpush1.msra.mxu0 0.0
      %2028 = vmatprep.subr.mxu0 0.0
      %2029 = vmatpush1.msra.mxu0 0.0
      %2030 = vmatprep.subr.mxu0 0.0
      %2031 = vmatpush1.msra.mxu0 0.0
      %2032 = vmatprep.subr.mxu0 0.0
      %2033 = vmatpush1.msra.mxu0 0.0
      %2034 = vmatprep.subr.mxu0 0.0
      %2035 = vmatpush1.msra.mxu0 %v1186
      %2036 = vmatprep.subr.mxu0 0.0
      %2037 = vmatpush2.msra.mxu0 0.0
      %2038 = vmatprep.subr.mxu0 0.0
      %2039 = vmatpush2.msra.mxu0 0.0
      %2040 = vmatprep.subr.mxu0 0.0
      %2041 = vmatpush2.msra.mxu0 0.0
      %2042 = vmatprep.subr.mxu0 0.0
      %2043 = vmatpush2.msra.mxu0 0.0
      %2044 = vmatprep.subr.mxu0 0.0
      %2045 = vmatpush2.msra.mxu0 0.0
      %2046 = vmatprep.subr.mxu0 0.0
      %2047 = vmatpush2.msra.mxu0 0.0
      %2048 = vmatprep.subr.mxu0 0.0
      %2049 = vmatpush2.msra.mxu0 0.0
      %2050 = vmatprep.subr.mxu0 0.0
      %2051 = vmatpush2.msra.mxu0 0.0
      %2052 = vmatprep.subr.mxu0 0.0
      %2053 = vmatpush2.msra.mxu0 0.0
      %2054 = vmatprep.subr.mxu0 0.0
      %2055 = vmatpush2.msra.mxu0 0.0
      %2056 = vmatprep.subr.mxu0 0.0
      %2057 = vmatpush2.msra.mxu0 0.0
      %2058 = vmatprep.subr.mxu0 0.0
      %2059 = vmatpush2.msra.mxu0 0.0
      %2060 = vmatprep.subr.mxu0 0.0
      %2061 = vmatpush2.msra.mxu0 0.0
      %2062 = vmatprep.subr.mxu0 0.0
      %2063 = vmatpush2.msra.mxu0 0.0
      %2064 = vmatprep.subr.mxu0 0.0
      %2065 = vmatpush2.msra.mxu0 0.0
      %2066 = vmatprep.subr.mxu0 0.0
      %2067 = vmatpush2.msra.mxu0 0.0
      %2068 = vmatprep.mubr.f32.mxu0 0.0
      %2069 = vmatmul.mubr.f32.gmra.mxu0 %v1999
      %v2070 = vpop.f32.mrf.mxu0
      %v2071 = vadd.f32 0.0, %v2070
      %v2072 = vpop.f32.mrf.mxu0
      %2073 = vmatprep.mubr.f32.mxu0 0.0
      %2074 = vmatmul.mubr.f32.gmra.mxu0 %v2002
      %v2075 = vpop.f32.mrf.mxu0
      %v2076 = vadd.f32 0.0, %v2075
      %v2077 = vpop.f32.mrf.mxu0
      %2078 = vdwg.mxu0
      %v2080 = vsel %vm1196, %v1994, 0
      %v2083 = vsel %vm1196, %v1995, 0
      %2085 = vmatprep.subr.mxu0 0.0
      %2086 = vmatpush1.msra.mxu0 0.0
      %2087 = vmatprep.subr.mxu0 0.0
      %2088 = vmatpush1.msra.mxu0 0.0
      %2089 = vmatprep.subr.mxu0 0.0
      %2090 = vmatpush1.msra.mxu0 0.0
      %2091 = vmatprep.subr.mxu0 0.0
      %2092 = vmatpush1.msra.mxu0 0.0
      %2093 = vmatprep.subr.mxu0 0.0
      %2094 = vmatpush1.msra.mxu0 0.0
      %2095 = vmatprep.subr.mxu0 0.0
      %2096 = vmatpush1.msra.mxu0 0.0
      %2097 = vmatprep.subr.mxu0 0.0
      %2098 = vmatpush1.msra.mxu0 0.0
      %2099 = vmatprep.subr.mxu0 0.0
      %2100 = vmatpush1.msra.mxu0 0.0
      %2101 = vmatprep.subr.mxu0 0.0
      %2102 = vmatpush1.msra.mxu0 0.0
      %2103 = vmatprep.subr.mxu0 0.0
      %2104 = vmatpush1.msra.mxu0 0.0
      %2105 = vmatprep.subr.mxu0 0.0
      %2106 = vmatpush1.msra.mxu0 0.0
      %2107 = vmatprep.subr.mxu0 0.0
      %2108 = vmatpush1.msra.mxu0 0.0
      %2109 = vmatprep.subr.mxu0 0.0
      %2110 = vmatpush1.msra.mxu0 0.0
      %2111 = vmatprep.subr.mxu0 0.0
      %2112 = vmatpush1.msra.mxu0 0.0
      %2113 = vmatprep.subr.mxu0 0.0
      %2114 = vmatpush1.msra.mxu0 0.0
      %2115 = vmatprep.subr.mxu0 0.0
      %2116 = vmatpush1.msra.mxu0 %v1993
      %2117 = vmatprep.subr.mxu0 0.0
      %2118 = vmatpush2.msra.mxu0 0.0
      %2119 = vmatprep.subr.mxu0 0.0
      %2120 = vmatpush2.msra.mxu0 0.0
      %2121 = vmatprep.subr.mxu0 0.0
      %2122 = vmatpush2.msra.mxu0 0.0
      %2123 = vmatprep.subr.mxu0 0.0
      %2124 = vmatpush2.msra.mxu0 0.0
      %2125 = vmatprep.subr.mxu0 0.0
      %2126 = vmatpush2.msra.mxu0 0.0
      %2127 = vmatprep.subr.mxu0 0.0
      %2128 = vmatpush2.msra.mxu0 0.0
      %2129 = vmatprep.subr.mxu0 0.0
      %2130 = vmatpush2.msra.mxu0 0.0
      %2131 = vmatprep.subr.mxu0 0.0
      %2132 = vmatpush2.msra.mxu0 0.0
      %2133 = vmatprep.subr.mxu0 0.0
      %2134 = vmatpush2.msra.mxu0 0.0
      %2135 = vmatprep.subr.mxu0 0.0
      %2136 = vmatpush2.msra.mxu0 0.0
      %2137 = vmatprep.subr.mxu0 0.0
      %2138 = vmatpush2.msra.mxu0 0.0
      %2139 = vmatprep.subr.mxu0 0.0
      %2140 = vmatpush2.msra.mxu0 0.0
      %2141 = vmatprep.subr.mxu0 0.0
      %2142 = vmatpush2.msra.mxu0 0.0
      %2143 = vmatprep.subr.mxu0 0.0
      %2144 = vmatpush2.msra.mxu0 0.0
      %2145 = vmatprep.subr.mxu0 0.0
      %2146 = vmatpush2.msra.mxu0 0.0
      %2147 = vmatprep.subr.mxu0 0.0
      %2148 = vmatpush2.msra.mxu0 0.0
      %2149 = vmatprep.mubr.f32.mxu0 0.0
      %2150 = vmatmul.mubr.f32.gmra.mxu0 %v2080
      %v2151 = vpop.f32.mrf.mxu0
      %v2152 = vadd.f32 %v2071, %v2151
      %v2153 = vpop.f32.mrf.mxu0
      %2154 = vmatprep.mubr.f32.mxu0 0.0
      %2155 = vmatmul.mubr.f32.gmra.mxu0 %v2083
      %v2156 = vpop.f32.mrf.mxu0
      %v2157 = vadd.f32 %v2076, %v2156
      %v2158 = vpop.f32.mrf.mxu0
      %2159 = vdwg.mxu0
      %v2160 = vsel %vm1164, %v2152, 0.0
      %2161 = vadd.xlane.f32.xlu0 %v2160
      %v2162 = vpop.xlane.xlu0 %2161
      %v2163 = vsel %vm1164, %v2157, 0.0
      %2164 = vadd.xlane.f32.xlu0 %v2163
      %v2165 = vpop.xlane.xlu0 %2164
      %v2166 = vmul.f32 %v2152, %v2152
      %v2167 = vmul.f32 %v2157, %v2157
      %v2168 = vsel %vm1164, %v2166, 0.0
      %2169 = vadd.xlane.f32.xlu0 %v2168
      %v2170 = vpop.xlane.xlu0 %2169
      %v2171 = vsel %vm1164, %v2167, 0.0
      %2172 = vadd.xlane.f32.xlu0 %v2171
      %v2173 = vpop.xlane.xlu0 %2172
      %v2175 = vrot.slane %v2162, 4
      %v2177 = vadd.f32 %v2162, %v2175
      %v2179 = vrot.slane %v2170, 4
      %v2181 = vadd.f32 %v2170, %v2179
      %v2182 = vadd.f32 %v2177, %v2165
      %v2183 = vadd.f32 %v2181, %v2173
      %v2185 = vrot.slane %v2165, 4
      %v2187 = vadd.f32 %v2182, %v2185
      %v2189 = vrot.slane %v2173, 4
      %v2191 = vadd.f32 %v2183, %v2189
      %v2192 = vrcp.pop 256.0
      %v2193 = vmul.f32 %v2187, %v2192
      %v2194 = vmul.f32 %v2191, %v2192
      %v2195 = vmul.f32 %v2193, %v2193
      %v2196 = vsub.f32 %v2194, %v2195
      %v2197 = vmax.f32 %v2196, 0.0
      %v2198 = vadd.f32 %v2197, 1e-05
      %v2199 = vrsqrt.pop %v2198
      %2201 = vset.pattern.permute.xlu0 0
      %2202 = vperm.xlu0 %2201, %v2193
      %v2203 = vpop.permute.xlu0 %2202
      %v2205 = vsub.f32 %v2152, %v2203
      %2207 = vset.pattern.permute.xlu0 0
      %2208 = vperm.xlu0 %2207, %v2199
      %v2209 = vpop.permute.xlu0 %2208
      %v2211 = vmul.f32 %v2205, %v2209
      %v2212 = vmul.f32 %v2211, 0.5
      %v2213 = vmul.f32 %v2211, 0.70710677
      %v2214 = verf.f32.pop %v2213
      %v2215 = vadd.f32 %v2214, 1.0
      %v2216 = vmul.f32 %v2212, %v2215
      %v2217 = vrot.slane %v2203, 4
      %v2219 = vsub.f32 %v2152, %v2217
      %v2220 = vrot.slane %v2209, 4
      %v2222 = vmul.f32 %v2219, %v2220
      %v2223 = vmul.f32 %v2222, 0.5
      %v2224 = vmul.f32 %v2222, 0.70710677
      %v2225 = verf.f32.pop %v2224
      %v2226 = vadd.f32 %v2225, 1.0
      %v2227 = vmul.f32 %v2223, %v2226
      %v2228 = vsub.f32 %v2157, %v2203
      %v2229 = vmul.f32 %v2228, %v2209
      %v2230 = vmul.f32 %v2229, 0.5
      %v2231 = vmul.f32 %v2229, 0.70710677
      %v2232 = verf.f32.pop %v2231
      %v2233 = vadd.f32 %v2232, 1.0
      %v2234 = vmul.f32 %v2230, %v2233
      %v2235 = vsub.f32 %v2157, %v2217
      %v2236 = vmul.f32 %v2235, %v2220
      %v2237 = vmul.f32 %v2236, 0.5
      %v2238 = vmul.f32 %v2236, 0.70710677
      %v2239 = verf.f32.pop %v2238
      %v2240 = vadd.f32 %v2239, 1.0
      %v2241 = vmul.f32 %v2237, %v2240
      %v2243 = vrot.slane %v2227, 4
      %2244 = vrot.lane.b32.xlu0 %v2243, 64
      %v2245 = vpop.permute.xlu0 %2244
      %v2248 = vrot.slane %v2241, 4
      %2249 = vrot.lane.b32.xlu0 %v2248, 64
      %v2250 = vpop.permute.xlu0 %2249
      %v2252 = vsel %vm1164, %v2216, %v2245
      %v2253 = vsel %vm1164, %v2234, %v2250
      %v2254 = vld [vmem:[%s10] sm:$0xff]
      %v2256 = vsel %vm853, %v2254, 0
      %v2259 = vsel %vm857, %v2252, 0
      %v2262 = vsel %vm857, %v2253, 0
      %2264 = vmatprep.subr.mxu0 0.0
      %2265 = vmatpush1.msra.mxu0 0.0
      %2266 = vmatprep.subr.mxu0 0.0
      %2267 = vmatpush1.msra.mxu0 0.0
      %2268 = vmatprep.subr.mxu0 0.0
      %2269 = vmatpush1.msra.mxu0 0.0
      %2270 = vmatprep.subr.mxu0 0.0
      %2271 = vmatpush1.msra.mxu0 0.0
      %2272 = vmatprep.subr.mxu0 0.0
      %2273 = vmatpush1.msra.mxu0 0.0
      %2274 = vmatprep.subr.mxu0 0.0
      %2275 = vmatpush1.msra.mxu0 0.0
      %2276 = vmatprep.subr.mxu0 0.0
      %2277 = vmatpush1.msra.mxu0 0.0
      %2278 = vmatprep.subr.mxu0 0.0
      %2279 = vmatpush1.msra.mxu0 0.0
      %2280 = vmatprep.subr.mxu0 0.0
      %2281 = vmatpush1.msra.mxu0 0.0
      %2282 = vmatprep.subr.mxu0 0.0
      %2283 = vmatpush1.msra.mxu0 0.0
      %2284 = vmatprep.subr.mxu0 0.0
      %2285 = vmatpush1.msra.mxu0 0.0
      %2286 = vmatprep.subr.mxu0 0.0
      %2287 = vmatpush1.msra.mxu0 0.0
      %2288 = vmatprep.subr.mxu0 0.0
      %2289 = vmatpush1.msra.mxu0 0.0
      %2290 = vmatprep.subr.mxu0 0.0
      %2291 = vmatpush1.msra.mxu0 0.0
      %2292 = vmatprep.subr.mxu0 0.0
      %2293 = vmatpush1.msra.mxu0 0.0
      %2294 = vmatprep.subr.mxu0 %v2262
      %2295 = vmatpush1.msra.mxu0 %v2259
      %2296 = vmatprep.subr.mxu0 0.0
      %2297 = vmatpush2.msra.mxu0 0.0
      %2298 = vmatprep.subr.mxu0 0.0
      %2299 = vmatpush2.msra.mxu0 0.0
      %2300 = vmatprep.subr.mxu0 0.0
      %2301 = vmatpush2.msra.mxu0 0.0
      %2302 = vmatprep.subr.mxu0 0.0
      %2303 = vmatpush2.msra.mxu0 0.0
      %2304 = vmatprep.subr.mxu0 0.0
      %2305 = vmatpush2.msra.mxu0 0.0
      %2306 = vmatprep.subr.mxu0 0.0
      %2307 = vmatpush2.msra.mxu0 0.0
      %2308 = vmatprep.subr.mxu0 0.0
      %2309 = vmatpush2.msra.mxu0 0.0
      %2310 = vmatprep.subr.mxu0 0.0
      %2311 = vmatpush2.msra.mxu0 0.0
      %2312 = vmatprep.subr.mxu0 0.0
      %2313 = vmatpush2.msra.mxu0 0.0
      %2314 = vmatprep.subr.mxu0 0.0
      %2315 = vmatpush2.msra.mxu0 0.0
      %2316 = vmatprep.subr.mxu0 0.0
      %2317 = vmatpush2.msra.mxu0 0.0
      %2318 = vmatprep.subr.mxu0 0.0
      %2319 = vmatpush2.msra.mxu0 0.0
      %2320 = vmatprep.subr.mxu0 0.0
      %2321 = vmatpush2.msra.mxu0 0.0
      %2322 = vmatprep.subr.mxu0 0.0
      %2323 = vmatpush2.msra.mxu0 0.0
      %2324 = vmatprep.subr.mxu0 0.0
      %2325 = vmatpush2.msra.mxu0 0.0
      %2326 = vmatprep.subr.mxu0 0.0
      %2327 = vmatpush2.msra.mxu0 0.0
      %2328 = vmatprep.mubr.f32.mxu0 0.0
      %2329 = vmatmul.mubr.f32.gmra.mxu0 %v2256
      %v2330 = vpop.f32.mrf.mxu0
      %v2331 = vadd.f32 0.0, %v2330
      %v2332 = vpop.f32.mrf.mxu0
      %v2333 = vadd.f32 0.0, %v2332
      %2334 = vdwg.mxu0
      %v2335 = vmul.f32 %v2331, %v753
      %v2336 = vmul.f32 %v2333, %v753
      %v2337 = vadd.f32 %v2335, %v740
      %v2338 = vadd.f32 %v2336, %v740
      %v2339 = vld [vmem:[%s679] sm:$0xf]
      %v2342 = vunpack.c.l.s4 1983009808
      %v2343 = vunpack.c.0.s8 %v2342
      %v2344 = vlaneseq
      %v2345 = vshrl.u32 %v2344, 7
      %v2346 = vsub.s32 %v2343, %v2345
      %v2347 = vrot.slane %v2339, %v2346
      %v2348 = vcombine.high %v2347, %v2347
      %v2351 = vsel %vm702, %v2347, 0.0
      %v2352 = vsel %vm702, %v2348, 0.0
      %v2353 = vadd.f32 %v2351, %v2352
      %2354 = vadd.xlane.f32.xlu0 %v2353
      %v2355 = vpop.xlane.xlu0 %2354
      %v2356 = vmul.f32 %v2339, %v2339
      %v2359 = vunpack.c.l.s4 1983009808
      %v2360 = vunpack.c.0.s8 %v2359
      %v2361 = vlaneseq
      %v2362 = vshrl.u32 %v2361, 7
      %v2363 = vsub.s32 %v2360, %v2362
      %v2364 = vrot.slane %v2356, %v2363
      %v2365 = vcombine.high %v2364, %v2364
      %v2368 = vsel %vm702, %v2364, 0.0
      %v2369 = vsel %vm702, %v2365, 0.0
      %v2370 = vadd.f32 %v2368, %v2369
      %2371 = vadd.xlane.f32.xlu0 %v2370
      %v2372 = vpop.xlane.xlu0 %2371
      %v2373 = vsel %vm702, %v2355, 0.0
      %v2374 = vrot.slane %v2373, 4
      %v2375 = vadd.f32 %v2373, %v2374
      %v2376 = vrot.slane %v2375, 2
      %v2377 = vadd.f32 %v2375, %v2376
      %v2378 = vrot.slane %v2377, 1
      %v2379 = vadd.f32 %v2377, %v2378
      %v2380 = vsel %vm702, %v2372, 0.0
      %v2381 = vrot.slane %v2380, 4
      %v2382 = vadd.f32 %v2380, %v2381
      %v2383 = vrot.slane %v2382, 2
      %v2384 = vadd.f32 %v2382, %v2383
      %v2385 = vrot.slane %v2384, 1
      %v2386 = vadd.f32 %v2384, %v2385
      %v2387 = vmul.f32 %v2379, %v739
      %v2388 = vmul.f32 %v2387, 512.0
      %v2389 = vmul.f32 %v2388, %v2387
      %v2390 = vsub.f32 %v2386, %v2389
      %v2391 = vmul.f32 %v2390, %v744
      %v2392 = vmax.f32 %v2391, 0.0
      %v2393 = vrsqrt.pop %v2392
      %v2394 = vmul.f32 %v2392, %v2393
      %vm2395 = vcmp.eq.f32.partialorder %v2392, inf
      %v2396 = vsel %vm2395, %v2392, %v2394
      %vm2397 = vcmp.eq.f32.partialorder %v2392, 0.0
      %v2398 = vand.u32 %v2392, 2147483648
      %v2399 = vsel %vm2397, %v2398, %v2396
      %v2400 = vsub.f32 %v2339, %v2387
      %v2401 = vadd.f32 %v2399, 1e-05
      %v2402 = vrcp.pop %v2401
      %v2403 = vmul.f32 %v2400, %v2402
      %v2404 = vld [vmem:[%s11] sm:$0xf]
      %v2407 = vunpack.c.l.s4 1983009808
      %v2408 = vunpack.c.0.s8 %v2407
      %v2409 = vlaneseq
      %v2410 = vshrl.u32 %v2409, 7
      %v2411 = vsub.s32 %v2408, %v2410
      %v2412 = vrot.slane %v2403, %v2411
      %v2413 = vcombine.high %v2412, %v2412
      %v2415 = vsel %vm768, %v2404, 0
      %v2417 = vsel %vm702, %v2412, 0
      %v2419 = vsel %vm702, %v2413, 0
      %2421 = vmatprep.subr.mxu0 0.0
      %2422 = vmatpush1.msra.mxu0 0.0
      %2423 = vmatprep.subr.mxu0 0.0
      %2424 = vmatpush1.msra.mxu0 0.0
      %2425 = vmatprep.subr.mxu0 0.0
      %2426 = vmatpush1.msra.mxu0 0.0
      %2427 = vmatprep.subr.mxu0 0.0
      %2428 = vmatpush1.msra.mxu0 0.0
      %2429 = vmatprep.subr.mxu0 0.0
      %2430 = vmatpush1.msra.mxu0 0.0
      %2431 = vmatprep.subr.mxu0 0.0
      %2432 = vmatpush1.msra.mxu0 0.0
      %2433 = vmatprep.subr.mxu0 0.0
      %2434 = vmatpush1.msra.mxu0 0.0
      %2435 = vmatprep.subr.mxu0 0.0
      %2436 = vmatpush1.msra.mxu0 0.0
      %2437 = vmatprep.subr.mxu0 0.0
      %2438 = vmatpush1.msra.mxu0 0.0
      %2439 = vmatprep.subr.mxu0 0.0
      %2440 = vmatpush1.msra.mxu0 0.0
      %2441 = vmatprep.subr.mxu0 0.0
      %2442 = vmatpush1.msra.mxu0 0.0
      %2443 = vmatprep.subr.mxu0 0.0
      %2444 = vmatpush1.msra.mxu0 0.0
      %2445 = vmatprep.subr.mxu0 0.0
      %2446 = vmatpush1.msra.mxu0 0.0
      %2447 = vmatprep.subr.mxu0 0.0
      %2448 = vmatpush1.msra.mxu0 0.0
      %2449 = vmatprep.subr.mxu0 0.0
      %2450 = vmatpush1.msra.mxu0 0.0
      %2451 = vmatprep.subr.mxu0 %v2419
      %2452 = vmatpush1.msra.mxu0 %v2417
      %2453 = vmatprep.subr.mxu0 0.0
      %2454 = vmatpush2.msra.mxu0 0.0
      %2455 = vmatprep.subr.mxu0 0.0
      %2456 = vmatpush2.msra.mxu0 0.0
      %2457 = vmatprep.subr.mxu0 0.0
      %2458 = vmatpush2.msra.mxu0 0.0
      %2459 = vmatprep.subr.mxu0 0.0
      %2460 = vmatpush2.msra.mxu0 0.0
      %2461 = vmatprep.subr.mxu0 0.0
      %2462 = vmatpush2.msra.mxu0 0.0
      %2463 = vmatprep.subr.mxu0 0.0
      %2464 = vmatpush2.msra.mxu0 0.0
      %2465 = vmatprep.subr.mxu0 0.0
      %2466 = vmatpush2.msra.mxu0 0.0
      %2467 = vmatprep.subr.mxu0 0.0
      %2468 = vmatpush2.msra.mxu0 0.0
      %2469 = vmatprep.subr.mxu0 0.0
      %2470 = vmatpush2.msra.mxu0 0.0
      %2471 = vmatprep.subr.mxu0 0.0
      %2472 = vmatpush2.msra.mxu0 0.0
      %2473 = vmatprep.subr.mxu0 0.0
      %2474 = vmatpush2.msra.mxu0 0.0
      %2475 = vmatprep.subr.mxu0 0.0
      %2476 = vmatpush2.msra.mxu0 0.0
      %2477 = vmatprep.subr.mxu0 0.0
      %2478 = vmatpush2.msra.mxu0 0.0
      %2479 = vmatprep.subr.mxu0 0.0
      %2480 = vmatpush2.msra.mxu0 0.0
      %2481 = vmatprep.subr.mxu0 0.0
      %2482 = vmatpush2.msra.mxu0 0.0
      %2483 = vmatprep.subr.mxu0 0.0
      %2484 = vmatpush2.msra.mxu0 0.0
      %2485 = vmatprep.mubr.f32.mxu0 0.0
      %2486 = vmatmul.mubr.f32.gmra.mxu0 %v2415
      %v2487 = vpop.f32.mrf.mxu0
      %v2488 = vadd.f32 0.0, %v2487
      %v2489 = vpop.f32.mrf.mxu0
      %v2490 = vadd.f32 0.0, %v2489
      %2491 = vdwg.mxu0
      %v2492 = vld [vmem:[%s12] sm:$0xff]
      %s2493 = scalar_lea.vmem %s12, 8
      %v2494 = vld [vmem:[%s2493] sm:$0xff]
      %2496 = vrot.lane.b32.xlu0 %v2488, 64
      %v2497 = vpop.permute.xlu0 %2496
      %v2499 = vsel %vm853, %v2494, 0
      %v2501 = vsel %vm857, %v2497, 0
      %2503 = vmatprep.subr.mxu0 0.0
      %2504 = vmatpush1.msra.mxu0 0.0
      %2505 = vmatprep.subr.mxu0 0.0
      %2506 = vmatpush1.msra.mxu0 0.0
      %2507 = vmatprep.subr.mxu0 0.0
      %2508 = vmatpush1.msra.mxu0 0.0
      %2509 = vmatprep.subr.mxu0 0.0
      %2510 = vmatpush1.msra.mxu0 0.0
      %2511 = vmatprep.subr.mxu0 0.0
      %2512 = vmatpush1.msra.mxu0 0.0
      %2513 = vmatprep.subr.mxu0 0.0
      %2514 = vmatpush1.msra.mxu0 0.0
      %2515 = vmatprep.subr.mxu0 0.0
      %2516 = vmatpush1.msra.mxu0 0.0
      %2517 = vmatprep.subr.mxu0 0.0
      %2518 = vmatpush1.msra.mxu0 0.0
      %2519 = vmatprep.subr.mxu0 0.0
      %2520 = vmatpush1.msra.mxu0 0.0
      %2521 = vmatprep.subr.mxu0 0.0
      %2522 = vmatpush1.msra.mxu0 0.0
      %2523 = vmatprep.subr.mxu0 0.0
      %2524 = vmatpush1.msra.mxu0 0.0
      %2525 = vmatprep.subr.mxu0 0.0
      %2526 = vmatpush1.msra.mxu0 0.0
      %2527 = vmatprep.subr.mxu0 0.0
      %2528 = vmatpush1.msra.mxu0 0.0
      %2529 = vmatprep.subr.mxu0 0.0
      %2530 = vmatpush1.msra.mxu0 0.0
      %2531 = vmatprep.subr.mxu0 0.0
      %2532 = vmatpush1.msra.mxu0 0.0
      %2533 = vmatprep.subr.mxu0 0.0
      %2534 = vmatpush1.msra.mxu0 %v2501
      %2535 = vmatprep.subr.mxu0 0.0
      %2536 = vmatpush2.msra.mxu0 0.0
      %2537 = vmatprep.subr.mxu0 0.0
      %2538 = vmatpush2.msra.mxu0 0.0
      %2539 = vmatprep.subr.mxu0 0.0
      %2540 = vmatpush2.msra.mxu0 0.0
      %2541 = vmatprep.subr.mxu0 0.0
      %2542 = vmatpush2.msra.mxu0 0.0
      %2543 = vmatprep.subr.mxu0 0.0
      %2544 = vmatpush2.msra.mxu0 0.0
      %2545 = vmatprep.subr.mxu0 0.0
      %2546 = vmatpush2.msra.mxu0 0.0
      %2547 = vmatprep.subr.mxu0 0.0
      %2548 = vmatpush2.msra.mxu0 0.0
      %2549 = vmatprep.subr.mxu0 0.0
      %2550 = vmatpush2.msra.mxu0 0.0
      %2551 = vmatprep.subr.mxu0 0.0
      %2552 = vmatpush2.msra.mxu0 0.0
      %2553 = vmatprep.subr.mxu0 0.0
      %2554 = vmatpush2.msra.mxu0 0.0
      %2555 = vmatprep.subr.mxu0 0.0
      %2556 = vmatpush2.msra.mxu0 0.0
      %2557 = vmatprep.subr.mxu0 0.0
      %2558 = vmatpush2.msra.mxu0 0.0
      %2559 = vmatprep.subr.mxu0 0.0
      %2560 = vmatpush2.msra.mxu0 0.0
      %2561 = vmatprep.subr.mxu0 0.0
      %2562 = vmatpush2.msra.mxu0 0.0
      %2563 = vmatprep.subr.mxu0 0.0
      %2564 = vmatpush2.msra.mxu0 0.0
      %2565 = vmatprep.subr.mxu0 0.0
      %2566 = vmatpush2.msra.mxu0 0.0
      %2567 = vmatprep.mubr.f32.mxu0 0.0
      %2568 = vmatmul.mubr.f32.gmra.mxu0 %v2499
      %v2569 = vpop.f32.mrf.mxu0
      %v2570 = vadd.f32 0.0, %v2569
      %v2571 = vpop.f32.mrf.mxu0
      %2572 = vdwg.mxu0
      %v2574 = vsel %vm853, %v2492, 0
      %v2576 = vsel %vm857, %v2488, 0
      %2578 = vmatprep.subr.mxu0 0.0
      %2579 = vmatpush1.msra.mxu0 0.0
      %2580 = vmatprep.subr.mxu0 0.0
      %2581 = vmatpush1.msra.mxu0 0.0
      %2582 = vmatprep.subr.mxu0 0.0
      %2583 = vmatpush1.msra.mxu0 0.0
      %2584 = vmatprep.subr.mxu0 0.0
      %2585 = vmatpush1.msra.mxu0 0.0
      %2586 = vmatprep.subr.mxu0 0.0
      %2587 = vmatpush1.msra.mxu0 0.0
      %2588 = vmatprep.subr.mxu0 0.0
      %2589 = vmatpush1.msra.mxu0 0.0
      %2590 = vmatprep.subr.mxu0 0.0
      %2591 = vmatpush1.msra.mxu0 0.0
      %2592 = vmatprep.subr.mxu0 0.0
      %2593 = vmatpush1.msra.mxu0 0.0
      %2594 = vmatprep.subr.mxu0 0.0
      %2595 = vmatpush1.msra.mxu0 0.0
      %2596 = vmatprep.subr.mxu0 0.0
      %2597 = vmatpush1.msra.mxu0 0.0
      %2598 = vmatprep.subr.mxu0 0.0
      %2599 = vmatpush1.msra.mxu0 0.0
      %2600 = vmatprep.subr.mxu0 0.0
      %2601 = vmatpush1.msra.mxu0 0.0
      %2602 = vmatprep.subr.mxu0 0.0
      %2603 = vmatpush1.msra.mxu0 0.0
      %2604 = vmatprep.subr.mxu0 0.0
      %2605 = vmatpush1.msra.mxu0 0.0
      %2606 = vmatprep.subr.mxu0 0.0
      %2607 = vmatpush1.msra.mxu0 0.0
      %2608 = vmatprep.subr.mxu0 0.0
      %2609 = vmatpush1.msra.mxu0 %v2576
      %2610 = vmatprep.subr.mxu0 0.0
      %2611 = vmatpush2.msra.mxu0 0.0
      %2612 = vmatprep.subr.mxu0 0.0
      %2613 = vmatpush2.msra.mxu0 0.0
      %2614 = vmatprep.subr.mxu0 0.0
      %2615 = vmatpush2.msra.mxu0 0.0
      %2616 = vmatprep.subr.mxu0 0.0
      %2617 = vmatpush2.msra.mxu0 0.0
      %2618 = vmatprep.subr.mxu0 0.0
      %2619 = vmatpush2.msra.mxu0 0.0
      %2620 = vmatprep.subr.mxu0 0.0
      %2621 = vmatpush2.msra.mxu0 0.0
      %2622 = vmatprep.subr.mxu0 0.0
      %2623 = vmatpush2.msra.mxu0 0.0
      %2624 = vmatprep.subr.mxu0 0.0
      %2625 = vmatpush2.msra.mxu0 0.0
      %2626 = vmatprep.subr.mxu0 0.0
      %2627 = vmatpush2.msra.mxu0 0.0
      %2628 = vmatprep.subr.mxu0 0.0
      %2629 = vmatpush2.msra.mxu0 0.0
      %2630 = vmatprep.subr.mxu0 0.0
      %2631 = vmatpush2.msra.mxu0 0.0
      %2632 = vmatprep.subr.mxu0 0.0
      %2633 = vmatpush2.msra.mxu0 0.0
      %2634 = vmatprep.subr.mxu0 0.0
      %2635 = vmatpush2.msra.mxu0 0.0
      %2636 = vmatprep.subr.mxu0 0.0
      %2637 = vmatpush2.msra.mxu0 0.0
      %2638 = vmatprep.subr.mxu0 0.0
      %2639 = vmatpush2.msra.mxu0 0.0
      %2640 = vmatprep.subr.mxu0 0.0
      %2641 = vmatpush2.msra.mxu0 0.0
      %2642 = vmatprep.mubr.f32.mxu0 0.0
      %2643 = vmatmul.mubr.f32.gmra.mxu0 %v2574
      %v2644 = vpop.f32.mrf.mxu0
      %v2645 = vadd.f32 %v2570, %v2644
      %v2646 = vpop.f32.mrf.mxu0
      %2647 = vdwg.mxu0
      %s2648 = scalar_lea.vmem %s12, 16
      %v2649 = vld [vmem:[%s2648] sm:$0xff]
      %v2651 = vsel %vm853, %v2649, 0
      %v2654 = vsel %vm857, %v2490, 0
      %2656 = vmatprep.subr.mxu0 0.0
      %2657 = vmatpush1.msra.mxu0 0.0
      %2658 = vmatprep.subr.mxu0 0.0
      %2659 = vmatpush1.msra.mxu0 0.0
      %2660 = vmatprep.subr.mxu0 0.0
      %2661 = vmatpush1.msra.mxu0 0.0
      %2662 = vmatprep.subr.mxu0 0.0
      %2663 = vmatpush1.msra.mxu0 0.0
      %2664 = vmatprep.subr.mxu0 0.0
      %2665 = vmatpush1.msra.mxu0 0.0
      %2666 = vmatprep.subr.mxu0 0.0
      %2667 = vmatpush1.msra.mxu0 0.0
      %2668 = vmatprep.subr.mxu0 0.0
      %2669 = vmatpush1.msra.mxu0 0.0
      %2670 = vmatprep.subr.mxu0 0.0
      %2671 = vmatpush1.msra.mxu0 0.0
      %2672 = vmatprep.subr.mxu0 0.0
      %2673 = vmatpush1.msra.mxu0 0.0
      %2674 = vmatprep.subr.mxu0 0.0
      %2675 = vmatpush1.msra.mxu0 0.0
      %2676 = vmatprep.subr.mxu0 0.0
      %2677 = vmatpush1.msra.mxu0 0.0
      %2678 = vmatprep.subr.mxu0 0.0
      %2679 = vmatpush1.msra.mxu0 0.0
      %2680 = vmatprep.subr.mxu0 0.0
      %2681 = vmatpush1.msra.mxu0 0.0
      %2682 = vmatprep.subr.mxu0 0.0
      %2683 = vmatpush1.msra.mxu0 0.0
      %2684 = vmatprep.subr.mxu0 0.0
      %2685 = vmatpush1.msra.mxu0 0.0
      %2686 = vmatprep.subr.mxu0 0.0
      %2687 = vmatpush1.msra.mxu0 %v2654
      %2688 = vmatprep.subr.mxu0 0.0
      %2689 = vmatpush2.msra.mxu0 0.0
      %2690 = vmatprep.subr.mxu0 0.0
      %2691 = vmatpush2.msra.mxu0 0.0
      %2692 = vmatprep.subr.mxu0 0.0
      %2693 = vmatpush2.msra.mxu0 0.0
      %2694 = vmatprep.subr.mxu0 0.0
      %2695 = vmatpush2.msra.mxu0 0.0
      %2696 = vmatprep.subr.mxu0 0.0
      %2697 = vmatpush2.msra.mxu0 0.0
      %2698 = vmatprep.subr.mxu0 0.0
      %2699 = vmatpush2.msra.mxu0 0.0
      %2700 = vmatprep.subr.mxu0 0.0
      %2701 = vmatpush2.msra.mxu0 0.0
      %2702 = vmatprep.subr.mxu0 0.0
      %2703 = vmatpush2.msra.mxu0 0.0
      %2704 = vmatprep.subr.mxu0 0.0
      %2705 = vmatpush2.msra.mxu0 0.0
      %2706 = vmatprep.subr.mxu0 0.0
      %2707 = vmatpush2.msra.mxu0 0.0
      %2708 = vmatprep.subr.mxu0 0.0
      %2709 = vmatpush2.msra.mxu0 0.0
      %2710 = vmatprep.subr.mxu0 0.0
      %2711 = vmatpush2.msra.mxu0 0.0
      %2712 = vmatprep.subr.mxu0 0.0
      %2713 = vmatpush2.msra.mxu0 0.0
      %2714 = vmatprep.subr.mxu0 0.0
      %2715 = vmatpush2.msra.mxu0 0.0
      %2716 = vmatprep.subr.mxu0 0.0
      %2717 = vmatpush2.msra.mxu0 0.0
      %2718 = vmatprep.subr.mxu0 0.0
      %2719 = vmatpush2.msra.mxu0 0.0
      %2720 = vmatprep.mubr.f32.mxu0 0.0
      %2721 = vmatmul.mubr.f32.gmra.mxu0 %v2651
      %v2722 = vpop.f32.mrf.mxu0
      %v2723 = vadd.f32 0.0, %v2722
      %v2724 = vpop.f32.mrf.mxu0
      %2725 = vdwg.mxu0
      %v2726 = vadd.f32 %v2645, %v2723
      %s2727 = scalar_lea.vmem %s12, 24
      %v2728 = vld [vmem:[%s2727] sm:$0xff]
      %2729 = vrot.lane.b32.xlu0 %v2490, 64
      %v2730 = vpop.permute.xlu0 %2729
      %v2732 = vsel %vm853, %v2728, 0
      %v2734 = vsel %vm857, %v2730, 0
      %2736 = vmatprep.subr.mxu0 0.0
      %2737 = vmatpush1.msra.mxu0 0.0
      %2738 = vmatprep.subr.mxu0 0.0
      %2739 = vmatpush1.msra.mxu0 0.0
      %2740 = vmatprep.subr.mxu0 0.0
      %2741 = vmatpush1.msra.mxu0 0.0
      %2742 = vmatprep.subr.mxu0 0.0
      %2743 = vmatpush1.msra.mxu0 0.0
      %2744 = vmatprep.subr.mxu0 0.0
      %2745 = vmatpush1.msra.mxu0 0.0
      %2746 = vmatprep.subr.mxu0 0.0
      %2747 = vmatpush1.msra.mxu0 0.0
      %2748 = vmatprep.subr.mxu0 0.0
      %2749 = vmatpush1.msra.mxu0 0.0
      %2750 = vmatprep.subr.mxu0 0.0
      %2751 = vmatpush1.msra.mxu0 0.0
      %2752 = vmatprep.subr.mxu0 0.0
      %2753 = vmatpush1.msra.mxu0 0.0
      %2754 = vmatprep.subr.mxu0 0.0
      %2755 = vmatpush1.msra.mxu0 0.0
      %2756 = vmatprep.subr.mxu0 0.0
      %2757 = vmatpush1.msra.mxu0 0.0
      %2758 = vmatprep.subr.mxu0 0.0
      %2759 = vmatpush1.msra.mxu0 0.0
      %2760 = vmatprep.subr.mxu0 0.0
      %2761 = vmatpush1.msra.mxu0 0.0
      %2762 = vmatprep.subr.mxu0 0.0
      %2763 = vmatpush1.msra.mxu0 0.0
      %2764 = vmatprep.subr.mxu0 0.0
      %2765 = vmatpush1.msra.mxu0 0.0
      %2766 = vmatprep.subr.mxu0 0.0
      %2767 = vmatpush1.msra.mxu0 %v2734
      %2768 = vmatprep.subr.mxu0 0.0
      %2769 = vmatpush2.msra.mxu0 0.0
      %2770 = vmatprep.subr.mxu0 0.0
      %2771 = vmatpush2.msra.mxu0 0.0
      %2772 = vmatprep.subr.mxu0 0.0
      %2773 = vmatpush2.msra.mxu0 0.0
      %2774 = vmatprep.subr.mxu0 0.0
      %2775 = vmatpush2.msra.mxu0 0.0
      %2776 = vmatprep.subr.mxu0 0.0
      %2777 = vmatpush2.msra.mxu0 0.0
      %2778 = vmatprep.subr.mxu0 0.0
      %2779 = vmatpush2.msra.mxu0 0.0
      %2780 = vmatprep.subr.mxu0 0.0
      %2781 = vmatpush2.msra.mxu0 0.0
      %2782 = vmatprep.subr.mxu0 0.0
      %2783 = vmatpush2.msra.mxu0 0.0
      %2784 = vmatprep.subr.mxu0 0.0
      %2785 = vmatpush2.msra.mxu0 0.0
      %2786 = vmatprep.subr.mxu0 0.0
      %2787 = vmatpush2.msra.mxu0 0.0
      %2788 = vmatprep.subr.mxu0 0.0
      %2789 = vmatpush2.msra.mxu0 0.0
      %2790 = vmatprep.subr.mxu0 0.0
      %2791 = vmatpush2.msra.mxu0 0.0
      %2792 = vmatprep.subr.mxu0 0.0
      %2793 = vmatpush2.msra.mxu0 0.0
      %2794 = vmatprep.subr.mxu0 0.0
      %2795 = vmatpush2.msra.mxu0 0.0
      %2796 = vmatprep.subr.mxu0 0.0
      %2797 = vmatpush2.msra.mxu0 0.0
      %2798 = vmatprep.subr.mxu0 0.0
      %2799 = vmatpush2.msra.mxu0 0.0
      %2800 = vmatprep.mubr.f32.mxu0 0.0
      %2801 = vmatmul.mubr.f32.gmra.mxu0 %v2732
      %v2802 = vpop.f32.mrf.mxu0
      %v2803 = vadd.f32 0.0, %v2802
      %v2804 = vpop.f32.mrf.mxu0
      %2805 = vdwg.mxu0
      %v2806 = vadd.f32 %v2726, %v2803
      %v2807 = vsel %vm1164, %v2806, 0.0
      %2808 = vadd.xlane.f32.xlu0 %v2807
      %v2809 = vpop.xlane.xlu0 %2808
      %v2810 = vmul.f32 %v2806, %v2806
      %v2811 = vsel %vm1164, %v2810, 0.0
      %2812 = vadd.xlane.f32.xlu0 %v2811
      %v2813 = vpop.xlane.xlu0 %2812
      %v2814 = vmul.f32 %v2809, %v1172
      %v2815 = vmul.f32 %v2813, %v1172
      %v2816 = vmul.f32 %v2814, %v2814
      %v2817 = vsub.f32 %v2815, %v2816
      %v2818 = vmax.f32 %v2817, 0.0
      %v2819 = vsub.f32 %v2806, %v2814
      %v2820 = vadd.f32 %v2818, 1e-05
      %v2821 = vrsqrt.pop %v2820
      %v2822 = vmul.f32 %v2819, %v2821
      %v2823 = vmul.f32 %v2822, 0.5
      %v2824 = vmul.f32 %v2822, 0.70710677
      %v2825 = verf.f32.pop %v2824
      %v2826 = vadd.f32 %v2825, 1.0
      %v2827 = vmul.f32 %v2823, %v2826
      %v2828 = vld [vmem:[%s13] sm:$0xff]
      %v2829 = vld [vmem:[%s13 + $0x8] sm:$0xff]
      %s2830 = scalar_lea.vmem %s13, 16
      %v2831 = vld [vmem:[%s2830] sm:$0xff]
      %v2832 = vld [vmem:[%s2830 + $0x8] sm:$0xff]
      %2834 = vrot.lane.b32.xlu0 %v2827, 112
      %v2835 = vpop.permute.xlu0 %2834
      %v2838 = vsel %vm1196, %v2831, 0
      %v2841 = vsel %vm1196, %v2832, 0
      %2843 = vmatprep.subr.mxu0 0.0
      %2844 = vmatpush1.msra.mxu0 0.0
      %2845 = vmatprep.subr.mxu0 0.0
      %2846 = vmatpush1.msra.mxu0 0.0
      %2847 = vmatprep.subr.mxu0 0.0
      %2848 = vmatpush1.msra.mxu0 0.0
      %2849 = vmatprep.subr.mxu0 0.0
      %2850 = vmatpush1.msra.mxu0 0.0
      %2851 = vmatprep.subr.mxu0 0.0
      %2852 = vmatpush1.msra.mxu0 0.0
      %2853 = vmatprep.subr.mxu0 0.0
      %2854 = vmatpush1.msra.mxu0 0.0
      %2855 = vmatprep.subr.mxu0 0.0
      %2856 = vmatpush1.msra.mxu0 0.0
      %2857 = vmatprep.subr.mxu0 0.0
      %2858 = vmatpush1.msra.mxu0 0.0
      %2859 = vmatprep.subr.mxu0 0.0
      %2860 = vmatpush1.msra.mxu0 0.0
      %2861 = vmatprep.subr.mxu0 0.0
      %2862 = vmatpush1.msra.mxu0 0.0
      %2863 = vmatprep.subr.mxu0 0.0
      %2864 = vmatpush1.msra.mxu0 0.0
      %2865 = vmatprep.subr.mxu0 0.0
      %2866 = vmatpush1.msra.mxu0 0.0
      %2867 = vmatprep.subr.mxu0 0.0
      %2868 = vmatpush1.msra.mxu0 0.0
      %2869 = vmatprep.subr.mxu0 0.0
      %2870 = vmatpush1.msra.mxu0 0.0
      %2871 = vmatprep.subr.mxu0 0.0
      %2872 = vmatpush1.msra.mxu0 0.0
      %2873 = vmatprep.subr.mxu0 0.0
      %2874 = vmatpush1.msra.mxu0 %v2835
      %2875 = vmatprep.subr.mxu0 0.0
      %2876 = vmatpush2.msra.mxu0 0.0
      %2877 = vmatprep.subr.mxu0 0.0
      %2878 = vmatpush2.msra.mxu0 0.0
      %2879 = vmatprep.subr.mxu0 0.0
      %2880 = vmatpush2.msra.mxu0 0.0
      %2881 = vmatprep.subr.mxu0 0.0
      %2882 = vmatpush2.msra.mxu0 0.0
      %2883 = vmatprep.subr.mxu0 0.0
      %2884 = vmatpush2.msra.mxu0 0.0
      %2885 = vmatprep.subr.mxu0 0.0
      %2886 = vmatpush2.msra.mxu0 0.0
      %2887 = vmatprep.subr.mxu0 0.0
      %2888 = vmatpush2.msra.mxu0 0.0
      %2889 = vmatprep.subr.mxu0 0.0
      %2890 = vmatpush2.msra.mxu0 0.0
      %2891 = vmatprep.subr.mxu0 0.0
      %2892 = vmatpush2.msra.mxu0 0.0
      %2893 = vmatprep.subr.mxu0 0.0
      %2894 = vmatpush2.msra.mxu0 0.0
      %2895 = vmatprep.subr.mxu0 0.0
      %2896 = vmatpush2.msra.mxu0 0.0
      %2897 = vmatprep.subr.mxu0 0.0
      %2898 = vmatpush2.msra.mxu0 0.0
      %2899 = vmatprep.subr.mxu0 0.0
      %2900 = vmatpush2.msra.mxu0 0.0
      %2901 = vmatprep.subr.mxu0 0.0
      %2902 = vmatpush2.msra.mxu0 0.0
      %2903 = vmatprep.subr.mxu0 0.0
      %2904 = vmatpush2.msra.mxu0 0.0
      %2905 = vmatprep.subr.mxu0 0.0
      %2906 = vmatpush2.msra.mxu0 0.0
      %2907 = vmatprep.mubr.f32.mxu0 0.0
      %2908 = vmatmul.mubr.f32.gmra.mxu0 %v2838
      %v2909 = vpop.f32.mrf.mxu0
      %v2910 = vadd.f32 0.0, %v2909
      %v2911 = vpop.f32.mrf.mxu0
      %2912 = vmatprep.mubr.f32.mxu0 0.0
      %2913 = vmatmul.mubr.f32.gmra.mxu0 %v2841
      %v2914 = vpop.f32.mrf.mxu0
      %v2915 = vadd.f32 0.0, %v2914
      %v2916 = vpop.f32.mrf.mxu0
      %2917 = vdwg.mxu0
      %v2919 = vsel %vm1196, %v2828, 0
      %v2922 = vsel %vm1196, %v2829, 0
      %2924 = vmatprep.subr.mxu0 0.0
      %2925 = vmatpush1.msra.mxu0 0.0
      %2926 = vmatprep.subr.mxu0 0.0
      %2927 = vmatpush1.msra.mxu0 0.0
      %2928 = vmatprep.subr.mxu0 0.0
      %2929 = vmatpush1.msra.mxu0 0.0
      %2930 = vmatprep.subr.mxu0 0.0
      %2931 = vmatpush1.msra.mxu0 0.0
      %2932 = vmatprep.subr.mxu0 0.0
      %2933 = vmatpush1.msra.mxu0 0.0
      %2934 = vmatprep.subr.mxu0 0.0
      %2935 = vmatpush1.msra.mxu0 0.0
      %2936 = vmatprep.subr.mxu0 0.0
      %2937 = vmatpush1.msra.mxu0 0.0
      %2938 = vmatprep.subr.mxu0 0.0
      %2939 = vmatpush1.msra.mxu0 0.0
      %2940 = vmatprep.subr.mxu0 0.0
      %2941 = vmatpush1.msra.mxu0 0.0
      %2942 = vmatprep.subr.mxu0 0.0
      %2943 = vmatpush1.msra.mxu0 0.0
      %2944 = vmatprep.subr.mxu0 0.0
      %2945 = vmatpush1.msra.mxu0 0.0
      %2946 = vmatprep.subr.mxu0 0.0
      %2947 = vmatpush1.msra.mxu0 0.0
      %2948 = vmatprep.subr.mxu0 0.0
      %2949 = vmatpush1.msra.mxu0 0.0
      %2950 = vmatprep.subr.mxu0 0.0
      %2951 = vmatpush1.msra.mxu0 0.0
      %2952 = vmatprep.subr.mxu0 0.0
      %2953 = vmatpush1.msra.mxu0 0.0
      %2954 = vmatprep.subr.mxu0 0.0
      %2955 = vmatpush1.msra.mxu0 %v2827
      %2956 = vmatprep.subr.mxu0 0.0
      %2957 = vmatpush2.msra.mxu0 0.0
      %2958 = vmatprep.subr.mxu0 0.0
      %2959 = vmatpush2.msra.mxu0 0.0
      %2960 = vmatprep.subr.mxu0 0.0
      %2961 = vmatpush2.msra.mxu0 0.0
      %2962 = vmatprep.subr.mxu0 0.0
      %2963 = vmatpush2.msra.mxu0 0.0
      %2964 = vmatprep.subr.mxu0 0.0
      %2965 = vmatpush2.msra.mxu0 0.0
      %2966 = vmatprep.subr.mxu0 0.0
      %2967 = vmatpush2.msra.mxu0 0.0
      %2968 = vmatprep.subr.mxu0 0.0
      %2969 = vmatpush2.msra.mxu0 0.0
      %2970 = vmatprep.subr.mxu0 0.0
      %2971 = vmatpush2.msra.mxu0 0.0
      %2972 = vmatprep.subr.mxu0 0.0
      %2973 = vmatpush2.msra.mxu0 0.0
      %2974 = vmatprep.subr.mxu0 0.0
      %2975 = vmatpush2.msra.mxu0 0.0
      %2976 = vmatprep.subr.mxu0 0.0
      %2977 = vmatpush2.msra.mxu0 0.0
      %2978 = vmatprep.subr.mxu0 0.0
      %2979 = vmatpush2.msra.mxu0 0.0
      %2980 = vmatprep.subr.mxu0 0.0
      %2981 = vmatpush2.msra.mxu0 0.0
      %2982 = vmatprep.subr.mxu0 0.0
      %2983 = vmatpush2.msra.mxu0 0.0
      %2984 = vmatprep.subr.mxu0 0.0
      %2985 = vmatpush2.msra.mxu0 0.0
      %2986 = vmatprep.subr.mxu0 0.0
      %2987 = vmatpush2.msra.mxu0 0.0
      %2988 = vmatprep.mubr.f32.mxu0 0.0
      %2989 = vmatmul.mubr.f32.gmra.mxu0 %v2919
      %v2990 = vpop.f32.mrf.mxu0
      %v2991 = vadd.f32 %v2910, %v2990
      %v2992 = vpop.f32.mrf.mxu0
      %2993 = vmatprep.mubr.f32.mxu0 0.0
      %2994 = vmatmul.mubr.f32.gmra.mxu0 %v2922
      %v2995 = vpop.f32.mrf.mxu0
      %v2996 = vadd.f32 %v2915, %v2995
      %v2997 = vpop.f32.mrf.mxu0
      %2998 = vdwg.mxu0
      %s2999 = scalar_lea.vmem %s13, 32
      %v3000 = vld [vmem:[%s2999] sm:$0xff]
      %v3001 = vld [vmem:[%s2999 + $0x8] sm:$0xff]
      %3002 = vrot.lane.b32.xlu0 %v2827, 96
      %v3003 = vpop.permute.xlu0 %3002
      %v3006 = vsel %vm1196, %v3000, 0
      %v3009 = vsel %vm1196, %v3001, 0
      %3011 = vmatprep.subr.mxu0 0.0
      %3012 = vmatpush1.msra.mxu0 0.0
      %3013 = vmatprep.subr.mxu0 0.0
      %3014 = vmatpush1.msra.mxu0 0.0
      %3015 = vmatprep.subr.mxu0 0.0
      %3016 = vmatpush1.msra.mxu0 0.0
      %3017 = vmatprep.subr.mxu0 0.0
      %3018 = vmatpush1.msra.mxu0 0.0
      %3019 = vmatprep.subr.mxu0 0.0
      %3020 = vmatpush1.msra.mxu0 0.0
      %3021 = vmatprep.subr.mxu0 0.0
      %3022 = vmatpush1.msra.mxu0 0.0
      %3023 = vmatprep.subr.mxu0 0.0
      %3024 = vmatpush1.msra.mxu0 0.0
      %3025 = vmatprep.subr.mxu0 0.0
      %3026 = vmatpush1.msra.mxu0 0.0
      %3027 = vmatprep.subr.mxu0 0.0
      %3028 = vmatpush1.msra.mxu0 0.0
      %3029 = vmatprep.subr.mxu0 0.0
      %3030 = vmatpush1.msra.mxu0 0.0
      %3031 = vmatprep.subr.mxu0 0.0
      %3032 = vmatpush1.msra.mxu0 0.0
      %3033 = vmatprep.subr.mxu0 0.0
      %3034 = vmatpush1.msra.mxu0 0.0
      %3035 = vmatprep.subr.mxu0 0.0
      %3036 = vmatpush1.msra.mxu0 0.0
      %3037 = vmatprep.subr.mxu0 0.0
      %3038 = vmatpush1.msra.mxu0 0.0
      %3039 = vmatprep.subr.mxu0 0.0
      %3040 = vmatpush1.msra.mxu0 0.0
      %3041 = vmatprep.subr.mxu0 0.0
      %3042 = vmatpush1.msra.mxu0 %v3003
      %3043 = vmatprep.subr.mxu0 0.0
      %3044 = vmatpush2.msra.mxu0 0.0
      %3045 = vmatprep.subr.mxu0 0.0
      %3046 = vmatpush2.msra.mxu0 0.0
      %3047 = vmatprep.subr.mxu0 0.0
      %3048 = vmatpush2.msra.mxu0 0.0
      %3049 = vmatprep.subr.mxu0 0.0
      %3050 = vmatpush2.msra.mxu0 0.0
      %3051 = vmatprep.subr.mxu0 0.0
      %3052 = vmatpush2.msra.mxu0 0.0
      %3053 = vmatprep.subr.mxu0 0.0
      %3054 = vmatpush2.msra.mxu0 0.0
      %3055 = vmatprep.subr.mxu0 0.0
      %3056 = vmatpush2.msra.mxu0 0.0
      %3057 = vmatprep.subr.mxu0 0.0
      %3058 = vmatpush2.msra.mxu0 0.0
      %3059 = vmatprep.subr.mxu0 0.0
      %3060 = vmatpush2.msra.mxu0 0.0
      %3061 = vmatprep.subr.mxu0 0.0
      %3062 = vmatpush2.msra.mxu0 0.0
      %3063 = vmatprep.subr.mxu0 0.0
      %3064 = vmatpush2.msra.mxu0 0.0
      %3065 = vmatprep.subr.mxu0 0.0
      %3066 = vmatpush2.msra.mxu0 0.0
      %3067 = vmatprep.subr.mxu0 0.0
      %3068 = vmatpush2.msra.mxu0 0.0
      %3069 = vmatprep.subr.mxu0 0.0
      %3070 = vmatpush2.msra.mxu0 0.0
      %3071 = vmatprep.subr.mxu0 0.0
      %3072 = vmatpush2.msra.mxu0 0.0
      %3073 = vmatprep.subr.mxu0 0.0
      %3074 = vmatpush2.msra.mxu0 0.0
      %3075 = vmatprep.mubr.f32.mxu0 0.0
      %3076 = vmatmul.mubr.f32.gmra.mxu0 %v3006
      %v3077 = vpop.f32.mrf.mxu0
      %v3078 = vadd.f32 0.0, %v3077
      %v3079 = vpop.f32.mrf.mxu0
      %3080 = vmatprep.mubr.f32.mxu0 0.0
      %3081 = vmatmul.mubr.f32.gmra.mxu0 %v3009
      %v3082 = vpop.f32.mrf.mxu0
      %v3083 = vadd.f32 0.0, %v3082
      %v3084 = vpop.f32.mrf.mxu0
      %3085 = vdwg.mxu0
      %v3086 = vadd.f32 %v2991, %v3078
      %v3087 = vadd.f32 %v2996, %v3083
      %s3088 = scalar_lea.vmem %s13, 48
      %v3089 = vld [vmem:[%s3088] sm:$0xff]
      %v3090 = vld [vmem:[%s3088 + $0x8] sm:$0xff]
      %3091 = vrot.lane.b32.xlu0 %v2827, 80
      %v3092 = vpop.permute.xlu0 %3091
      %v3095 = vsel %vm1196, %v3089, 0
      %v3098 = vsel %vm1196, %v3090, 0
      %3100 = vmatprep.subr.mxu0 0.0
      %3101 = vmatpush1.msra.mxu0 0.0
      %3102 = vmatprep.subr.mxu0 0.0
      %3103 = vmatpush1.msra.mxu0 0.0
      %3104 = vmatprep.subr.mxu0 0.0
      %3105 = vmatpush1.msra.mxu0 0.0
      %3106 = vmatprep.subr.mxu0 0.0
      %3107 = vmatpush1.msra.mxu0 0.0
      %3108 = vmatprep.subr.mxu0 0.0
      %3109 = vmatpush1.msra.mxu0 0.0
      %3110 = vmatprep.subr.mxu0 0.0
      %3111 = vmatpush1.msra.mxu0 0.0
      %3112 = vmatprep.subr.mxu0 0.0
      %3113 = vmatpush1.msra.mxu0 0.0
      %3114 = vmatprep.subr.mxu0 0.0
      %3115 = vmatpush1.msra.mxu0 0.0
      %3116 = vmatprep.subr.mxu0 0.0
      %3117 = vmatpush1.msra.mxu0 0.0
      %3118 = vmatprep.subr.mxu0 0.0
      %3119 = vmatpush1.msra.mxu0 0.0
      %3120 = vmatprep.subr.mxu0 0.0
      %3121 = vmatpush1.msra.mxu0 0.0
      %3122 = vmatprep.subr.mxu0 0.0
      %3123 = vmatpush1.msra.mxu0 0.0
      %3124 = vmatprep.subr.mxu0 0.0
      %3125 = vmatpush1.msra.mxu0 0.0
      %3126 = vmatprep.subr.mxu0 0.0
      %3127 = vmatpush1.msra.mxu0 0.0
      %3128 = vmatprep.subr.mxu0 0.0
      %3129 = vmatpush1.msra.mxu0 0.0
      %3130 = vmatprep.subr.mxu0 0.0
      %3131 = vmatpush1.msra.mxu0 %v3092
      %3132 = vmatprep.subr.mxu0 0.0
      %3133 = vmatpush2.msra.mxu0 0.0
      %3134 = vmatprep.subr.mxu0 0.0
      %3135 = vmatpush2.msra.mxu0 0.0
      %3136 = vmatprep.subr.mxu0 0.0
      %3137 = vmatpush2.msra.mxu0 0.0
      %3138 = vmatprep.subr.mxu0 0.0
      %3139 = vmatpush2.msra.mxu0 0.0
      %3140 = vmatprep.subr.mxu0 0.0
      %3141 = vmatpush2.msra.mxu0 0.0
      %3142 = vmatprep.subr.mxu0 0.0
      %3143 = vmatpush2.msra.mxu0 0.0
      %3144 = vmatprep.subr.mxu0 0.0
      %3145 = vmatpush2.msra.mxu0 0.0
      %3146 = vmatprep.subr.mxu0 0.0
      %3147 = vmatpush2.msra.mxu0 0.0
      %3148 = vmatprep.subr.mxu0 0.0
      %3149 = vmatpush2.msra.mxu0 0.0
      %3150 = vmatprep.subr.mxu0 0.0
      %3151 = vmatpush2.msra.mxu0 0.0
      %3152 = vmatprep.subr.mxu0 0.0
      %3153 = vmatpush2.msra.mxu0 0.0
      %3154 = vmatprep.subr.mxu0 0.0
      %3155 = vmatpush2.msra.mxu0 0.0
      %3156 = vmatprep.subr.mxu0 0.0
      %3157 = vmatpush2.msra.mxu0 0.0
      %3158 = vmatprep.subr.mxu0 0.0
      %3159 = vmatpush2.msra.mxu0 0.0
      %3160 = vmatprep.subr.mxu0 0.0
      %3161 = vmatpush2.msra.mxu0 0.0
      %3162 = vmatprep.subr.mxu0 0.0
      %3163 = vmatpush2.msra.mxu0 0.0
      %3164 = vmatprep.mubr.f32.mxu0 0.0
      %3165 = vmatmul.mubr.f32.gmra.mxu0 %v3095
      %v3166 = vpop.f32.mrf.mxu0
      %v3167 = vadd.f32 0.0, %v3166
      %v3168 = vpop.f32.mrf.mxu0
      %3169 = vmatprep.mubr.f32.mxu0 0.0
      %3170 = vmatmul.mubr.f32.gmra.mxu0 %v3098
      %v3171 = vpop.f32.mrf.mxu0
      %v3172 = vadd.f32 0.0, %v3171
      %v3173 = vpop.f32.mrf.mxu0
      %3174 = vdwg.mxu0
      %v3175 = vadd.f32 %v3086, %v3167
      %v3176 = vadd.f32 %v3087, %v3172
      %v3177 = vsel %vm1537, %v3175, 0.0
      %3178 = vadd.xlane.f32.xlu0 %v3177
      %v3179 = vpop.xlane.xlu0 %3178
      %v3180 = vsel %vm1537, %v3176, 0.0
      %3181 = vadd.xlane.f32.xlu0 %v3180
      %v3182 = vpop.xlane.xlu0 %3181
      %v3183 = vmul.f32 %v3175, %v3175
      %v3184 = vmul.f32 %v3176, %v3176
      %v3185 = vsel %vm1537, %v3183, 0.0
      %3186 = vadd.xlane.f32.xlu0 %v3185
      %v3187 = vpop.xlane.xlu0 %3186
      %v3188 = vsel %vm1537, %v3184, 0.0
      %3189 = vadd.xlane.f32.xlu0 %v3188
      %v3190 = vpop.xlane.xlu0 %3189
      %v3191 = vmul.f32 %v3179, %v1552
      %v3192 = vmul.f32 %v3182, %v1552
      %v3193 = vmul.f32 %v3187, %v1552
      %v3194 = vmul.f32 %v3190, %v1552
      %v3195 = vmul.f32 %v3191, %v3191
      %v3196 = vmul.f32 %v3192, %v3192
      %v3197 = vsub.f32 %v3193, %v3195
      %v3198 = vsub.f32 %v3194, %v3196
      %v3199 = vmax.f32 %v3197, 0.0
      %v3200 = vmax.f32 %v3198, 0.0
      %v3201 = vsub.f32 %v3175, %v3191
      %v3202 = vsub.f32 %v3176, %v3192
      %v3203 = vadd.f32 %v3199, 1e-05
      %v3204 = vadd.f32 %v3200, 1e-05
      %v3205 = vrsqrt.pop %v3203
      %v3206 = vrsqrt.pop %v3204
      %v3207 = vmul.f32 %v3201, %v3205
      %v3208 = vmul.f32 %v3202, %v3206
      %v3209 = vmul.f32 %v3207, 0.5
      %v3210 = vmul.f32 %v3208, 0.5
      %v3211 = vmul.f32 %v3207, 0.70710677
      %v3212 = vmul.f32 %v3208, 0.70710677
      %v3213 = verf.f32.pop %v3211
      %v3214 = verf.f32.pop %v3212
      %v3215 = vadd.f32 %v3213, 1.0
      %v3216 = vadd.f32 %v3214, 1.0
      %v3217 = vmul.f32 %v3209, %v3215
      %v3218 = vmul.f32 %v3210, %v3216
      %v3219 = vld [vmem:[%s14] sm:$0xff]
      %v3220 = vld [vmem:[%s14 + $0x8] sm:$0xff]
      %v3222 = vsel %vm1537, %v3219, 0
      %v3225 = vsel %vm1537, %v3220, 0
      %3227 = vmatprep.subr.mxu0 0.0
      %3228 = vmatpush1.msra.mxu0 0.0
      %3229 = vmatprep.subr.mxu0 0.0
      %3230 = vmatpush1.msra.mxu0 0.0
      %3231 = vmatprep.subr.mxu0 0.0
      %3232 = vmatpush1.msra.mxu0 0.0
      %3233 = vmatprep.subr.mxu0 0.0
      %3234 = vmatpush1.msra.mxu0 0.0
      %3235 = vmatprep.subr.mxu0 0.0
      %3236 = vmatpush1.msra.mxu0 0.0
      %3237 = vmatprep.subr.mxu0 0.0
      %3238 = vmatpush1.msra.mxu0 0.0
      %3239 = vmatprep.subr.mxu0 0.0
      %3240 = vmatpush1.msra.mxu0 0.0
      %3241 = vmatprep.subr.mxu0 0.0
      %3242 = vmatpush1.msra.mxu0 0.0
      %3243 = vmatprep.subr.mxu0 0.0
      %3244 = vmatpush1.msra.mxu0 0.0
      %3245 = vmatprep.subr.mxu0 0.0
      %3246 = vmatpush1.msra.mxu0 0.0
      %3247 = vmatprep.subr.mxu0 0.0
      %3248 = vmatpush1.msra.mxu0 0.0
      %3249 = vmatprep.subr.mxu0 0.0
      %3250 = vmatpush1.msra.mxu0 0.0
      %3251 = vmatprep.subr.mxu0 0.0
      %3252 = vmatpush1.msra.mxu0 0.0
      %3253 = vmatprep.subr.mxu0 0.0
      %3254 = vmatpush1.msra.mxu0 0.0
      %3255 = vmatprep.subr.mxu0 0.0
      %3256 = vmatpush1.msra.mxu0 %v3218
      %3257 = vmatprep.subr.mxu0 0.0
      %3258 = vmatpush1.msra.mxu0 %v3217
      %3259 = vmatprep.subr.mxu0 0.0
      %3260 = vmatpush2.msra.mxu0 0.0
      %3261 = vmatprep.subr.mxu0 0.0
      %3262 = vmatpush2.msra.mxu0 0.0
      %3263 = vmatprep.subr.mxu0 0.0
      %3264 = vmatpush2.msra.mxu0 0.0
      %3265 = vmatprep.subr.mxu0 0.0
      %3266 = vmatpush2.msra.mxu0 0.0
      %3267 = vmatprep.subr.mxu0 0.0
      %3268 = vmatpush2.msra.mxu0 0.0
      %3269 = vmatprep.subr.mxu0 0.0
      %3270 = vmatpush2.msra.mxu0 0.0
      %3271 = vmatprep.subr.mxu0 0.0
      %3272 = vmatpush2.msra.mxu0 0.0
      %3273 = vmatprep.subr.mxu0 0.0
      %3274 = vmatpush2.msra.mxu0 0.0
      %3275 = vmatprep.subr.mxu0 0.0
      %3276 = vmatpush2.msra.mxu0 0.0
      %3277 = vmatprep.subr.mxu0 0.0
      %3278 = vmatpush2.msra.mxu0 0.0
      %3279 = vmatprep.subr.mxu0 0.0
      %3280 = vmatpush2.msra.mxu0 0.0
      %3281 = vmatprep.subr.mxu0 0.0
      %3282 = vmatpush2.msra.mxu0 0.0
      %3283 = vmatprep.subr.mxu0 0.0
      %3284 = vmatpush2.msra.mxu0 0.0
      %3285 = vmatprep.subr.mxu0 0.0
      %3286 = vmatpush2.msra.mxu0 0.0
      %3287 = vmatprep.subr.mxu0 0.0
      %3288 = vmatpush2.msra.mxu0 0.0
      %3289 = vmatprep.subr.mxu0 0.0
      %3290 = vmatpush2.msra.mxu0 0.0
      %3291 = vmatprep.mubr.f32.mxu0 0.0
      %3292 = vmatmul.mubr.f32.gmra.mxu0 %v3222
      %v3293 = vpop.f32.mrf.mxu0
      %v3294 = vadd.f32 0.0, %v3293
      %v3295 = vpop.f32.mrf.mxu0
      %3296 = vmatprep.mubr.f32.mxu0 0.0
      %3297 = vmatmul.mubr.f32.gmra.mxu0 %v3225
      %v3298 = vpop.f32.mrf.mxu0
      %v3299 = vadd.f32 0.0, %v3298
      %v3300 = vpop.f32.mrf.mxu0
      %3301 = vdwg.mxu0
      %v3302 = vsel %vm1537, %v3294, 0.0
      %3303 = vadd.xlane.f32.xlu0 %v3302
      %v3304 = vpop.xlane.xlu0 %3303
      %v3305 = vsel %vm1537, %v3299, 0.0
      %3306 = vadd.xlane.f32.xlu0 %v3305
      %v3307 = vpop.xlane.xlu0 %3306
      %v3308 = vmul.f32 %v3294, %v3294
      %v3309 = vmul.f32 %v3299, %v3299
      %v3310 = vsel %vm1537, %v3308, 0.0
      %3311 = vadd.xlane.f32.xlu0 %v3310
      %v3312 = vpop.xlane.xlu0 %3311
      %v3313 = vsel %vm1537, %v3309, 0.0
      %3314 = vadd.xlane.f32.xlu0 %v3313
      %v3315 = vpop.xlane.xlu0 %3314
      %v3316 = vmul.f32 %v3304, %v1552
      %v3317 = vmul.f32 %v3307, %v1552
      %v3318 = vmul.f32 %v3312, %v1552
      %v3319 = vmul.f32 %v3315, %v1552
      %v3320 = vmul.f32 %v3316, %v3316
      %v3321 = vmul.f32 %v3317, %v3317
      %v3322 = vsub.f32 %v3318, %v3320
      %v3323 = vsub.f32 %v3319, %v3321
      %v3324 = vmax.f32 %v3322, 0.0
      %v3325 = vmax.f32 %v3323, 0.0
      %v3326 = vsub.f32 %v3294, %v3316
      %v3327 = vsub.f32 %v3299, %v3317
      %v3328 = vadd.f32 %v3324, 1e-05
      %v3329 = vadd.f32 %v3325, 1e-05
      %v3330 = vrsqrt.pop %v3328
      %v3331 = vrsqrt.pop %v3329
      %v3332 = vmul.f32 %v3326, %v3330
      %v3333 = vmul.f32 %v3327, %v3331
      %v3334 = vmul.f32 %v3332, 0.5
      %v3335 = vmul.f32 %v3333, 0.5
      %v3336 = vmul.f32 %v3332, 0.70710677
      %v3337 = vmul.f32 %v3333, 0.70710677
      %v3338 = verf.f32.pop %v3336
      %v3339 = verf.f32.pop %v3337
      %v3340 = vadd.f32 %v3338, 1.0
      %v3341 = vadd.f32 %v3339, 1.0
      %v3342 = vmul.f32 %v3334, %v3340
      %v3343 = vmul.f32 %v3335, %v3341
      %v3344 = vld [vmem:[%s15] sm:$0xff]
      %v3345 = vld [vmem:[%s15 + $0x8] sm:$0xff]
      %v3346 = vld [vmem:[%s15 + $0x10] sm:$0xff]
      %v3347 = vld [vmem:[%s15 + $0x18] sm:$0xff]
      %v3348 = vld [vmem:[%s16] sm:$0xff]
      %v3349 = vld [vmem:[%s16 + $0x8] sm:$0xff]
      %v3350 = vld [vmem:[%s16 + $0x10] sm:$0xff]
      %v3351 = vld [vmem:[%s16 + $0x18] sm:$0xff]
      %v3353 = vsel %vm1537, %v3348, 0
      %v3356 = vsel %vm1537, %v3349, 0
      %v3359 = vsel %vm1537, %v3350, 0
      %v3362 = vsel %vm1537, %v3351, 0
      %3364 = vmatprep.subr.mxu0 0.0
      %3365 = vmatpush1.msra.mxu0 0.0
      %3366 = vmatprep.subr.mxu0 0.0
      %3367 = vmatpush1.msra.mxu0 0.0
      %3368 = vmatprep.subr.mxu0 0.0
      %3369 = vmatpush1.msra.mxu0 0.0
      %3370 = vmatprep.subr.mxu0 0.0
      %3371 = vmatpush1.msra.mxu0 0.0
      %3372 = vmatprep.subr.mxu0 0.0
      %3373 = vmatpush1.msra.mxu0 0.0
      %3374 = vmatprep.subr.mxu0 0.0
      %3375 = vmatpush1.msra.mxu0 0.0
      %3376 = vmatprep.subr.mxu0 0.0
      %3377 = vmatpush1.msra.mxu0 0.0
      %3378 = vmatprep.subr.mxu0 0.0
      %3379 = vmatpush1.msra.mxu0 0.0
      %3380 = vmatprep.subr.mxu0 0.0
      %3381 = vmatpush1.msra.mxu0 0.0
      %3382 = vmatprep.subr.mxu0 0.0
      %3383 = vmatpush1.msra.mxu0 0.0
      %3384 = vmatprep.subr.mxu0 0.0
      %3385 = vmatpush1.msra.mxu0 0.0
      %3386 = vmatprep.subr.mxu0 0.0
      %3387 = vmatpush1.msra.mxu0 0.0
      %3388 = vmatprep.subr.mxu0 0.0
      %3389 = vmatpush1.msra.mxu0 0.0
      %3390 = vmatprep.subr.mxu0 0.0
      %3391 = vmatpush1.msra.mxu0 0.0
      %3392 = vmatprep.subr.mxu0 0.0
      %3393 = vmatpush1.msra.mxu0 %v3218
      %3394 = vmatprep.subr.mxu0 0.0
      %3395 = vmatpush1.msra.mxu0 %v3217
      %3396 = vmatprep.subr.mxu0 0.0
      %3397 = vmatpush2.msra.mxu0 0.0
      %3398 = vmatprep.subr.mxu0 0.0
      %3399 = vmatpush2.msra.mxu0 0.0
      %3400 = vmatprep.subr.mxu0 0.0
      %3401 = vmatpush2.msra.mxu0 0.0
      %3402 = vmatprep.subr.mxu0 0.0
      %3403 = vmatpush2.msra.mxu0 0.0
      %3404 = vmatprep.subr.mxu0 0.0
      %3405 = vmatpush2.msra.mxu0 0.0
      %3406 = vmatprep.subr.mxu0 0.0
      %3407 = vmatpush2.msra.mxu0 0.0
      %3408 = vmatprep.subr.mxu0 0.0
      %3409 = vmatpush2.msra.mxu0 0.0
      %3410 = vmatprep.subr.mxu0 0.0
      %3411 = vmatpush2.msra.mxu0 0.0
      %3412 = vmatprep.subr.mxu0 0.0
      %3413 = vmatpush2.msra.mxu0 0.0
      %3414 = vmatprep.subr.mxu0 0.0
      %3415 = vmatpush2.msra.mxu0 0.0
      %3416 = vmatprep.subr.mxu0 0.0
      %3417 = vmatpush2.msra.mxu0 0.0
      %3418 = vmatprep.subr.mxu0 0.0
      %3419 = vmatpush2.msra.mxu0 0.0
      %3420 = vmatprep.subr.mxu0 0.0
      %3421 = vmatpush2.msra.mxu0 0.0
      %3422 = vmatprep.subr.mxu0 0.0
      %3423 = vmatpush2.msra.mxu0 0.0
      %3424 = vmatprep.subr.mxu0 0.0
      %3425 = vmatpush2.msra.mxu0 0.0
      %3426 = vmatprep.subr.mxu0 0.0
      %3427 = vmatpush2.msra.mxu0 0.0
      %3428 = vmatprep.mubr.f32.mxu0 0.0
      %3429 = vmatmul.mubr.f32.gmra.mxu0 %v3353
      %v3430 = vpop.f32.mrf.mxu0
      %v3431 = vadd.f32 0.0, %v3430
      %v3432 = vpop.f32.mrf.mxu0
      %3433 = vmatprep.mubr.f32.mxu0 0.0
      %3434 = vmatmul.mubr.f32.gmra.mxu0 %v3356
      %v3435 = vpop.f32.mrf.mxu0
      %v3436 = vadd.f32 0.0, %v3435
      %v3437 = vpop.f32.mrf.mxu0
      %3438 = vmatprep.mubr.f32.mxu0 0.0
      %3439 = vmatmul.mubr.f32.gmra.mxu0 %v3359
      %v3440 = vpop.f32.mrf.mxu0
      %v3441 = vadd.f32 0.0, %v3440
      %v3442 = vpop.f32.mrf.mxu0
      %3443 = vmatprep.mubr.f32.mxu0 0.0
      %3444 = vmatmul.mubr.f32.gmra.mxu0 %v3362
      %v3445 = vpop.f32.mrf.mxu0
      %v3446 = vadd.f32 0.0, %v3445
      %v3447 = vpop.f32.mrf.mxu0
      %3448 = vdwg.mxu0
      %v3450 = vsel %vm1537, %v3344, 0
      %v3453 = vsel %vm1537, %v3345, 0
      %v3456 = vsel %vm1537, %v3346, 0
      %v3459 = vsel %vm1537, %v3347, 0
      %3461 = vmatprep.subr.mxu0 0.0
      %3462 = vmatpush1.msra.mxu0 0.0
      %3463 = vmatprep.subr.mxu0 0.0
      %3464 = vmatpush1.msra.mxu0 0.0
      %3465 = vmatprep.subr.mxu0 0.0
      %3466 = vmatpush1.msra.mxu0 0.0
      %3467 = vmatprep.subr.mxu0 0.0
      %3468 = vmatpush1.msra.mxu0 0.0
      %3469 = vmatprep.subr.mxu0 0.0
      %3470 = vmatpush1.msra.mxu0 0.0
      %3471 = vmatprep.subr.mxu0 0.0
      %3472 = vmatpush1.msra.mxu0 0.0
      %3473 = vmatprep.subr.mxu0 0.0
      %3474 = vmatpush1.msra.mxu0 0.0
      %3475 = vmatprep.subr.mxu0 0.0
      %3476 = vmatpush1.msra.mxu0 0.0
      %3477 = vmatprep.subr.mxu0 0.0
      %3478 = vmatpush1.msra.mxu0 0.0
      %3479 = vmatprep.subr.mxu0 0.0
      %3480 = vmatpush1.msra.mxu0 0.0
      %3481 = vmatprep.subr.mxu0 0.0
      %3482 = vmatpush1.msra.mxu0 0.0
      %3483 = vmatprep.subr.mxu0 0.0
      %3484 = vmatpush1.msra.mxu0 0.0
      %3485 = vmatprep.subr.mxu0 0.0
      %3486 = vmatpush1.msra.mxu0 0.0
      %3487 = vmatprep.subr.mxu0 0.0
      %3488 = vmatpush1.msra.mxu0 0.0
      %3489 = vmatprep.subr.mxu0 0.0
      %3490 = vmatpush1.msra.mxu0 %v3343
      %3491 = vmatprep.subr.mxu0 0.0
      %3492 = vmatpush1.msra.mxu0 %v3342
      %3493 = vmatprep.subr.mxu0 0.0
      %3494 = vmatpush2.msra.mxu0 0.0
      %3495 = vmatprep.subr.mxu0 0.0
      %3496 = vmatpush2.msra.mxu0 0.0
      %3497 = vmatprep.subr.mxu0 0.0
      %3498 = vmatpush2.msra.mxu0 0.0
      %3499 = vmatprep.subr.mxu0 0.0
      %3500 = vmatpush2.msra.mxu0 0.0
      %3501 = vmatprep.subr.mxu0 0.0
      %3502 = vmatpush2.msra.mxu0 0.0
      %3503 = vmatprep.subr.mxu0 0.0
      %3504 = vmatpush2.msra.mxu0 0.0
      %3505 = vmatprep.subr.mxu0 0.0
      %3506 = vmatpush2.msra.mxu0 0.0
      %3507 = vmatprep.subr.mxu0 0.0
      %3508 = vmatpush2.msra.mxu0 0.0
      %3509 = vmatprep.subr.mxu0 0.0
      %3510 = vmatpush2.msra.mxu0 0.0
      %3511 = vmatprep.subr.mxu0 0.0
      %3512 = vmatpush2.msra.mxu0 0.0
      %3513 = vmatprep.subr.mxu0 0.0
      %3514 = vmatpush2.msra.mxu0 0.0
      %3515 = vmatprep.subr.mxu0 0.0
      %3516 = vmatpush2.msra.mxu0 0.0
      %3517 = vmatprep.subr.mxu0 0.0
      %3518 = vmatpush2.msra.mxu0 0.0
      %3519 = vmatprep.subr.mxu0 0.0
      %3520 = vmatpush2.msra.mxu0 0.0
      %3521 = vmatprep.subr.mxu0 0.0
      %3522 = vmatpush2.msra.mxu0 0.0
      %3523 = vmatprep.subr.mxu0 0.0
      %3524 = vmatpush2.msra.mxu0 0.0
      %3525 = vmatprep.mubr.f32.mxu0 0.0
      %3526 = vmatmul.mubr.f32.gmra.mxu0 %v3450
      %v3527 = vpop.f32.mrf.mxu0
      %v3528 = vadd.f32 %v3431, %v3527
      %v3529 = vpop.f32.mrf.mxu0
      %3530 = vmatprep.mubr.f32.mxu0 0.0
      %3531 = vmatmul.mubr.f32.gmra.mxu0 %v3453
      %v3532 = vpop.f32.mrf.mxu0
      %v3533 = vadd.f32 %v3436, %v3532
      %v3534 = vpop.f32.mrf.mxu0
      %3535 = vmatprep.mubr.f32.mxu0 0.0
      %3536 = vmatmul.mubr.f32.gmra.mxu0 %v3456
      %v3537 = vpop.f32.mrf.mxu0
      %v3538 = vadd.f32 %v3441, %v3537
      %v3539 = vpop.f32.mrf.mxu0
      %3540 = vmatprep.mubr.f32.mxu0 0.0
      %3541 = vmatmul.mubr.f32.gmra.mxu0 %v3459
      %v3542 = vpop.f32.mrf.mxu0
      %v3543 = vadd.f32 %v3446, %v3542
      %v3544 = vpop.f32.mrf.mxu0
      %3545 = vdwg.mxu0
      %v3546 = vsel %vm1537, %v3528, 0.0
      %3547 = vadd.xlane.f32.xlu0 %v3546
      %v3548 = vpop.xlane.xlu0 %3547
      %v3549 = vsel %vm1537, %v3533, 0.0
      %3550 = vadd.xlane.f32.xlu0 %v3549
      %v3551 = vpop.xlane.xlu0 %3550
      %v3552 = vsel %vm1537, %v3538, 0.0
      %3553 = vadd.xlane.f32.xlu0 %v3552
      %v3554 = vpop.xlane.xlu0 %3553
      %v3555 = vsel %vm1537, %v3543, 0.0
      %3556 = vadd.xlane.f32.xlu0 %v3555
      %v3557 = vpop.xlane.xlu0 %3556
      %v3558 = vmul.f32 %v3528, %v3528
      %v3559 = vmul.f32 %v3533, %v3533
      %v3560 = vmul.f32 %v3538, %v3538
      %v3561 = vmul.f32 %v3543, %v3543
      %v3562 = vsel %vm1537, %v3558, 0.0
      %3563 = vadd.xlane.f32.xlu0 %v3562
      %v3564 = vpop.xlane.xlu0 %3563
      %v3565 = vsel %vm1537, %v3559, 0.0
      %3566 = vadd.xlane.f32.xlu0 %v3565
      %v3567 = vpop.xlane.xlu0 %3566
      %v3568 = vsel %vm1537, %v3560, 0.0
      %3569 = vadd.xlane.f32.xlu0 %v3568
      %v3570 = vpop.xlane.xlu0 %3569
      %v3571 = vsel %vm1537, %v3561, 0.0
      %3572 = vadd.xlane.f32.xlu0 %v3571
      %v3573 = vpop.xlane.xlu0 %3572
      %v3574 = vadd.f32 %v3548, %v3551
      %v3575 = vadd.f32 %v3564, %v3567
      %v3576 = vadd.f32 %v3574, %v3554
      %v3577 = vadd.f32 %v3575, %v3570
      %v3578 = vadd.f32 %v3576, %v3557
      %v3579 = vadd.f32 %v3577, %v3573
      %v3580 = vmul.f32 %v3578, %v1172
      %v3581 = vmul.f32 %v3579, %v1172
      %v3582 = vmul.f32 %v3580, %v3580
      %v3583 = vsub.f32 %v3581, %v3582
      %v3584 = vmax.f32 %v3583, 0.0
      %v3585 = vadd.f32 %v3584, 1e-05
      %v3586 = vrsqrt.pop %v3585
      %v3587 = vsub.f32 %v3528, %v3580
      %v3588 = vmul.f32 %v3587, %v3586
      %v3589 = vmul.f32 %v3588, 0.5
      %v3590 = vmul.f32 %v3588, 0.70710677
      %v3591 = verf.f32.pop %v3590
      %v3592 = vadd.f32 %v3591, 1.0
      %v3593 = vmul.f32 %v3589, %v3592
      %v3594 = vsub.f32 %v3533, %v3580
      %v3595 = vmul.f32 %v3594, %v3586
      %v3596 = vmul.f32 %v3595, 0.5
      %v3597 = vmul.f32 %v3595, 0.70710677
      %v3598 = verf.f32.pop %v3597
      %v3599 = vadd.f32 %v3598, 1.0
      %v3600 = vmul.f32 %v3596, %v3599
      %v3601 = vsub.f32 %v3538, %v3580
      %v3602 = vmul.f32 %v3601, %v3586
      %v3603 = vmul.f32 %v3602, 0.5
      %v3604 = vmul.f32 %v3602, 0.70710677
      %v3605 = verf.f32.pop %v3604
      %v3606 = vadd.f32 %v3605, 1.0
      %v3607 = vmul.f32 %v3603, %v3606
      %v3608 = vsub.f32 %v3543, %v3580
      %v3609 = vmul.f32 %v3608, %v3586
      %v3610 = vmul.f32 %v3609, 0.5
      %v3611 = vmul.f32 %v3609, 0.70710677
      %v3612 = verf.f32.pop %v3611
      %v3613 = vadd.f32 %v3612, 1.0
      %v3614 = vmul.f32 %v3610, %v3613
      %3616 = vrot.lane.b32.xlu0 %v3600, 16
      %v3617 = vpop.permute.xlu0 %3616
      %3620 = vrot.lane.b32.xlu0 %v3607, 32
      %v3621 = vpop.permute.xlu0 %3620
      %3624 = vrot.lane.b32.xlu0 %v3614, 48
      %v3625 = vpop.permute.xlu0 %3624
      %v3627 = vsel %vm1537, %v3593, %v3617
      %v3628 = vsel %vm1990, %v3627, %v3621
      %v3629 = vsel %vm1992, %v3628, %v3625
      %v3630 = vld [vmem:[%s17] sm:$0xff]
      %v3631 = vld [vmem:[%s17 + $0x8] sm:$0xff]
      %v3632 = vld [vmem:[%s18] sm:$0xff]
      %v3633 = vld [vmem:[%s18 + $0x8] sm:$0xff]
      %v3635 = vsel %vm1196, %v3632, 0
      %v3638 = vsel %vm1196, %v3633, 0
      %3640 = vmatprep.subr.mxu0 0.0
      %3641 = vmatpush1.msra.mxu0 0.0
      %3642 = vmatprep.subr.mxu0 0.0
      %3643 = vmatpush1.msra.mxu0 0.0
      %3644 = vmatprep.subr.mxu0 0.0
      %3645 = vmatpush1.msra.mxu0 0.0
      %3646 = vmatprep.subr.mxu0 0.0
      %3647 = vmatpush1.msra.mxu0 0.0
      %3648 = vmatprep.subr.mxu0 0.0
      %3649 = vmatpush1.msra.mxu0 0.0
      %3650 = vmatprep.subr.mxu0 0.0
      %3651 = vmatpush1.msra.mxu0 0.0
      %3652 = vmatprep.subr.mxu0 0.0
      %3653 = vmatpush1.msra.mxu0 0.0
      %3654 = vmatprep.subr.mxu0 0.0
      %3655 = vmatpush1.msra.mxu0 0.0
      %3656 = vmatprep.subr.mxu0 0.0
      %3657 = vmatpush1.msra.mxu0 0.0
      %3658 = vmatprep.subr.mxu0 0.0
      %3659 = vmatpush1.msra.mxu0 0.0
      %3660 = vmatprep.subr.mxu0 0.0
      %3661 = vmatpush1.msra.mxu0 0.0
      %3662 = vmatprep.subr.mxu0 0.0
      %3663 = vmatpush1.msra.mxu0 0.0
      %3664 = vmatprep.subr.mxu0 0.0
      %3665 = vmatpush1.msra.mxu0 0.0
      %3666 = vmatprep.subr.mxu0 0.0
      %3667 = vmatpush1.msra.mxu0 0.0
      %3668 = vmatprep.subr.mxu0 0.0
      %3669 = vmatpush1.msra.mxu0 0.0
      %3670 = vmatprep.subr.mxu0 0.0
      %3671 = vmatpush1.msra.mxu0 %v2827
      %3672 = vmatprep.subr.mxu0 0.0
      %3673 = vmatpush2.msra.mxu0 0.0
      %3674 = vmatprep.subr.mxu0 0.0
      %3675 = vmatpush2.msra.mxu0 0.0
      %3676 = vmatprep.subr.mxu0 0.0
      %3677 = vmatpush2.msra.mxu0 0.0
      %3678 = vmatprep.subr.mxu0 0.0
      %3679 = vmatpush2.msra.mxu0 0.0
      %3680 = vmatprep.subr.mxu0 0.0
      %3681 = vmatpush2.msra.mxu0 0.0
      %3682 = vmatprep.subr.mxu0 0.0
      %3683 = vmatpush2.msra.mxu0 0.0
      %3684 = vmatprep.subr.mxu0 0.0
      %3685 = vmatpush2.msra.mxu0 0.0
      %3686 = vmatprep.subr.mxu0 0.0
      %3687 = vmatpush2.msra.mxu0 0.0
      %3688 = vmatprep.subr.mxu0 0.0
      %3689 = vmatpush2.msra.mxu0 0.0
      %3690 = vmatprep.subr.mxu0 0.0
      %3691 = vmatpush2.msra.mxu0 0.0
      %3692 = vmatprep.subr.mxu0 0.0
      %3693 = vmatpush2.msra.mxu0 0.0
      %3694 = vmatprep.subr.mxu0 0.0
      %3695 = vmatpush2.msra.mxu0 0.0
      %3696 = vmatprep.subr.mxu0 0.0
      %3697 = vmatpush2.msra.mxu0 0.0
      %3698 = vmatprep.subr.mxu0 0.0
      %3699 = vmatpush2.msra.mxu0 0.0
      %3700 = vmatprep.subr.mxu0 0.0
      %3701 = vmatpush2.msra.mxu0 0.0
      %3702 = vmatprep.subr.mxu0 0.0
      %3703 = vmatpush2.msra.mxu0 0.0
      %3704 = vmatprep.mubr.f32.mxu0 0.0
      %3705 = vmatmul.mubr.f32.gmra.mxu0 %v3635
      %v3706 = vpop.f32.mrf.mxu0
      %v3707 = vadd.f32 0.0, %v3706
      %v3708 = vpop.f32.mrf.mxu0
      %3709 = vmatprep.mubr.f32.mxu0 0.0
      %3710 = vmatmul.mubr.f32.gmra.mxu0 %v3638
      %v3711 = vpop.f32.mrf.mxu0
      %v3712 = vadd.f32 0.0, %v3711
      %v3713 = vpop.f32.mrf.mxu0
      %3714 = vdwg.mxu0
      %v3716 = vsel %vm1196, %v3630, 0
      %v3719 = vsel %vm1196, %v3631, 0
      %3721 = vmatprep.subr.mxu0 0.0
      %3722 = vmatpush1.msra.mxu0 0.0
      %3723 = vmatprep.subr.mxu0 0.0
      %3724 = vmatpush1.msra.mxu0 0.0
      %3725 = vmatprep.subr.mxu0 0.0
      %3726 = vmatpush1.msra.mxu0 0.0
      %3727 = vmatprep.subr.mxu0 0.0
      %3728 = vmatpush1.msra.mxu0 0.0
      %3729 = vmatprep.subr.mxu0 0.0
      %3730 = vmatpush1.msra.mxu0 0.0
      %3731 = vmatprep.subr.mxu0 0.0
      %3732 = vmatpush1.msra.mxu0 0.0
      %3733 = vmatprep.subr.mxu0 0.0
      %3734 = vmatpush1.msra.mxu0 0.0
      %3735 = vmatprep.subr.mxu0 0.0
      %3736 = vmatpush1.msra.mxu0 0.0
      %3737 = vmatprep.subr.mxu0 0.0
      %3738 = vmatpush1.msra.mxu0 0.0
      %3739 = vmatprep.subr.mxu0 0.0
      %3740 = vmatpush1.msra.mxu0 0.0
      %3741 = vmatprep.subr.mxu0 0.0
      %3742 = vmatpush1.msra.mxu0 0.0
      %3743 = vmatprep.subr.mxu0 0.0
      %3744 = vmatpush1.msra.mxu0 0.0
      %3745 = vmatprep.subr.mxu0 0.0
      %3746 = vmatpush1.msra.mxu0 0.0
      %3747 = vmatprep.subr.mxu0 0.0
      %3748 = vmatpush1.msra.mxu0 0.0
      %3749 = vmatprep.subr.mxu0 0.0
      %3750 = vmatpush1.msra.mxu0 0.0
      %3751 = vmatprep.subr.mxu0 0.0
      %3752 = vmatpush1.msra.mxu0 %v3629
      %3753 = vmatprep.subr.mxu0 0.0
      %3754 = vmatpush2.msra.mxu0 0.0
      %3755 = vmatprep.subr.mxu0 0.0
      %3756 = vmatpush2.msra.mxu0 0.0
      %3757 = vmatprep.subr.mxu0 0.0
      %3758 = vmatpush2.msra.mxu0 0.0
      %3759 = vmatprep.subr.mxu0 0.0
      %3760 = vmatpush2.msra.mxu0 0.0
      %3761 = vmatprep.subr.mxu0 0.0
      %3762 = vmatpush2.msra.mxu0 0.0
      %3763 = vmatprep.subr.mxu0 0.0
      %3764 = vmatpush2.msra.mxu0 0.0
      %3765 = vmatprep.subr.mxu0 0.0
      %3766 = vmatpush2.msra.mxu0 0.0
      %3767 = vmatprep.subr.mxu0 0.0
      %3768 = vmatpush2.msra.mxu0 0.0
      %3769 = vmatprep.subr.mxu0 0.0
      %3770 = vmatpush2.msra.mxu0 0.0
      %3771 = vmatprep.subr.mxu0 0.0
      %3772 = vmatpush2.msra.mxu0 0.0
      %3773 = vmatprep.subr.mxu0 0.0
      %3774 = vmatpush2.msra.mxu0 0.0
      %3775 = vmatprep.subr.mxu0 0.0
      %3776 = vmatpush2.msra.mxu0 0.0
      %3777 = vmatprep.subr.mxu0 0.0
      %3778 = vmatpush2.msra.mxu0 0.0
      %3779 = vmatprep.subr.mxu0 0.0
      %3780 = vmatpush2.msra.mxu0 0.0
      %3781 = vmatprep.subr.mxu0 0.0
      %3782 = vmatpush2.msra.mxu0 0.0
      %3783 = vmatprep.subr.mxu0 0.0
      %3784 = vmatpush2.msra.mxu0 0.0
      %3785 = vmatprep.mubr.f32.mxu0 0.0
      %3786 = vmatmul.mubr.f32.gmra.mxu0 %v3716
      %v3787 = vpop.f32.mrf.mxu0
      %v3788 = vadd.f32 %v3707, %v3787
      %v3789 = vpop.f32.mrf.mxu0
      %3790 = vmatprep.mubr.f32.mxu0 0.0
      %3791 = vmatmul.mubr.f32.gmra.mxu0 %v3719
      %v3792 = vpop.f32.mrf.mxu0
      %v3793 = vadd.f32 %v3712, %v3792
      %v3794 = vpop.f32.mrf.mxu0
      %3795 = vdwg.mxu0
      %v3796 = vsel %vm1164, %v3788, 0.0
      %3797 = vadd.xlane.f32.xlu0 %v3796
      %v3798 = vpop.xlane.xlu0 %3797
      %v3799 = vsel %vm1164, %v3793, 0.0
      %3800 = vadd.xlane.f32.xlu0 %v3799
      %v3801 = vpop.xlane.xlu0 %3800
      %v3802 = vmul.f32 %v3788, %v3788
      %v3803 = vmul.f32 %v3793, %v3793
      %v3804 = vsel %vm1164, %v3802, 0.0
      %3805 = vadd.xlane.f32.xlu0 %v3804
      %v3806 = vpop.xlane.xlu0 %3805
      %v3807 = vsel %vm1164, %v3803, 0.0
      %3808 = vadd.xlane.f32.xlu0 %v3807
      %v3809 = vpop.xlane.xlu0 %3808
      %v3811 = vrot.slane %v3798, 4
      %v3813 = vadd.f32 %v3798, %v3811
      %v3815 = vrot.slane %v3806, 4
      %v3817 = vadd.f32 %v3806, %v3815
      %v3818 = vadd.f32 %v3813, %v3801
      %v3819 = vadd.f32 %v3817, %v3809
      %v3821 = vrot.slane %v3801, 4
      %v3823 = vadd.f32 %v3818, %v3821
      %v3825 = vrot.slane %v3809, 4
      %v3827 = vadd.f32 %v3819, %v3825
      %v3828 = vmul.f32 %v3823, %v2192
      %v3829 = vmul.f32 %v3827, %v2192
      %v3830 = vmul.f32 %v3828, %v3828
      %v3831 = vsub.f32 %v3829, %v3830
      %v3832 = vmax.f32 %v3831, 0.0
      %v3833 = vadd.f32 %v3832, 1e-05
      %v3834 = vrsqrt.pop %v3833
      %3836 = vset.pattern.permute.xlu0 0
      %3837 = vperm.xlu0 %3836, %v3828
      %v3838 = vpop.permute.xlu0 %3837
      %v3840 = vsub.f32 %v3788, %v3838
      %3842 = vset.pattern.permute.xlu0 0
      %3843 = vperm.xlu0 %3842, %v3834
      %v3844 = vpop.permute.xlu0 %3843
      %v3846 = vmul.f32 %v3840, %v3844
      %v3847 = vmul.f32 %v3846, 0.5
      %v3848 = vmul.f32 %v3846, 0.70710677
      %v3849 = verf.f32.pop %v3848
      %v3850 = vadd.f32 %v3849, 1.0
      %v3851 = vmul.f32 %v3847, %v3850
      %v3852 = vrot.slane %v3838, 4
      %v3854 = vsub.f32 %v3788, %v3852
      %v3855 = vrot.slane %v3844, 4
      %v3857 = vmul.f32 %v3854, %v3855
      %v3858 = vmul.f32 %v3857, 0.5
      %v3859 = vmul.f32 %v3857, 0.70710677
      %v3860 = verf.f32.pop %v3859
      %v3861 = vadd.f32 %v3860, 1.0
      %v3862 = vmul.f32 %v3858, %v3861
      %v3863 = vsub.f32 %v3793, %v3838
      %v3864 = vmul.f32 %v3863, %v3844
      %v3865 = vmul.f32 %v3864, 0.5
      %v3866 = vmul.f32 %v3864, 0.70710677
      %v3867 = verf.f32.pop %v3866
      %v3868 = vadd.f32 %v3867, 1.0
      %v3869 = vmul.f32 %v3865, %v3868
      %v3870 = vsub.f32 %v3793, %v3852
      %v3871 = vmul.f32 %v3870, %v3855
      %v3872 = vmul.f32 %v3871, 0.5
      %v3873 = vmul.f32 %v3871, 0.70710677
      %v3874 = verf.f32.pop %v3873
      %v3875 = vadd.f32 %v3874, 1.0
      %v3876 = vmul.f32 %v3872, %v3875
      %v3878 = vrot.slane %v3862, 4
      %3879 = vrot.lane.b32.xlu0 %v3878, 64
      %v3880 = vpop.permute.xlu0 %3879
      %v3883 = vrot.slane %v3876, 4
      %3884 = vrot.lane.b32.xlu0 %v3883, 64
      %v3885 = vpop.permute.xlu0 %3884
      %v3887 = vsel %vm1164, %v3851, %v3880
      %v3888 = vsel %vm1164, %v3869, %v3885
      %v3889 = vld [vmem:[%s19] sm:$0xff]
      %v3891 = vsel %vm853, %v3889, 0
      %v3894 = vsel %vm857, %v3887, 0
      %v3897 = vsel %vm857, %v3888, 0
      %3899 = vmatprep.subr.mxu0 0.0
      %3900 = vmatpush1.msra.mxu0 0.0
      %3901 = vmatprep.subr.mxu0 0.0
      %3902 = vmatpush1.msra.mxu0 0.0
      %3903 = vmatprep.subr.mxu0 0.0
      %3904 = vmatpush1.msra.mxu0 0.0
      %3905 = vmatprep.subr.mxu0 0.0
      %3906 = vmatpush1.msra.mxu0 0.0
      %3907 = vmatprep.subr.mxu0 0.0
      %3908 = vmatpush1.msra.mxu0 0.0
      %3909 = vmatprep.subr.mxu0 0.0
      %3910 = vmatpush1.msra.mxu0 0.0
      %3911 = vmatprep.subr.mxu0 0.0
      %3912 = vmatpush1.msra.mxu0 0.0
      %3913 = vmatprep.subr.mxu0 0.0
      %3914 = vmatpush1.msra.mxu0 0.0
      %3915 = vmatprep.subr.mxu0 0.0
      %3916 = vmatpush1.msra.mxu0 0.0
      %3917 = vmatprep.subr.mxu0 0.0
      %3918 = vmatpush1.msra.mxu0 0.0
      %3919 = vmatprep.subr.mxu0 0.0
      %3920 = vmatpush1.msra.mxu0 0.0
      %3921 = vmatprep.subr.mxu0 0.0
      %3922 = vmatpush1.msra.mxu0 0.0
      %3923 = vmatprep.subr.mxu0 0.0
      %3924 = vmatpush1.msra.mxu0 0.0
      %3925 = vmatprep.subr.mxu0 0.0
      %3926 = vmatpush1.msra.mxu0 0.0
      %3927 = vmatprep.subr.mxu0 0.0
      %3928 = vmatpush1.msra.mxu0 0.0
      %3929 = vmatprep.subr.mxu0 %v3897
      %3930 = vmatpush1.msra.mxu0 %v3894
      %3931 = vmatprep.subr.mxu0 0.0
      %3932 = vmatpush2.msra.mxu0 0.0
      %3933 = vmatprep.subr.mxu0 0.0
      %3934 = vmatpush2.msra.mxu0 0.0
      %3935 = vmatprep.subr.mxu0 0.0
      %3936 = vmatpush2.msra.mxu0 0.0
      %3937 = vmatprep.subr.mxu0 0.0
      %3938 = vmatpush2.msra.mxu0 0.0
      %3939 = vmatprep.subr.mxu0 0.0
      %3940 = vmatpush2.msra.mxu0 0.0
      %3941 = vmatprep.subr.mxu0 0.0
      %3942 = vmatpush2.msra.mxu0 0.0
      %3943 = vmatprep.subr.mxu0 0.0
      %3944 = vmatpush2.msra.mxu0 0.0
      %3945 = vmatprep.subr.mxu0 0.0
      %3946 = vmatpush2.msra.mxu0 0.0
      %3947 = vmatprep.subr.mxu0 0.0
      %3948 = vmatpush2.msra.mxu0 0.0
      %3949 = vmatprep.subr.mxu0 0.0
      %3950 = vmatpush2.msra.mxu0 0.0
      %3951 = vmatprep.subr.mxu0 0.0
      %3952 = vmatpush2.msra.mxu0 0.0
      %3953 = vmatprep.subr.mxu0 0.0
      %3954 = vmatpush2.msra.mxu0 0.0
      %3955 = vmatprep.subr.mxu0 0.0
      %3956 = vmatpush2.msra.mxu0 0.0
      %3957 = vmatprep.subr.mxu0 0.0
      %3958 = vmatpush2.msra.mxu0 0.0
      %3959 = vmatprep.subr.mxu0 0.0
      %3960 = vmatpush2.msra.mxu0 0.0
      %3961 = vmatprep.subr.mxu0 0.0
      %3962 = vmatpush2.msra.mxu0 0.0
      %3963 = vmatprep.mubr.f32.mxu0 0.0
      %3964 = vmatmul.mubr.f32.gmra.mxu0 %v3891
      %v3965 = vpop.f32.mrf.mxu0
      %v3966 = vadd.f32 0.0, %v3965
      %v3967 = vpop.f32.mrf.mxu0
      %v3968 = vadd.f32 0.0, %v3967
      %3969 = vdwg.mxu0
      %v3970 = vmul.f32 %v3966, %v2399
      %v3971 = vmul.f32 %v3968, %v2399
      %v3972 = vadd.f32 %v3970, %v2387
      %v3973 = vadd.f32 %v3971, %v2387
      %v3974 = vand.u32 2147483647, %v3972
      %vm3975 = vcmp.le.f32.partialorder %v3974, 0.7853982
      %vm3976 = vcmp.lt.s32.totalorder %v3972, 0
      %v3977 = vand.u32 %v3972, 2139095040
      %v3978 = vshrl.u32 %v3977, 23
      %v3979 = vsub.s32 %v3978, 127
      %v3980 = vand.u32 2147483647, %v3972
      %v3981 = vand.u32 %v3980, 8388607
      %v3982 = vor.u32 %v3981, 8388608
      %v3983 = vsub.s32 0, %v3982
      %v3984 = vadd.s32 %v3979, 1
      %vm3985 = vcmp.gt.s32.totalorder %v3984, 0
      %v3986 = vsel %vm3985, %v3984, 0
      %v3987 = vshrl.u32 %v3986, 5
      %v3988 = vand.u32 %v3986, 31
      %v3989 = vsub.s32 32, %v3988
      %v3990 = vshrl.u32 683565275, %v3989
      %v3991 = vshll.u32 683565275, %v3988
      %v3992 = vshrl.u32 2475754826, %v3989
      %v3993 = vor.u32 %v3991, %v3992
      %v3994 = vshll.u32 2475754826, %v3988
      %v3995 = vshrl.u32 2131351028, %v3989
      %v3996 = vor.u32 %v3994, %v3995
      %v3997 = vshll.u32 2131351028, %v3988
      %v3998 = vshrl.u32 2102212464, %v3989
      %v3999 = vor.u32 %v3997, %v3998
      %v4000 = vshll.u32 2102212464, %v3988
      %v4001 = vshrl.u32 920167782, %v3989
      %v4002 = vor.u32 %v4000, %v4001
      %v4003 = vshll.u32 920167782, %v3988
      %v4004 = vshrl.u32 1326507024, %v3989
      %v4005 = vor.u32 %v4003, %v4004
      %vm4006 = vcmp.lt.s32.totalorder %v3987, 1
      %vm4007 = vcmp.lt.s32.totalorder %v3987, 2
      %vm4008 = vcmp.lt.s32.totalorder %v3987, 3
      %vm4009 = vcmp.lt.s32.totalorder %v3987, 4
      %v4010 = vsel %vm4006, %v3990, %v3993
      %v4011 = vsel %vm4009, %v3999, 2102212464
      %v4012 = vsel %vm4008, %v3996, %v4011
      %v4013 = vsel %vm4007, %v4010, %v4012
      %v4014 = vsel %vm4006, %v3993, %v3996
      %v4015 = vsel %vm4009, %v4002, 920167782
      %v4016 = vsel %vm4008, %v3999, %v4015
      %v4017 = vsel %vm4007, %v4014, %v4016
      %v4018 = vsel %vm4006, %v3996, %v3999
      %v4019 = vsel %vm4009, %v4005, 1326507024
      %v4020 = vsel %vm4008, %v4002, %v4019
      %v4021 = vsel %vm4007, %v4018, %v4020
      %v4022 = vshll.u32 %v3982, 8
      %v4023 = vmul.u32.u64.compose %v4022, %v4021
      %v4024 = vextract.low.u32 %v4023
      %v4025 = vextract.high.u32 %v4023
      %v4026 = vmul.u32.u64.compose %v4022, %v4017
      %v4027 = vextract.low.u32 %v4026
      %v4028 = vextract.high.u32 %v4026
      %v4029 = vmul.u32 %v4022, %v4013
      %v4030 = vadd.s32 %v4025, %v4027
      %vm4031 = vc.u32 %v4025, %v4027
      %v4032 = vadd.s32 %v4028, 1
      %v4033 = vsel %vm4031, %v4032, %v4028
      %v4034 = vadd.s32 %v4029, %v4033
      %v4035 = vadd.s32 %v4034, 536870912
      %v4036 = vshrl.u32 %v4035, 30
      %v4037 = vshll.u32 %v4036, 30
      %v4038 = vsub.s32 %v4034, %v4037
      %vm4039 = vcmp.lt.s32.totalorder %v4038, 0
      %v4040 = vsub.s32 0, %v4038
      %v4041 = vsel %vm4039, %v4040, %v4038
      %v4042 = vclz %v4041
      %v4043 = vsub.s32 %v4042, 2
      %vm4044 = vcmp.gt.s32.totalorder 0, %v4043
      %v4045 = vsel %vm4044, 0, %v4043
      %v4046 = vsub.s32 32, %v4045
      %v4047 = vshll.u32 %v4038, %v4045
      %v4048 = vshrl.u32 %v4030, %v4046
      %v4049 = vor.u32 %v4047, %v4048
      %v4050 = vsub.s32 4294967266, %v4045
      %v4051 = vadd.s32 %v4050, 127
      %v4052 = vshll.u32 %v4051, 23
      %v4053 = vor.u32 4788187, %v4052
      %v4054 = vand.u32 2147483647, %v4053
      %v4056 = vcvt.s32.f32 %v4049
      %v4057 = vmul.f32 %v4056, %v4054
      %v4058 = vxor.u32 %v4057, 2147483648
      %v4059 = vsel %vm3976, %v4058, %v4057
      %v4060 = vsub.s32 4, %v4036
      %v4061 = vsel %vm3976, %v4060, %v4036
      %v4062 = vsel %vm3975, %v3972, %v4059
      %v4063 = vsel %vm3975, 0, %v4061
      %v4064 = vcosq.f32.pop %v4062
      %v4065 = vsinq.f32.pop %v4062
      %vm4066 = vweird.f32 %v3972
      %v4067 = vand.u32 %v4063, 3
      %vm4068 = vcmp.lt.s32.totalorder %v4067, 2
      %vm4069 = vcmp.eq.s32.totalorder %v4067, 0
      %v4070 = vxor.u32 %v4065, 2147483648
      %v4071 = vsel %vm4069, %v4064, %v4070
      %vm4072 = vcmp.eq.s32.totalorder %v4067, 2
      %v4073 = vxor.u32 %v4064, 2147483648
      %v4074 = vsel %vm4072, %v4073, %v4065
      %v4075 = vsel %vm4068, %v4071, %v4074
      %v4076 = vsel %vm4066, nan, %v4075
      %v4077 = vand.u32 2147483647, %v3973
      %vm4078 = vcmp.le.f32.partialorder %v4077, 0.7853982
      %vm4079 = vcmp.lt.s32.totalorder %v3973, 0
      %v4080 = vand.u32 %v3973, 2139095040
      %v4081 = vshrl.u32 %v4080, 23
      %v4082 = vsub.s32 %v4081, 127
      %v4083 = vand.u32 2147483647, %v3973
      %v4084 = vand.u32 %v4083, 8388607
      %v4085 = vor.u32 %v4084, 8388608
      %v4086 = vsub.s32 0, %v4085
      %v4087 = vadd.s32 %v4082, 1
      %vm4088 = vcmp.gt.s32.totalorder %v4087, 0
      %v4089 = vsel %vm4088, %v4087, 0
      %v4090 = vshrl.u32 %v4089, 5
      %v4091 = vand.u32 %v4089, 31
      %v4092 = vsub.s32 32, %v4091
      %v4093 = vshrl.u32 683565275, %v4092
      %v4094 = vshll.u32 683565275, %v4091
      %v4095 = vshrl.u32 2475754826, %v4092
      %v4096 = vor.u32 %v4094, %v4095
      %v4097 = vshll.u32 2475754826, %v4091
      %v4098 = vshrl.u32 2131351028, %v4092
      %v4099 = vor.u32 %v4097, %v4098
      %v4100 = vshll.u32 2131351028, %v4091
      %v4101 = vshrl.u32 2102212464, %v4092
      %v4102 = vor.u32 %v4100, %v4101
      %v4103 = vshll.u32 2102212464, %v4091
      %v4104 = vshrl.u32 920167782, %v4092
      %v4105 = vor.u32 %v4103, %v4104
      %v4106 = vshll.u32 920167782, %v4091
      %v4107 = vshrl.u32 1326507024, %v4092
      %v4108 = vor.u32 %v4106, %v4107
      %vm4109 = vcmp.lt.s32.totalorder %v4090, 1
      %vm4110 = vcmp.lt.s32.totalorder %v4090, 2
      %vm4111 = vcmp.lt.s32.totalorder %v4090, 3
      %vm4112 = vcmp.lt.s32.totalorder %v4090, 4
      %v4113 = vsel %vm4109, %v4093, %v4096
      %v4114 = vsel %vm4112, %v4102, 2102212464
      %v4115 = vsel %vm4111, %v4099, %v4114
      %v4116 = vsel %vm4110, %v4113, %v4115
      %v4117 = vsel %vm4109, %v4096, %v4099
      %v4118 = vsel %vm4112, %v4105, 920167782
      %v4119 = vsel %vm4111, %v4102, %v4118
      %v4120 = vsel %vm4110, %v4117, %v4119
      %v4121 = vsel %vm4109, %v4099, %v4102
      %v4122 = vsel %vm4112, %v4108, 1326507024
      %v4123 = vsel %vm4111, %v4105, %v4122
      %v4124 = vsel %vm4110, %v4121, %v4123
      %v4125 = vshll.u32 %v4085, 8
      %v4126 = vmul.u32.u64.compose %v4125, %v4124
      %v4127 = vextract.low.u32 %v4126
      %v4128 = vextract.high.u32 %v4126
      %v4129 = vmul.u32.u64.compose %v4125, %v4120
      %v4130 = vextract.low.u32 %v4129
      %v4131 = vextract.high.u32 %v4129
      %v4132 = vmul.u32 %v4125, %v4116
      %v4133 = vadd.s32 %v4128, %v4130
      %vm4134 = vc.u32 %v4128, %v4130
      %v4135 = vadd.s32 %v4131, 1
      %v4136 = vsel %vm4134, %v4135, %v4131
      %v4137 = vadd.s32 %v4132, %v4136
      %v4138 = vadd.s32 %v4137, 536870912
      %v4139 = vshrl.u32 %v4138, 30
      %v4140 = vshll.u32 %v4139, 30
      %v4141 = vsub.s32 %v4137, %v4140
      %vm4142 = vcmp.lt.s32.totalorder %v4141, 0
      %v4143 = vsub.s32 0, %v4141
      %v4144 = vsel %vm4142, %v4143, %v4141
      %v4145 = vclz %v4144
      %v4146 = vsub.s32 %v4145, 2
      %vm4147 = vcmp.gt.s32.totalorder 0, %v4146
      %v4148 = vsel %vm4147, 0, %v4146
      %v4149 = vsub.s32 32, %v4148
      %v4150 = vshll.u32 %v4141, %v4148
      %v4151 = vshrl.u32 %v4133, %v4149
      %v4152 = vor.u32 %v4150, %v4151
      %v4153 = vsub.s32 4294967266, %v4148
      %v4154 = vadd.s32 %v4153, 127
      %v4155 = vshll.u32 %v4154, 23
      %v4156 = vor.u32 4788187, %v4155
      %v4157 = vand.u32 2147483647, %v4156
      %v4159 = vcvt.s32.f32 %v4152
      %v4160 = vmul.f32 %v4159, %v4157
      %v4161 = vxor.u32 %v4160, 2147483648
      %v4162 = vsel %vm4079, %v4161, %v4160
      %v4163 = vsub.s32 4, %v4139
      %v4164 = vsel %vm4079, %v4163, %v4139
      %v4165 = vsel %vm4078, %v3973, %v4162
      %v4166 = vsel %vm4078, 0, %v4164
      %v4167 = vcosq.f32.pop %v4165
      %v4168 = vsinq.f32.pop %v4165
      %vm4169 = vweird.f32 %v3973
      %v4170 = vand.u32 %v4166, 3
      %vm4171 = vcmp.lt.s32.totalorder %v4170, 2
      %vm4172 = vcmp.eq.s32.totalorder %v4170, 0
      %v4173 = vxor.u32 %v4168, 2147483648
      %v4174 = vsel %vm4172, %v4167, %v4173
      %vm4175 = vcmp.eq.s32.totalorder %v4170, 2
      %v4176 = vxor.u32 %v4167, 2147483648
      %v4177 = vsel %vm4175, %v4176, %v4168
      %v4178 = vsel %vm4171, %v4174, %v4177
      %v4179 = vsel %vm4169, nan, %v4178
      %v4180 = vmul.f32 %v2337, %v4076
      %v4181 = vmul.f32 %v2338, %v4179
      %4182 = vst [vmem:[%s684] sm:$0xff] %v4180
      %4183 = vst [vmem:[%s684 + $0x8] sm:$0xff] %v4181
      %v4184 = vand.u32 2147483647, %v3972
      %vm4185 = vcmp.le.f32.partialorder %v4184, 0.7853982
      %vm4186 = vcmp.lt.s32.totalorder %v3972, 0
      %v4187 = vand.u32 %v3972, 2139095040
      %v4188 = vshrl.u32 %v4187, 23
      %v4189 = vsub.s32 %v4188, 127
      %v4190 = vand.u32 2147483647, %v3972
      %v4191 = vand.u32 %v4190, 8388607
      %v4192 = vor.u32 %v4191, 8388608
      %v4193 = vsub.s32 0, %v4192
      %v4194 = vadd.s32 %v4189, 1
      %vm4195 = vcmp.gt.s32.totalorder %v4194, 0
      %v4196 = vsel %vm4195, %v4194, 0
      %v4197 = vshrl.u32 %v4196, 5
      %v4198 = vand.u32 %v4196, 31
      %v4199 = vsub.s32 32, %v4198
      %v4200 = vshrl.u32 683565275, %v4199
      %v4201 = vshll.u32 683565275, %v4198
      %v4202 = vshrl.u32 2475754826, %v4199
      %v4203 = vor.u32 %v4201, %v4202
      %v4204 = vshll.u32 2475754826, %v4198
      %v4205 = vshrl.u32 2131351028, %v4199
      %v4206 = vor.u32 %v4204, %v4205
      %v4207 = vshll.u32 2131351028, %v4198
      %v4208 = vshrl.u32 2102212464, %v4199
      %v4209 = vor.u32 %v4207, %v4208
      %v4210 = vshll.u32 2102212464, %v4198
      %v4211 = vshrl.u32 920167782, %v4199
      %v4212 = vor.u32 %v4210, %v4211
      %v4213 = vshll.u32 920167782, %v4198
      %v4214 = vshrl.u32 1326507024, %v4199
      %v4215 = vor.u32 %v4213, %v4214
      %vm4216 = vcmp.lt.s32.totalorder %v4197, 1
      %vm4217 = vcmp.lt.s32.totalorder %v4197, 2
      %vm4218 = vcmp.lt.s32.totalorder %v4197, 3
      %vm4219 = vcmp.lt.s32.totalorder %v4197, 4
      %v4220 = vsel %vm4216, %v4200, %v4203
      %v4221 = vsel %vm4219, %v4209, 2102212464
      %v4222 = vsel %vm4218, %v4206, %v4221
      %v4223 = vsel %vm4217, %v4220, %v4222
      %v4224 = vsel %vm4216, %v4203, %v4206
      %v4225 = vsel %vm4219, %v4212, 920167782
      %v4226 = vsel %vm4218, %v4209, %v4225
      %v4227 = vsel %vm4217, %v4224, %v4226
      %v4228 = vsel %vm4216, %v4206, %v4209
      %v4229 = vsel %vm4219, %v4215, 1326507024
      %v4230 = vsel %vm4218, %v4212, %v4229
      %v4231 = vsel %vm4217, %v4228, %v4230
      %v4232 = vshll.u32 %v4192, 8
      %v4233 = vmul.u32.u64.compose %v4232, %v4231
      %v4234 = vextract.low.u32 %v4233
      %v4235 = vextract.high.u32 %v4233
      %v4236 = vmul.u32.u64.compose %v4232, %v4227
      %v4237 = vextract.low.u32 %v4236
      %v4238 = vextract.high.u32 %v4236
      %v4239 = vmul.u32 %v4232, %v4223
      %v4240 = vadd.s32 %v4235, %v4237
      %vm4241 = vc.u32 %v4235, %v4237
      %v4242 = vadd.s32 %v4238, 1
      %v4243 = vsel %vm4241, %v4242, %v4238
      %v4244 = vadd.s32 %v4239, %v4243
      %v4245 = vadd.s32 %v4244, 536870912
      %v4246 = vshrl.u32 %v4245, 30
      %v4247 = vshll.u32 %v4246, 30
      %v4248 = vsub.s32 %v4244, %v4247
      %vm4249 = vcmp.lt.s32.totalorder %v4248, 0
      %v4250 = vsub.s32 0, %v4248
      %v4251 = vsel %vm4249, %v4250, %v4248
      %v4252 = vclz %v4251
      %v4253 = vsub.s32 %v4252, 2
      %vm4254 = vcmp.gt.s32.totalorder 0, %v4253
      %v4255 = vsel %vm4254, 0, %v4253
      %v4256 = vsub.s32 32, %v4255
      %v4257 = vshll.u32 %v4248, %v4255
      %v4258 = vshrl.u32 %v4240, %v4256
      %v4259 = vor.u32 %v4257, %v4258
      %v4260 = vsub.s32 4294967266, %v4255
      %v4261 = vadd.s32 %v4260, 127
      %v4262 = vshll.u32 %v4261, 23
      %v4263 = vor.u32 4788187, %v4262
      %v4264 = vand.u32 2147483647, %v4263
      %v4266 = vcvt.s32.f32 %v4259
      %v4267 = vmul.f32 %v4266, %v4264
      %v4268 = vxor.u32 %v4267, 2147483648
      %v4269 = vsel %vm4186, %v4268, %v4267
      %v4270 = vsub.s32 4, %v4246
      %v4271 = vsel %vm4186, %v4270, %v4246
      %v4272 = vsel %vm4185, %v3972, %v4269
      %v4273 = vsel %vm4185, 0, %v4271
      %v4274 = vcosq.f32.pop %v4272
      %v4275 = vsinq.f32.pop %v4272
      %vm4276 = vweird.f32 %v3972
      %v4277 = vadd.s32 %v4273, 3
      %v4278 = vand.u32 %v4277, 3
      %vm4279 = vcmp.lt.s32.totalorder %v4278, 2
      %vm4280 = vcmp.eq.s32.totalorder %v4278, 0
      %v4281 = vxor.u32 %v4275, 2147483648
      %v4282 = vsel %vm4280, %v4274, %v4281
      %vm4283 = vcmp.eq.s32.totalorder %v4278, 2
      %v4284 = vxor.u32 %v4274, 2147483648
      %v4285 = vsel %vm4283, %v4284, %v4275
      %v4286 = vsel %vm4279, %v4282, %v4285
      %v4287 = vsel %vm4276, nan, %v4286
      %v4288 = vand.u32 2147483647, %v3973
      %vm4289 = vcmp.le.f32.partialorder %v4288, 0.7853982
      %vm4290 = vcmp.lt.s32.totalorder %v3973, 0
      %v4291 = vand.u32 %v3973, 2139095040
      %v4292 = vshrl.u32 %v4291, 23
      %v4293 = vsub.s32 %v4292, 127
      %v4294 = vand.u32 2147483647, %v3973
      %v4295 = vand.u32 %v4294, 8388607
      %v4296 = vor.u32 %v4295, 8388608
      %v4297 = vsub.s32 0, %v4296
      %v4298 = vadd.s32 %v4293, 1
      %vm4299 = vcmp.gt.s32.totalorder %v4298, 0
      %v4300 = vsel %vm4299, %v4298, 0
      %v4301 = vshrl.u32 %v4300, 5
      %v4302 = vand.u32 %v4300, 31
      %v4303 = vsub.s32 32, %v4302
      %v4304 = vshrl.u32 683565275, %v4303
      %v4305 = vshll.u32 683565275, %v4302
      %v4306 = vshrl.u32 2475754826, %v4303
      %v4307 = vor.u32 %v4305, %v4306
      %v4308 = vshll.u32 2475754826, %v4302
      %v4309 = vshrl.u32 2131351028, %v4303
      %v4310 = vor.u32 %v4308, %v4309
      %v4311 = vshll.u32 2131351028, %v4302
      %v4312 = vshrl.u32 2102212464, %v4303
      %v4313 = vor.u32 %v4311, %v4312
      %v4314 = vshll.u32 2102212464, %v4302
      %v4315 = vshrl.u32 920167782, %v4303
      %v4316 = vor.u32 %v4314, %v4315
      %v4317 = vshll.u32 920167782, %v4302
      %v4318 = vshrl.u32 1326507024, %v4303
      %v4319 = vor.u32 %v4317, %v4318
      %vm4320 = vcmp.lt.s32.totalorder %v4301, 1
      %vm4321 = vcmp.lt.s32.totalorder %v4301, 2
      %vm4322 = vcmp.lt.s32.totalorder %v4301, 3
      %vm4323 = vcmp.lt.s32.totalorder %v4301, 4
      %v4324 = vsel %vm4320, %v4304, %v4307
      %v4325 = vsel %vm4323, %v4313, 2102212464
      %v4326 = vsel %vm4322, %v4310, %v4325
      %v4327 = vsel %vm4321, %v4324, %v4326
      %v4328 = vsel %vm4320, %v4307, %v4310
      %v4329 = vsel %vm4323, %v4316, 920167782
      %v4330 = vsel %vm4322, %v4313, %v4329
      %v4331 = vsel %vm4321, %v4328, %v4330
      %v4332 = vsel %vm4320, %v4310, %v4313
      %v4333 = vsel %vm4323, %v4319, 1326507024
      %v4334 = vsel %vm4322, %v4316, %v4333
      %v4335 = vsel %vm4321, %v4332, %v4334
      %v4336 = vshll.u32 %v4296, 8
      %v4337 = vmul.u32.u64.compose %v4336, %v4335
      %v4338 = vextract.low.u32 %v4337
      %v4339 = vextract.high.u32 %v4337
      %v4340 = vmul.u32.u64.compose %v4336, %v4331
      %v4341 = vextract.low.u32 %v4340
      %v4342 = vextract.high.u32 %v4340
      %v4343 = vmul.u32 %v4336, %v4327
      %v4344 = vadd.s32 %v4339, %v4341
      %vm4345 = vc.u32 %v4339, %v4341
      %v4346 = vadd.s32 %v4342, 1
      %v4347 = vsel %vm4345, %v4346, %v4342
      %v4348 = vadd.s32 %v4343, %v4347
      %v4349 = vadd.s32 %v4348, 536870912
      %v4350 = vshrl.u32 %v4349, 30
      %v4351 = vshll.u32 %v4350, 30
      %v4352 = vsub.s32 %v4348, %v4351
      %vm4353 = vcmp.lt.s32.totalorder %v4352, 0
      %v4354 = vsub.s32 0, %v4352
      %v4355 = vsel %vm4353, %v4354, %v4352
      %v4356 = vclz %v4355
      %v4357 = vsub.s32 %v4356, 2
      %vm4358 = vcmp.gt.s32.totalorder 0, %v4357
      %v4359 = vsel %vm4358, 0, %v4357
      %v4360 = vsub.s32 32, %v4359
      %v4361 = vshll.u32 %v4352, %v4359
      %v4362 = vshrl.u32 %v4344, %v4360
      %v4363 = vor.u32 %v4361, %v4362
      %v4364 = vsub.s32 4294967266, %v4359
      %v4365 = vadd.s32 %v4364, 127
      %v4366 = vshll.u32 %v4365, 23
      %v4367 = vor.u32 4788187, %v4366
      %v4368 = vand.u32 2147483647, %v4367
      %v4370 = vcvt.s32.f32 %v4363
      %v4371 = vmul.f32 %v4370, %v4368
      %v4372 = vxor.u32 %v4371, 2147483648
      %v4373 = vsel %vm4290, %v4372, %v4371
      %v4374 = vsub.s32 4, %v4350
      %v4375 = vsel %vm4290, %v4374, %v4350
      %v4376 = vsel %vm4289, %v3973, %v4373
      %v4377 = vsel %vm4289, 0, %v4375
      %v4378 = vcosq.f32.pop %v4376
      %v4379 = vsinq.f32.pop %v4376
      %vm4380 = vweird.f32 %v3973
      %v4381 = vadd.s32 %v4377, 3
      %v4382 = vand.u32 %v4381, 3
      %vm4383 = vcmp.lt.s32.totalorder %v4382, 2
      %vm4384 = vcmp.eq.s32.totalorder %v4382, 0
      %v4385 = vxor.u32 %v4379, 2147483648
      %v4386 = vsel %vm4384, %v4378, %v4385
      %vm4387 = vcmp.eq.s32.totalorder %v4382, 2
      %v4388 = vxor.u32 %v4378, 2147483648
      %v4389 = vsel %vm4387, %v4388, %v4379
      %v4390 = vsel %vm4383, %v4386, %v4389
      %v4391 = vsel %vm4380, nan, %v4390
      %v4392 = vmul.f32 %v2337, %v4287
      %v4393 = vmul.f32 %v2338, %v4391
      %4394 = vst [vmem:[%s689] sm:$0xff] %v4392
      %4395 = vst [vmem:[%s689 + $0x8] sm:$0xff] %v4393
      %p4396 = scmp.lt.s32.totalorder %s33, 1
      %s4397 = scalar_select %p4396, %s33, 1
      %s4398 = smul.addr %s4397, 2
      %s4399 = smul.addr %s4398, 8
      %s4400 = scalar_lea.vmem %s20, %s4399
      %p4401 = scmp.lt.s32.totalorder %s33, 1
      %s4402 = scalar_select %p4401, %s33, 1
      %s4403 = smul.addr %s4402, 2
      %s4404 = smul.addr %s4403, 8
      %s4405 = scalar_lea.vmem %s21, %s4404
      // Predicated region
      $region101: #{model_forward.1} parent=99 // pred_check
        %p4406 = pneg %p481
      $region102: #{model_forward.1} parent=99 // pred_check_branch
        %4408 = sbr.rel (%p4406) target = $region104
      $region103: #{model_forward.1} parent=99 // pred_region
        _
      $region104: #{model_forward.1} parent=99 // pred_fallthru
        _
      // Predicated region
      $region105: #{model_forward.1} parent=99 // pred_check
        %p4409 = pneg %p507
      $region106: #{model_forward.1} parent=99 // pred_check_branch
        %4411 = sbr.rel (%p4409) target = $region108
      $region107: #{model_forward.1} parent=99 // pred_region
        _
      $region108: #{model_forward.1} parent=99 // pred_fallthru
        _
    $region100: #{model_forward.1} parent=5 // pred_fallthru
      _
    %p4412 = scmp.le.s32.totalorder 2, %s28
    // Predicated region
    $region109: #{model_forward.1} parent=5 // pred_check
      %p4413 = pneg %p4412
    $region110: #{model_forward.1} parent=5 // pred_check_branch
      %4415 = sbr.rel (%p4413) target = $region112
    $region111: #{model_forward.1} parent=5 // pred_region
      %s4416 = ssub.s32 %s28, 2
      // Predicated region
      $region113: #{model_forward.1} parent=111 // pred_check
        %p4417 = pneg %p487
      $region114: #{model_forward.1} parent=111 // pred_check_branch
        %4419 = sbr.rel (%p4417) target = $region116
      $region115: #{model_forward.1} parent=111 // pred_region
        %p4420 = scmp.lt.s32.totalorder %s34, 1
        %s4421 = scalar_select %p4420, %s34, 1
        %s4422 = smul.addr %s4421, 2
        %s4423 = smul.addr %s4422, 8
        %s4424 = scalar_lea.vmem %s20, %s4423
      $region116: #{model_forward.1} parent=111 // pred_fallthru
        _
      // Predicated region
      $region117: #{model_forward.1} parent=111 // pred_check
        %p4425 = pneg %p513
      $region118: #{model_forward.1} parent=111 // pred_check_branch
        %4427 = sbr.rel (%p4425) target = $region120
      $region119: #{model_forward.1} parent=111 // pred_region
        %p4428 = scmp.lt.s32.totalorder %s34, 1
        %s4429 = scalar_select %p4428, %s34, 1
        %s4430 = smul.addr %s4429, 2
        %s4431 = smul.addr %s4430, 8
        %s4432 = scalar_lea.vmem %s21, %s4431
      $region120: #{model_forward.1} parent=111 // pred_fallthru
        _
    $region112: #{model_forward.1} parent=5 // pred_fallthru
      _
  $region6: #{model_forward.1} parent=0 // loop_footer
    %s32 = sadd.s32 1, %s28
  $region7: #{model_forward.1} parent=0 // loop_footer_branch
    %27 = sbr.rel target = $region3
  $region8: #{model_forward.1} parent=0 // loop_exit
    _

</llo_original>
